<compile_context>
chip_gen: v6e
topology: v6e:2x2x1
jax: 0.10.0
libtpu: 0.0.40
codegen_flags: <defaults>
</compile_context>

<pallas_src>
import math
import jax
import jax.numpy as jnp
from jax import lax
from jax.experimental import pallas as pl
from jax.experimental.pallas import tpu as pltpu

EPS = 1e-12


def _layernorm(y, g, b):
    """LayerNorm over last axis, f32 math."""
    mu = jnp.mean(y, axis=-1, keepdims=True)
    d = y - mu
    var = jnp.mean(d * d, axis=-1, keepdims=True)
    return d * lax.rsqrt(var + EPS) * g + b


# ----------------------------------------------------------------------------
# Kernel 1: embedding add + LayerNorm
# ----------------------------------------------------------------------------

def embed_add_ln(we, extra, gamma, beta):
    M, H = we.shape

    def kernel(we_ref, ex_ref, g_ref, b_ref, o_ref):
        y = we_ref[...] + ex_ref[...]
        o_ref[...] = _layernorm(y, g_ref[...], b_ref[...])

    return pl.pallas_call(
        kernel,
        out_shape=jax.ShapeDtypeStruct((M, H), jnp.float32),
        grid=(1,),
        in_specs=[
            pl.BlockSpec((M, H), lambda i: (0, 0)),
            pl.BlockSpec((M, H), lambda i: (0, 0)),
            pl.BlockSpec((1, H), lambda i: (0, 0)),
            pl.BlockSpec((1, H), lambda i: (0, 0)),
        ],
        out_specs=pl.BlockSpec((M, H), lambda i: (0, 0)),
    )(we, extra, gamma, beta)


# ----------------------------------------------------------------------------
# Kernel 2: one fully fused transformer layer (per-batch grid step)
# ----------------------------------------------------------------------------

def transformer_layer(x, attn_bias, lp, cfg):
    """x: (B, S, H) f32;  attn_bias: (B, 1, S) f32 additive (-1e9 on pad)."""
    B, S, H = x.shape
    nH = cfg["heads"]
    dH = H // nH
    I = cfg["intermediate"]
    scale = 1.0 / math.sqrt(dH)
    bf16 = jnp.bfloat16
    f32 = jnp.float32

    def kernel(x_ref, bias_ref, wqkv_ref, bqkv_ref, wo_ref, bo_ref,
               ln1g_ref, ln1b_ref, wi_ref, bi_ref, wf_ref, bf_ref,
               ln2g_ref, ln2b_ref, o_ref):
        xv = x_ref[...]                                            # (S, H) f32
        # fused QKV projection: (S,H) @ (H,3H), bf16 in / f32 accumulate
        qkv = jnp.dot(xv.astype(bf16), wqkv_ref[...],
                      preferred_element_type=f32) + bqkv_ref[...]  # (S, 3H)
        q = qkv[:, 0:H].astype(bf16)
        k = qkv[:, H:2 * H].astype(bf16)
        v = qkv[:, 2 * H:3 * H].astype(bf16)
        bias = bias_ref[...]                                       # (1, S)

        # multi-head attention; output projection folded into the head loop
        # (attn = sum_h ctx_h @ Wo[h*dH:(h+1)*dH, :]) -> no lane concat needed.
        attn = jnp.zeros((S, H), f32)
        for h in range(nH):
            lo = h * dH
            qh = q[:, lo:lo + dH]
            kh = k[:, lo:lo + dH]
            vh = v[:, lo:lo + dH]
            # scores without materializing kh.T (contract last dims)
            s = lax.dot_general(qh, kh, (((1,), (1,)), ((), ())),
                                preferred_element_type=f32) * scale
            s = s + bias
            s = s - jnp.max(s, axis=-1, keepdims=True)
            p = jnp.exp(s)
            p = p * pl.reciprocal(jnp.sum(p, axis=-1, keepdims=True),
                                  approx=True)
            ctx_h = jnp.dot(p.astype(bf16), vh,
                            preferred_element_type=f32)            # (S, dH)
            attn = attn + jnp.dot(ctx_h.astype(bf16), wo_ref[lo:lo + dH, :],
                                  preferred_element_type=f32)
        attn = attn + bo_ref[...]
        x1 = _layernorm(attn + xv, ln1g_ref[...], ln1b_ref[...])

        # FFN
        hmid = jnp.dot(x1.astype(bf16), wi_ref[...],
                       preferred_element_type=f32) + bi_ref[...]
        # TODO(synk): HF BERT uses exact erf-GELU; tanh approximation used here.
        hmid = jax.nn.gelu(hmid, approximate=True)
        ffn = jnp.dot(hmid.astype(bf16), wf_ref[...],
                      preferred_element_type=f32) + bf_ref[...]
        o_ref[...] = _layernorm(ffn + x1, ln2g_ref[...], ln2b_ref[...])

    def full2d(shape):
        return pl.BlockSpec(shape, lambda b: (0, 0))

    return pl.pallas_call(
        kernel,
        out_shape=jax.ShapeDtypeStruct((B, S, H), jnp.float32),
        grid=(B,),
        in_specs=[
            pl.BlockSpec((None, S, H), lambda b: (b, 0, 0)),   # x[b]
            pl.BlockSpec((None, 1, S), lambda b: (b, 0, 0)),   # bias[b]
            full2d((H, 3 * H)), full2d((1, 3 * H)),            # wqkv, bqkv
            full2d((H, H)), full2d((1, H)),                    # wo, bo
            full2d((1, H)), full2d((1, H)),                    # ln1 g/b
            full2d((H, I)), full2d((1, I)),                    # wi, bi
            full2d((I, H)), full2d((1, H)),                    # wf, bf
            full2d((1, H)), full2d((1, H)),                    # ln2 g/b
        ],
        out_specs=pl.BlockSpec((None, S, H), lambda b: (b, 0, 0)),
        compiler_params=pltpu.CompilerParams(
            dimension_semantics=("parallel",)),
    )(x, attn_bias,
      lp["wqkv"], lp["bqkv"], lp["wo"], lp["bo"], lp["ln1_g"], lp["ln1_b"],
      lp["wi"], lp["bi"], lp["wf"], lp["bf"], lp["ln2_g"], lp["ln2_b"])


# ----------------------------------------------------------------------------
# Kernel 3: fused output heads (slot projection in transposed/sliced layout,
#           pooler tanh, intent head)
# ----------------------------------------------------------------------------

def output_heads(x, p, cfg):
    B, S, H = x.shape
    out_slot, out_int = cfg["out_slot"], cfg["out_int"]
    bf16 = jnp.bfloat16
    f32 = jnp.float32

    def kernel(x_ref, pw_ref, pb_ref, iw_ref, ib_ref, swT_ref, sbT_ref,
               slots_ref, intent_ref):
        for b in range(B):
            xb = x_ref[b].astype(bf16)                         # (S, H)
            # slot head emitted directly as (out_slot, S): Wslot^T @ x^T via
            # a last-dim contraction (no in-kernel transpose).
            sl_t = lax.dot_general(swT_ref[...], xb, (((1,), (1,)), ((), ())),
                                   preferred_element_type=f32) + sbT_ref[...]
            slots_ref[b, :, :] = sl_t[:, 1:S - 1]              # drop [CLS]/[SEP]
            # pooler (tanh on CLS token) + intent head
            cls_b = xb[0:1, :]                                 # (1, H)
            pooled = jnp.tanh(jnp.dot(cls_b, pw_ref[...],
                                      preferred_element_type=f32) + pb_ref[...])
            intent_ref[b:b + 1, :] = jnp.dot(pooled.astype(bf16), iw_ref[...],
                                             preferred_element_type=f32) + ib_ref[...]

    return pl.pallas_call(
        kernel,
        out_shape=(jax.ShapeDtypeStruct((B, out_slot, S - 2), jnp.float32),
                   jax.ShapeDtypeStruct((B, out_int), jnp.float32)),
        grid=(1,),
        in_specs=[
            pl.BlockSpec((B, S, H), lambda i: (0, 0, 0)),
            pl.BlockSpec((H, H), lambda i: (0, 0)),
            pl.BlockSpec((1, H), lambda i: (0, 0)),
            pl.BlockSpec((H, out_int), lambda i: (0, 0)),
            pl.BlockSpec((1, out_int), lambda i: (0, 0)),
            pl.BlockSpec((out_slot, H), lambda i: (0, 0)),
            pl.BlockSpec((out_slot, 1), lambda i: (0, 0)),
        ],
        out_specs=(pl.BlockSpec((B, out_slot, S - 2), lambda i: (0, 0, 0)),
                   pl.BlockSpec((B, out_int), lambda i: (0, 0))),
    )(x, p["pool_w"], p["pool_b"], p["int_w"], p["int_b"],
      p["slot_wT"], p["slot_bT"])


# ----------------------------------------------------------------------------
# Parameter init (deterministic, synthetic "bert-base-uncased" stand-in)
# ----------------------------------------------------------------------------

def init_params(key, cfg):
    H, I = cfg["hidden"], cfg["intermediate"]
    bf16 = jnp.bfloat16
    keys = iter(jax.random.split(key, 64))

    def w(k, fi, fo):
        # MXU weights stored in bf16 (f32 accumulation inside kernels)
        return (jax.random.normal(k, (fi, fo), jnp.float32) * 0.02).astype(bf16)

    p = {
        "word_emb": jax.random.normal(next(keys), (cfg["vocab"], H), jnp.float32) * 0.02,
        "pos_emb": jax.random.normal(next(keys), (cfg["max_pos"], H), jnp.float32) * 0.02,
        "type_emb": jax.random.normal(next(keys), (2, H), jnp.float32) * 0.02,
        "emb_ln_g": jnp.ones((1, H), jnp.float32),
        "emb_ln_b": jnp.zeros((1, H), jnp.float32),
        "layers": [],
    }
    for _ in range(cfg["layers"]):
        p["layers"].append(dict(
            wqkv=w(next(keys), H, 3 * H), bqkv=jnp.zeros((1, 3 * H), jnp.float32),
            wo=w(next(keys), H, H), bo=jnp.zeros((1, H), jnp.float32),
            ln1_g=jnp.ones((1, H), jnp.float32), ln1_b=jnp.zeros((1, H), jnp.float32),
            wi=w(next(keys), H, I), bi=jnp.zeros((1, I), jnp.float32),
            wf=w(next(keys), I, H), bf=jnp.zeros((1, H), jnp.float32),
            ln2_g=jnp.ones((1, H), jnp.float32), ln2_b=jnp.zeros((1, H), jnp.float32),
        ))
    p["pool_w"] = w(next(keys), H, H)
    p["pool_b"] = jnp.zeros((1, H), jnp.float32)
    p["int_w"] = w(next(keys), H, cfg["out_int"])
    p["int_b"] = jnp.zeros((1, cfg["out_int"]), jnp.float32)
    p["slot_wT"] = w(next(keys), cfg["out_slot"], H)        # stored transposed
    p["slot_bT"] = jnp.zeros((cfg["out_slot"], 1), jnp.float32)
    return p


# ----------------------------------------------------------------------------
# BertCstm.forward
# ----------------------------------------------------------------------------

def bert_cstm_forward(params, utterance, utterance_mask, cfg):
    B, S = utterance.shape
    H = cfg["hidden"]

    # --- BERT embeddings: gathers in XLA glue, add + LayerNorm in Pallas ---
    we = params["word_emb"][utterance].reshape(B * S, H)
    pe = params["pos_emb"][jnp.arange(S)]                    # (S, H)
    te = params["type_emb"][0]                               # (H,)
    extra = jnp.broadcast_to(pe + te, (B, S, H)).reshape(B * S, H)
    x = embed_add_ln(we, extra, params["emb_ln_g"], params["emb_ln_b"])
    x = x.reshape(B, S, H)

    # additive attention bias computed once (not per (b, h) inside kernels)
    attn_bias = ((1.0 - utterance_mask.astype(jnp.float32)) * (-1e9)
                 ).reshape(B, 1, S)

    for lp in params["layers"]:
        x = transformer_layer(x, attn_bias, lp, cfg)

    # dropout is None in the default config -> no-op
    # slot_out (+permute +[:, :, 1:-1]) and intent (pooler tanh + linear) fused
    slots, intent = output_heads(x, params, cfg)
    return slots, intent


# ----------------------------------------------------------------------------
# Main
# ----------------------------------------------------------------------------

if __name__ == "__main__":
    cfg = dict(vocab=128, hidden=128, heads=4, layers=2, intermediate=256,
               max_pos=32, out_slot=16, out_int=8)
    B, S = 2, 8

    key = jax.random.PRNGKey(0)
    k_param, k_tok = jax.random.split(key)
    params = init_params(k_param, cfg)

    utterance = jax.random.randint(k_tok, (B, S), 1, cfg["vocab"], dtype=jnp.int32)
    lens = jnp.array([S, S - 2], jnp.int32)
    utterance_mask = (jnp.arange(S)[None, :] < lens[:, None]).astype(jnp.int32)
    utterance = utterance * utterance_mask                    # pad_index = 0

    fwd = jax.jit(lambda u, m: bert_cstm_forward(params, u, m, cfg))
    slots, intent = fwd(utterance, utterance_mask)
    slots = jax.block_until_ready(slots)
    intent = jax.block_until_ready(intent)

    assert slots.shape == (B, cfg["out_slot"], S - 2), slots.shape
    assert intent.shape == (B, cfg["out_int"]), intent.shape
    assert bool(jnp.all(jnp.isfinite(slots))) and bool(jnp.all(jnp.isfinite(intent)))
    print("KERNEL_OK")
</pallas_src>

<mosaic_0001>
module attributes {stable_mosaic.version = 11 : i64} {
  func.func @kernel(%arg0: i32, %arg1: memref<16x128xf32, #tpu.memory_space<vmem>>, %arg2: memref<16x128xf32, #tpu.memory_space<vmem>>, %arg3: memref<1x128xf32, #tpu.memory_space<vmem>>, %arg4: memref<1x128xf32, #tpu.memory_space<vmem>>, %arg5: memref<16x128xf32, #tpu.memory_space<vmem>>) attributes {dimension_semantics = [#tpu.dimension_semantics<arbitrary>], iteration_bounds = array<i64: 1>, scalar_prefetch = 0 : i64, scratch_operands = 0 : i64, tpu.core_type = #tpu.core_type<tc>, window_params = [{pipeline_mode = #tpu.pipeline_mode<synchronous>, transform_indices = @transform_0, window_bounds = array<i64: 16, 128>}, {pipeline_mode = #tpu.pipeline_mode<synchronous>, transform_indices = @transform_1, window_bounds = array<i64: 16, 128>}, {pipeline_mode = #tpu.pipeline_mode<synchronous>, transform_indices = @transform_2, window_bounds = array<i64: 1, 128>}, {pipeline_mode = #tpu.pipeline_mode<synchronous>, transform_indices = @transform_3, window_bounds = array<i64: 1, 128>}, {pipeline_mode = #tpu.pipeline_mode<synchronous>, transform_indices = @transform_4, window_bounds = array<i64: 16, 128>}]} {
    %c0 = arith.constant 0 : index
    %c0_0 = arith.constant 0 : index
    %0 = vector.load %arg1[%c0, %c0_0] : memref<16x128xf32, #tpu.memory_space<vmem>>, vector<16x128xf32>
    %c0_1 = arith.constant 0 : index
    %c0_2 = arith.constant 0 : index
    %1 = vector.load %arg2[%c0_1, %c0_2] : memref<16x128xf32, #tpu.memory_space<vmem>>, vector<16x128xf32>
    %2 = arith.addf %0, %1 : vector<16x128xf32>
    %c0_3 = arith.constant 0 : index
    %c0_4 = arith.constant 0 : index
    %3 = vector.load %arg3[%c0_3, %c0_4] : memref<1x128xf32, #tpu.memory_space<vmem>>, vector<1x128xf32>
    %c0_5 = arith.constant 0 : index
    %c0_6 = arith.constant 0 : index
    %4 = vector.load %arg4[%c0_5, %c0_6] : memref<1x128xf32, #tpu.memory_space<vmem>>, vector<1x128xf32>
    %cst = arith.constant dense<0.000000e+00> : vector<16xf32>
    %5 = vector.multi_reduction <add>, %2, %cst [1] : vector<16x128xf32> to vector<16xf32>
    %6 = vector.shape_cast %5 : vector<16xf32> to vector<16x1xf32>
    %cst_7 = arith.constant 1.280000e+02 : f32
    %7 = vector.broadcast %cst_7 : f32 to vector<16x1xf32>
    %8 = arith.divf %6, %7 : vector<16x1xf32>
    %9 = vector.broadcast %8 : vector<16x1xf32> to vector<16x128xf32>
    %10 = arith.subf %2, %9 : vector<16x128xf32>
    %11 = arith.mulf %10, %10 : vector<16x128xf32>
    %cst_8 = arith.constant dense<0.000000e+00> : vector<16xf32>
    %12 = vector.multi_reduction <add>, %11, %cst_8 [1] : vector<16x128xf32> to vector<16xf32>
    %13 = vector.shape_cast %12 : vector<16xf32> to vector<16x1xf32>
    %cst_9 = arith.constant 1.280000e+02 : f32
    %14 = vector.broadcast %cst_9 : f32 to vector<16x1xf32>
    %15 = arith.divf %13, %14 : vector<16x1xf32>
    %cst_10 = arith.constant 9.99999996E-13 : f32
    %16 = vector.broadcast %cst_10 : f32 to vector<16x1xf32>
    %17 = arith.addf %15, %16 : vector<16x1xf32>
    %18 = math.rsqrt %17 : vector<16x1xf32>
    %19 = vector.broadcast %18 : vector<16x1xf32> to vector<16x128xf32>
    %20 = arith.mulf %10, %19 : vector<16x128xf32>
    %21 = vector.broadcast %3 : vector<1x128xf32> to vector<16x128xf32>
    %22 = arith.mulf %20, %21 : vector<16x128xf32>
    %23 = vector.broadcast %4 : vector<1x128xf32> to vector<16x128xf32>
    %24 = arith.addf %22, %23 : vector<16x128xf32>
    %c0_11 = arith.constant 0 : index
    %c0_12 = arith.constant 0 : index
    %25 = vector.load %arg5[%c0_11, %c0_12] : memref<16x128xf32, #tpu.memory_space<vmem>>, vector<16x128xf32>
    tpu.vector_store %arg5[%c0_11, %c0_12], %24 {strides = array<i32>} : memref<16x128xf32, #tpu.memory_space<vmem>>, vector<16x128xf32>,
    return
  }
  func.func @transform_0(%arg0: i32) -> (i32, i32) {
    %c0_i32 = arith.constant 0 : i32
    %c0_i32_0 = arith.constant 0 : i32
    %c0_i32_1 = arith.constant 0 : i32
    return %c0_i32, %c0_i32_0 : i32, i32
  }
  func.func @transform_1(%arg0: i32) -> (i32, i32) {
    %c0_i32 = arith.constant 0 : i32
    %c0_i32_0 = arith.constant 0 : i32
    %c0_i32_1 = arith.constant 0 : i32
    return %c0_i32, %c0_i32_0 : i32, i32
  }
  func.func @transform_2(%arg0: i32) -> (i32, i32) {
    %c0_i32 = arith.constant 0 : i32
    %c0_i32_0 = arith.constant 0 : i32
    %c0_i32_1 = arith.constant 0 : i32
    return %c0_i32, %c0_i32_0 : i32, i32
  }
  func.func @transform_3(%arg0: i32) -> (i32, i32) {
    %c0_i32 = arith.constant 0 : i32
    %c0_i32_0 = arith.constant 0 : i32
    %c0_i32_1 = arith.constant 0 : i32
    return %c0_i32, %c0_i32_0 : i32, i32
  }
  func.func @transform_4(%arg0: i32) -> (i32, i32) {
    %c0_i32 = arith.constant 0 : i32
    %c0_i32_0 = arith.constant 0 : i32
    %c0_i32_1 = arith.constant 0 : i32
    return %c0_i32, %c0_i32_0 : i32, i32
  }
}

module attributes {stable_mosaic.version = 11 : i64} {
  func.func @kernel(%arg0: i32, %arg1: memref<1x8x128xf32, #tpu.memory_space<vmem>>, %arg2: memref<1x1x8xf32, #tpu.memory_space<vmem>>, %arg3: memref<128x384xbf16, #tpu.memory_space<vmem>>, %arg4: memref<1x384xf32, #tpu.memory_space<vmem>>, %arg5: memref<128x128xbf16, #tpu.memory_space<vmem>>, %arg6: memref<1x128xf32, #tpu.memory_space<vmem>>, %arg7: memref<1x128xf32, #tpu.memory_space<vmem>>, %arg8: memref<1x128xf32, #tpu.memory_space<vmem>>, %arg9: memref<128x256xbf16, #tpu.memory_space<vmem>>, %arg10: memref<1x256xf32, #tpu.memory_space<vmem>>, %arg11: memref<256x128xbf16, #tpu.memory_space<vmem>>, %arg12: memref<1x128xf32, #tpu.memory_space<vmem>>, %arg13: memref<1x128xf32, #tpu.memory_space<vmem>>, %arg14: memref<1x128xf32, #tpu.memory_space<vmem>>, %arg15: memref<1x8x128xf32, #tpu.memory_space<vmem>>) attributes {dimension_semantics = [#tpu.dimension_semantics<parallel>], iteration_bounds = array<i64: 2>, scalar_prefetch = 0 : i64, scratch_operands = 0 : i64, tpu.core_type = #tpu.core_type<tc>, window_params = [{transform_indices = @transform_0, window_bounds = array<i64: 1, 8, 128>}, {transform_indices = @transform_1, window_bounds = array<i64: 1, 1, 8>}, {pipeline_mode = #tpu.pipeline_mode<synchronous>, transform_indices = @transform_2, window_bounds = array<i64: 128, 384>}, {pipeline_mode = #tpu.pipeline_mode<synchronous>, transform_indices = @transform_3, window_bounds = array<i64: 1, 384>}, {pipeline_mode = #tpu.pipeline_mode<synchronous>, transform_indices = @transform_4, window_bounds = array<i64: 128, 128>}, {pipeline_mode = #tpu.pipeline_mode<synchronous>, transform_indices = @transform_5, window_bounds = array<i64: 1, 128>}, {pipeline_mode = #tpu.pipeline_mode<synchronous>, transform_indices = @transform_6, window_bounds = array<i64: 1, 128>}, {pipeline_mode = #tpu.pipeline_mode<synchronous>, transform_indices = @transform_7, window_bounds = array<i64: 1, 128>}, {pipeline_mode = #tpu.pipeline_mode<synchronous>, transform_indices = @transform_8, window_bounds = array<i64: 128, 256>}, {pipeline_mode = #tpu.pipeline_mode<synchronous>, transform_indices = @transform_9, window_bounds = array<i64: 1, 256>}, {pipeline_mode = #tpu.pipeline_mode<synchronous>, transform_indices = @transform_10, window_bounds = array<i64: 256, 128>}, {pipeline_mode = #tpu.pipeline_mode<synchronous>, transform_indices = @transform_11, window_bounds = array<i64: 1, 128>}, {pipeline_mode = #tpu.pipeline_mode<synchronous>, transform_indices = @transform_12, window_bounds = array<i64: 1, 128>}, {pipeline_mode = #tpu.pipeline_mode<synchronous>, transform_indices = @transform_13, window_bounds = array<i64: 1, 128>}, {transform_indices = @transform_14, window_bounds = array<i64: 1, 8, 128>}]} {
    %c0 = arith.constant 0 : index
    %c0_0 = arith.constant 0 : index
    %c0_1 = arith.constant 0 : index
    %0 = vector.load %arg1[%c0, %c0_0, %c0_1] : memref<1x8x128xf32, #tpu.memory_space<vmem>>, vector<1x8x128xf32>
    %1 = vector.shape_cast %0 : vector<1x8x128xf32> to vector<8x128xf32>
    %2 = arith.truncf %1 : vector<8x128xf32> to vector<8x128xbf16>
    %c0_2 = arith.constant 0 : index
    %c0_3 = arith.constant 0 : index
    %3 = vector.load %arg3[%c0_2, %c0_3] : memref<128x384xbf16, #tpu.memory_space<vmem>>, vector<128x384xbf16>
    %cst = arith.constant dense<0.000000e+00> : vector<8x384xf32>
    %4 = tpu.matmul %2, %3, %cst {dimension_numbers = #tpu.dot_dimension_numbers<[1], [0], [0], [1], [0, 0, 1, 1], [], []>} : vector<8x128xbf16>, vector<128x384xbf16>, vector<8x384xf32> -> vector<8x384xf32>
    %c0_4 = arith.constant 0 : index
    %c0_5 = arith.constant 0 : index
    %5 = vector.load %arg4[%c0_4, %c0_5] : memref<1x384xf32, #tpu.memory_space<vmem>>, vector<1x384xf32>
    %6 = vector.broadcast %5 : vector<1x384xf32> to vector<8x384xf32>
    %7 = arith.addf %4, %6 : vector<8x384xf32>
    %8 = vector.extract_strided_slice %7 {offsets = [0, 0], sizes = [8, 128], strides = [1, 1]} : vector<8x384xf32> to vector<8x128xf32>
    %9 = arith.truncf %8 : vector<8x128xf32> to vector<8x128xbf16>
    %10 = vector.extract_strided_slice %7 {offsets = [0, 128], sizes = [8, 128], strides = [1, 1]} : vector<8x384xf32> to vector<8x128xf32>
    %11 = arith.truncf %10 : vector<8x128xf32> to vector<8x128xbf16>
    %12 = vector.extract_strided_slice %7 {offsets = [0, 256], sizes = [8, 128], strides = [1, 1]} : vector<8x384xf32> to vector<8x128xf32>
    %13 = arith.truncf %12 : vector<8x128xf32> to vector<8x128xbf16>
    %c0_6 = arith.constant 0 : index
    %c0_7 = arith.constant 0 : index
    %c0_8 = arith.constant 0 : index
    %14 = vector.load %arg2[%c0_6, %c0_7, %c0_8] : memref<1x1x8xf32, #tpu.memory_space<vmem>>, vector<1x1x8xf32>
    %15 = vector.shape_cast %14 : vector<1x1x8xf32> to vector<1x8xf32>
    %cst_9 = arith.constant 0.000000e+00 : f32
    %16 = vector.broadcast %cst_9 : f32 to vector<8x128xf32>
    %17 = vector.extract_strided_slice %9 {offsets = [0, 0], sizes = [8, 32], strides = [1, 1]} : vector<8x128xbf16> to vector<8x32xbf16>
    %18 = vector.extract_strided_slice %11 {offsets = [0, 0], sizes = [8, 32], strides = [1, 1]} : vector<8x128xbf16> to vector<8x32xbf16>
    %19 = vector.extract_strided_slice %13 {offsets = [0, 0], sizes = [8, 32], strides = [1, 1]} : vector<8x128xbf16> to vector<8x32xbf16>
    %cst_10 = arith.constant dense<0.000000e+00> : vector<8x8xf32>
    %20 = tpu.matmul %17, %18, %cst_10 {dimension_numbers = #tpu.dot_dimension_numbers<[1], [1], [0], [0], [0, 0, 1, 0], [], []>} : vector<8x32xbf16>, vector<8x32xbf16>, vector<8x8xf32> -> vector<8x8xf32>
    %cst_11 = arith.constant 0.176776692 : f32
    %21 = vector.broadcast %cst_11 : f32 to vector<8x8xf32>
    %22 = arith.mulf %20, %21 : vector<8x8xf32>
    %23 = vector.broadcast %15 : vector<1x8xf32> to vector<8x8xf32>
    %24 = arith.addf %22, %23 : vector<8x8xf32>
    %cst_12 = arith.constant dense<0xFF800000> : vector<8xf32>
    %25 = vector.multi_reduction <maximumf>, %24, %cst_12 [1] : vector<8x8xf32> to vector<8xf32>
    %26 = vector.shape_cast %25 : vector<8xf32> to vector<8x1xf32>
    %27 = vector.broadcast %26 : vector<8x1xf32> to vector<8x8xf32>
    %28 = arith.subf %24, %27 : vector<8x8xf32>
    %29 = math.exp %28 : vector<8x8xf32>
    %cst_13 = arith.constant dense<0.000000e+00> : vector<8xf32>
    %30 = vector.multi_reduction <add>, %29, %cst_13 [1] : vector<8x8xf32> to vector<8xf32>
    %31 = vector.shape_cast %30 : vector<8xf32> to vector<8x1xf32>
    %32 = tpu.reciprocal %31 {approx = true} : vector<8x1xf32> -> vector<8x1xf32>
    %33 = vector.broadcast %32 : vector<8x1xf32> to vector<8x8xf32>
    %34 = arith.mulf %29, %33 : vector<8x8xf32>
    %35 = arith.truncf %34 : vector<8x8xf32> to vector<8x8xbf16>
    %cst_14 = arith.constant dense<0.000000e+00> : vector<8x32xf32>
    %36 = tpu.matmul %35, %19, %cst_14 {dimension_numbers = #tpu.dot_dimension_numbers<[1], [0], [0], [1], [0, 0, 1, 1], [], []>} : vector<8x8xbf16>, vector<8x32xbf16>, vector<8x32xf32> -> vector<8x32xf32>
    %37 = arith.truncf %36 : vector<8x32xf32> to vector<8x32xbf16>
    %c0_15 = arith.constant 0 : index
    %c0_16 = arith.constant 0 : index
    %38 = vector.load %arg5[%c0_15, %c0_16] : memref<128x128xbf16, #tpu.memory_space<vmem>>, vector<32x128xbf16>
    %cst_17 = arith.constant dense<0.000000e+00> : vector<8x128xf32>
    %39 = tpu.matmul %37, %38, %cst_17 {dimension_numbers = #tpu.dot_dimension_numbers<[1], [0], [0], [1], [0, 0, 1, 1], [], []>} : vector<8x32xbf16>, vector<32x128xbf16>, vector<8x128xf32> -> vector<8x128xf32>
    %40 = arith.addf %16, %39 : vector<8x128xf32>
    %41 = vector.extract_strided_slice %9 {offsets = [0, 32], sizes = [8, 32], strides = [1, 1]} : vector<8x128xbf16> to vector<8x32xbf16>
    %42 = vector.extract_strided_slice %11 {offsets = [0, 32], sizes = [8, 32], strides = [1, 1]} : vector<8x128xbf16> to vector<8x32xbf16>
    %43 = vector.extract_strided_slice %13 {offsets = [0, 32], sizes = [8, 32], strides = [1, 1]} : vector<8x128xbf16> to vector<8x32xbf16>
    %cst_18 = arith.constant dense<0.000000e+00> : vector<8x8xf32>
    %44 = tpu.matmul %41, %42, %cst_18 {dimension_numbers = #tpu.dot_dimension_numbers<[1], [1], [0], [0], [0, 0, 1, 0], [], []>} : vector<8x32xbf16>, vector<8x32xbf16>, vector<8x8xf32> -> vector<8x8xf32>
    %cst_19 = arith.constant 0.176776692 : f32
    %45 = vector.broadcast %cst_19 : f32 to vector<8x8xf32>
    %46 = arith.mulf %44, %45 : vector<8x8xf32>
    %47 = vector.broadcast %15 : vector<1x8xf32> to vector<8x8xf32>
    %48 = arith.addf %46, %47 : vector<8x8xf32>
    %cst_20 = arith.constant dense<0xFF800000> : vector<8xf32>
    %49 = vector.multi_reduction <maximumf>, %48, %cst_20 [1] : vector<8x8xf32> to vector<8xf32>
    %50 = vector.shape_cast %49 : vector<8xf32> to vector<8x1xf32>
    %51 = vector.broadcast %50 : vector<8x1xf32> to vector<8x8xf32>
    %52 = arith.subf %48, %51 : vector<8x8xf32>
    %53 = math.exp %52 : vector<8x8xf32>
    %cst_21 = arith.constant dense<0.000000e+00> : vector<8xf32>
    %54 = vector.multi_reduction <add>, %53, %cst_21 [1] : vector<8x8xf32> to vector<8xf32>
    %55 = vector.shape_cast %54 : vector<8xf32> to vector<8x1xf32>
    %56 = tpu.reciprocal %55 {approx = true} : vector<8x1xf32> -> vector<8x1xf32>
    %57 = vector.broadcast %56 : vector<8x1xf32> to vector<8x8xf32>
    %58 = arith.mulf %53, %57 : vector<8x8xf32>
    %59 = arith.truncf %58 : vector<8x8xf32> to vector<8x8xbf16>
    %cst_22 = arith.constant dense<0.000000e+00> : vector<8x32xf32>
    %60 = tpu.matmul %59, %43, %cst_22 {dimension_numbers = #tpu.dot_dimension_numbers<[1], [0], [0], [1], [0, 0, 1, 1], [], []>} : vector<8x8xbf16>, vector<8x32xbf16>, vector<8x32xf32> -> vector<8x32xf32>
    %61 = arith.truncf %60 : vector<8x32xf32> to vector<8x32xbf16>
    %c32 = arith.constant 32 : index
    %c0_23 = arith.constant 0 : index
    %62 = vector.load %arg5[%c32, %c0_23] : memref<128x128xbf16, #tpu.memory_space<vmem>>, vector<32x128xbf16>
    %cst_24 = arith.constant dense<0.000000e+00> : vector<8x128xf32>
    %63 = tpu.matmul %61, %62, %cst_24 {dimension_numbers = #tpu.dot_dimension_numbers<[1], [0], [0], [1], [0, 0, 1, 1], [], []>} : vector<8x32xbf16>, vector<32x128xbf16>, vector<8x128xf32> -> vector<8x128xf32>
    %64 = arith.addf %40, %63 : vector<8x128xf32>
    %65 = vector.extract_strided_slice %9 {offsets = [0, 64], sizes = [8, 32], strides = [1, 1]} : vector<8x128xbf16> to vector<8x32xbf16>
    %66 = vector.extract_strided_slice %11 {offsets = [0, 64], sizes = [8, 32], strides = [1, 1]} : vector<8x128xbf16> to vector<8x32xbf16>
    %67 = vector.extract_strided_slice %13 {offsets = [0, 64], sizes = [8, 32], strides = [1, 1]} : vector<8x128xbf16> to vector<8x32xbf16>
    %cst_25 = arith.constant dense<0.000000e+00> : vector<8x8xf32>
    %68 = tpu.matmul %65, %66, %cst_25 {dimension_numbers = #tpu.dot_dimension_numbers<[1], [1], [0], [0], [0, 0, 1, 0], [], []>} : vector<8x32xbf16>, vector<8x32xbf16>, vector<8x8xf32> -> vector<8x8xf32>
    %cst_26 = arith.constant 0.176776692 : f32
    %69 = vector.broadcast %cst_26 : f32 to vector<8x8xf32>
    %70 = arith.mulf %68, %69 : vector<8x8xf32>
    %71 = vector.broadcast %15 : vector<1x8xf32> to vector<8x8xf32>
    %72 = arith.addf %70, %71 : vector<8x8xf32>
    %cst_27 = arith.constant dense<0xFF800000> : vector<8xf32>
    %73 = vector.multi_reduction <maximumf>, %72, %cst_27 [1] : vector<8x8xf32> to vector<8xf32>
    %74 = vector.shape_cast %73 : vector<8xf32> to vector<8x1xf32>
    %75 = vector.broadcast %74 : vector<8x1xf32> to vector<8x8xf32>
    %76 = arith.subf %72, %75 : vector<8x8xf32>
    %77 = math.exp %76 : vector<8x8xf32>
    %cst_28 = arith.constant dense<0.000000e+00> : vector<8xf32>
    %78 = vector.multi_reduction <add>, %77, %cst_28 [1] : vector<8x8xf32> to vector<8xf32>
    %79 = vector.shape_cast %78 : vector<8xf32> to vector<8x1xf32>
    %80 = tpu.reciprocal %79 {approx = true} : vector<8x1xf32> -> vector<8x1xf32>
    %81 = vector.broadcast %80 : vector<8x1xf32> to vector<8x8xf32>
    %82 = arith.mulf %77, %81 : vector<8x8xf32>
    %83 = arith.truncf %82 : vector<8x8xf32> to vector<8x8xbf16>
    %cst_29 = arith.constant dense<0.000000e+00> : vector<8x32xf32>
    %84 = tpu.matmul %83, %67, %cst_29 {dimension_numbers = #tpu.dot_dimension_numbers<[1], [0], [0], [1], [0, 0, 1, 1], [], []>} : vector<8x8xbf16>, vector<8x32xbf16>, vector<8x32xf32> -> vector<8x32xf32>
    %85 = arith.truncf %84 : vector<8x32xf32> to vector<8x32xbf16>
    %c64 = arith.constant 64 : index
    %c0_30 = arith.constant 0 : index
    %86 = vector.load %arg5[%c64, %c0_30] : memref<128x128xbf16, #tpu.memory_space<vmem>>, vector<32x128xbf16>
    %cst_31 = arith.constant dense<0.000000e+00> : vector<8x128xf32>
    %87 = tpu.matmul %85, %86, %cst_31 {dimension_numbers = #tpu.dot_dimension_numbers<[1], [0], [0], [1], [0, 0, 1, 1], [], []>} : vector<8x32xbf16>, vector<32x128xbf16>, vector<8x128xf32> -> vector<8x128xf32>
    %88 = arith.addf %64, %87 : vector<8x128xf32>
    %89 = vector.extract_strided_slice %9 {offsets = [0, 96], sizes = [8, 32], strides = [1, 1]} : vector<8x128xbf16> to vector<8x32xbf16>
    %90 = vector.extract_strided_slice %11 {offsets = [0, 96], sizes = [8, 32], strides = [1, 1]} : vector<8x128xbf16> to vector<8x32xbf16>
    %91 = vector.extract_strided_slice %13 {offsets = [0, 96], sizes = [8, 32], strides = [1, 1]} : vector<8x128xbf16> to vector<8x32xbf16>
    %cst_32 = arith.constant dense<0.000000e+00> : vector<8x8xf32>
    %92 = tpu.matmul %89, %90, %cst_32 {dimension_numbers = #tpu.dot_dimension_numbers<[1], [1], [0], [0], [0, 0, 1, 0], [], []>} : vector<8x32xbf16>, vector<8x32xbf16>, vector<8x8xf32> -> vector<8x8xf32>
    %cst_33 = arith.constant 0.176776692 : f32
    %93 = vector.broadcast %cst_33 : f32 to vector<8x8xf32>
    %94 = arith.mulf %92, %93 : vector<8x8xf32>
    %95 = vector.broadcast %15 : vector<1x8xf32> to vector<8x8xf32>
    %96 = arith.addf %94, %95 : vector<8x8xf32>
    %cst_34 = arith.constant dense<0xFF800000> : vector<8xf32>
    %97 = vector.multi_reduction <maximumf>, %96, %cst_34 [1] : vector<8x8xf32> to vector<8xf32>
    %98 = vector.shape_cast %97 : vector<8xf32> to vector<8x1xf32>
    %99 = vector.broadcast %98 : vector<8x1xf32> to vector<8x8xf32>
    %100 = arith.subf %96, %99 : vector<8x8xf32>
    %101 = math.exp %100 : vector<8x8xf32>
    %cst_35 = arith.constant dense<0.000000e+00> : vector<8xf32>
    %102 = vector.multi_reduction <add>, %101, %cst_35 [1] : vector<8x8xf32> to vector<8xf32>
    %103 = vector.shape_cast %102 : vector<8xf32> to vector<8x1xf32>
    %104 = tpu.reciprocal %103 {approx = true} : vector<8x1xf32> -> vector<8x1xf32>
    %105 = vector.broadcast %104 : vector<8x1xf32> to vector<8x8xf32>
    %106 = arith.mulf %101, %105 : vector<8x8xf32>
    %107 = arith.truncf %106 : vector<8x8xf32> to vector<8x8xbf16>
    %cst_36 = arith.constant dense<0.000000e+00> : vector<8x32xf32>
    %108 = tpu.matmul %107, %91, %cst_36 {dimension_numbers = #tpu.dot_dimension_numbers<[1], [0], [0], [1], [0, 0, 1, 1], [], []>} : vector<8x8xbf16>, vector<8x32xbf16>, vector<8x32xf32> -> vector<8x32xf32>
    %109 = arith.truncf %108 : vector<8x32xf32> to vector<8x32xbf16>
    %c96 = arith.constant 96 : index
    %c0_37 = arith.constant 0 : index
    %110 = vector.load %arg5[%c96, %c0_37] : memref<128x128xbf16, #tpu.memory_space<vmem>>, vector<32x128xbf16>
    %cst_38 = arith.constant dense<0.000000e+00> : vector<8x128xf32>
    %111 = tpu.matmul %109, %110, %cst_38 {dimension_numbers = #tpu.dot_dimension_numbers<[1], [0], [0], [1], [0, 0, 1, 1], [], []>} : vector<8x32xbf16>, vector<32x128xbf16>, vector<8x128xf32> -> vector<8x128xf32>
    %112 = arith.addf %88, %111 : vector<8x128xf32>
    %c0_39 = arith.constant 0 : index
    %c0_40 = arith.constant 0 : index
    %113 = vector.load %arg6[%c0_39, %c0_40] : memref<1x128xf32, #tpu.memory_space<vmem>>, vector<1x128xf32>
    %114 = vector.broadcast %113 : vector<1x128xf32> to vector<8x128xf32>
    %115 = arith.addf %112, %114 : vector<8x128xf32>
    %116 = arith.addf %115, %1 : vector<8x128xf32>
    %c0_41 = arith.constant 0 : index
    %c0_42 = arith.constant 0 : index
    %117 = vector.load %arg7[%c0_41, %c0_42] : memref<1x128xf32, #tpu.memory_space<vmem>>, vector<1x128xf32>
    %c0_43 = arith.constant 0 : index
    %c0_44 = arith.constant 0 : index
    %118 = vector.load %arg8[%c0_43, %c0_44] : memref<1x128xf32, #tpu.memory_space<vmem>>, vector<1x128xf32>
    %cst_45 = arith.constant dense<0.000000e+00> : vector<8xf32>
    %119 = vector.multi_reduction <add>, %116, %cst_45 [1] : vector<8x128xf32> to vector<8xf32>
    %120 = vector.shape_cast %119 : vector<8xf32> to vector<8x1xf32>
    %cst_46 = arith.constant 1.280000e+02 : f32
    %121 = vector.broadcast %cst_46 : f32 to vector<8x1xf32>
    %122 = arith.divf %120, %121 : vector<8x1xf32>
    %123 = vector.broadcast %122 : vector<8x1xf32> to vector<8x128xf32>
    %124 = arith.subf %116, %123 : vector<8x128xf32>
    %125 = arith.mulf %124, %124 : vector<8x128xf32>
    %cst_47 = arith.constant dense<0.000000e+00> : vector<8xf32>
    %126 = vector.multi_reduction <add>, %125, %cst_47 [1] : vector<8x128xf32> to vector<8xf32>
    %127 = vector.shape_cast %126 : vector<8xf32> to vector<8x1xf32>
    %cst_48 = arith.constant 1.280000e+02 : f32
    %128 = vector.broadcast %cst_48 : f32 to vector<8x1xf32>
    %129 = arith.divf %127, %128 : vector<8x1xf32>
    %cst_49 = arith.constant 9.99999996E-13 : f32
    %130 = vector.broadcast %cst_49 : f32 to vector<8x1xf32>
    %131 = arith.addf %129, %130 : vector<8x1xf32>
    %132 = math.rsqrt %131 : vector<8x1xf32>
    %133 = vector.broadcast %132 : vector<8x1xf32> to vector<8x128xf32>
    %134 = arith.mulf %124, %133 : vector<8x128xf32>
    %135 = vector.broadcast %117 : vector<1x128xf32> to vector<8x128xf32>
    %136 = arith.mulf %134, %135 : vector<8x128xf32>
    %137 = vector.broadcast %118 : vector<1x128xf32> to vector<8x128xf32>
    %138 = arith.addf %136, %137 : vector<8x128xf32>
    %139 = arith.truncf %138 : vector<8x128xf32> to vector<8x128xbf16>
    %c0_50 = arith.constant 0 : index
    %c0_51 = arith.constant 0 : index
    %140 = vector.load %arg9[%c0_50, %c0_51] : memref<128x256xbf16, #tpu.memory_space<vmem>>, vector<128x256xbf16>
    %cst_52 = arith.constant dense<0.000000e+00> : vector<8x256xf32>
    %141 = tpu.matmul %139, %140, %cst_52 {dimension_numbers = #tpu.dot_dimension_numbers<[1], [0], [0], [1], [0, 0, 1, 1], [], []>} : vector<8x128xbf16>, vector<128x256xbf16>, vector<8x256xf32> -> vector<8x256xf32>
    %c0_53 = arith.constant 0 : index
    %c0_54 = arith.constant 0 : index
    %142 = vector.load %arg10[%c0_53, %c0_54] : memref<1x256xf32, #tpu.memory_space<vmem>>, vector<1x256xf32>
    %143 = vector.broadcast %142 : vector<1x256xf32> to vector<8x256xf32>
    %144 = arith.addf %141, %143 : vector<8x256xf32>
    %145 = arith.mulf %144, %144 : vector<8x256xf32>
    %146 = arith.mulf %144, %145 : vector<8x256xf32>
    %cst_55 = arith.constant 4.471500e-02 : f32
    %147 = vector.broadcast %cst_55 : f32 to vector<8x256xf32>
    %148 = arith.mulf %147, %146 : vector<8x256xf32>
    %149 = arith.addf %144, %148 : vector<8x256xf32>
    %cst_56 = arith.constant 0.797884583 : f32
    %150 = vector.broadcast %cst_56 : f32 to vector<8x256xf32>
    %151 = arith.mulf %150, %149 : vector<8x256xf32>
    %152 = math.tanh %151 : vector<8x256xf32>
    %cst_57 = arith.constant 1.000000e+00 : f32
    %153 = vector.broadcast %cst_57 : f32 to vector<8x256xf32>
    %154 = arith.addf %153, %152 : vector<8x256xf32>
    %cst_58 = arith.constant 5.000000e-01 : f32
    %155 = vector.broadcast %cst_58 : f32 to vector<8x256xf32>
    %156 = arith.mulf %155, %154 : vector<8x256xf32>
    %157 = arith.mulf %144, %156 : vector<8x256xf32>
    %158 = arith.truncf %157 : vector<8x256xf32> to vector<8x256xbf16>
    %c0_59 = arith.constant 0 : index
    %c0_60 = arith.constant 0 : index
    %159 = vector.load %arg11[%c0_59, %c0_60] : memref<256x128xbf16, #tpu.memory_space<vmem>>, vector<256x128xbf16>
    %cst_61 = arith.constant dense<0.000000e+00> : vector<8x128xf32>
    %160 = tpu.matmul %158, %159, %cst_61 {dimension_numbers = #tpu.dot_dimension_numbers<[1], [0], [0], [1], [0, 0, 1, 1], [], []>} : vector<8x256xbf16>, vector<256x128xbf16>, vector<8x128xf32> -> vector<8x128xf32>
    %c0_62 = arith.constant 0 : index
    %c0_63 = arith.constant 0 : index
    %161 = vector.load %arg12[%c0_62, %c0_63] : memref<1x128xf32, #tpu.memory_space<vmem>>, vector<1x128xf32>
    %162 = vector.broadcast %161 : vector<1x128xf32> to vector<8x128xf32>
    %163 = arith.addf %160, %162 : vector<8x128xf32>
    %164 = arith.addf %163, %138 : vector<8x128xf32>
    %c0_64 = arith.constant 0 : index
    %c0_65 = arith.constant 0 : index
    %165 = vector.load %arg13[%c0_64, %c0_65] : memref<1x128xf32, #tpu.memory_space<vmem>>, vector<1x128xf32>
    %c0_66 = arith.constant 0 : index
    %c0_67 = arith.constant 0 : index
    %166 = vector.load %arg14[%c0_66, %c0_67] : memref<1x128xf32, #tpu.memory_space<vmem>>, vector<1x128xf32>
    %cst_68 = arith.constant dense<0.000000e+00> : vector<8xf32>
    %167 = vector.multi_reduction <add>, %164, %cst_68 [1] : vector<8x128xf32> to vector<8xf32>
    %168 = vector.shape_cast %167 : vector<8xf32> to vector<8x1xf32>
    %cst_69 = arith.constant 1.280000e+02 : f32
    %169 = vector.broadcast %cst_69 : f32 to vector<8x1xf32>
    %170 = arith.divf %168, %169 : vector<8x1xf32>
    %171 = vector.broadcast %170 : vector<8x1xf32> to vector<8x128xf32>
    %172 = arith.subf %164, %171 : vector<8x128xf32>
    %173 = arith.mulf %172, %172 : vector<8x128xf32>
    %cst_70 = arith.constant dense<0.000000e+00> : vector<8xf32>
    %174 = vector.multi_reduction <add>, %173, %cst_70 [1] : vector<8x128xf32> to vector<8xf32>
    %175 = vector.shape_cast %174 : vector<8xf32> to vector<8x1xf32>
    %cst_71 = arith.constant 1.280000e+02 : f32
    %176 = vector.broadcast %cst_71 : f32 to vector<8x1xf32>
    %177 = arith.divf %175, %176 : vector<8x1xf32>
    %cst_72 = arith.constant 9.99999996E-13 : f32
    %178 = vector.broadcast %cst_72 : f32 to vector<8x1xf32>
    %179 = arith.addf %177, %178 : vector<8x1xf32>
    %180 = math.rsqrt %179 : vector<8x1xf32>
    %181 = vector.broadcast %180 : vector<8x1xf32> to vector<8x128xf32>
    %182 = arith.mulf %172, %181 : vector<8x128xf32>
    %183 = vector.broadcast %165 : vector<1x128xf32> to vector<8x128xf32>
    %184 = arith.mulf %182, %183 : vector<8x128xf32>
    %185 = vector.broadcast %166 : vector<1x128xf32> to vector<8x128xf32>
    %186 = arith.addf %184, %185 : vector<8x128xf32>
    %c0_73 = arith.constant 0 : index
    %c0_74 = arith.constant 0 : index
    %c0_75 = arith.constant 0 : index
    %187 = vector.load %arg15[%c0_73, %c0_74, %c0_75] : memref<1x8x128xf32, #tpu.memory_space<vmem>>, vector<1x8x128xf32>
    %188 = vector.shape_cast %187 : vector<1x8x128xf32> to vector<8x128xf32>
    %189 = vector.shape_cast %186 : vector<8x128xf32> to vector<1x8x128xf32>
    tpu.vector_store %arg15[%c0_73, %c0_74, %c0_75], %189 {strides = array<i32>} : memref<1x8x128xf32, #tpu.memory_space<vmem>>, vector<1x8x128xf32>,
    return
  }
  func.func @transform_0(%arg0: i32) -> (i32, i32, i32) {
    %c0_i32 = arith.constant 0 : i32
    %c0_i32_0 = arith.constant 0 : i32
    %c0_i32_1 = arith.constant 0 : i32
    return %arg0, %c0_i32, %c0_i32_0 : i32, i32, i32
  }
  func.func @transform_1(%arg0: i32) -> (i32, i32, i32) {
    %c0_i32 = arith.constant 0 : i32
    %c0_i32_0 = arith.constant 0 : i32
    %c0_i32_1 = arith.constant 0 : i32
    return %arg0, %c0_i32, %c0_i32_0 : i32, i32, i32
  }
  func.func @transform_2(%arg0: i32) -> (i32, i32) {
    %c0_i32 = arith.constant 0 : i32
    %c0_i32_0 = arith.constant 0 : i32
    %c0_i32_1 = arith.constant 0 : i32
    return %c0_i32, %c0_i32_0 : i32, i32
  }
  func.func @transform_3(%arg0: i32) -> (i32, i32) {
    %c0_i32 = arith.constant 0 : i32
    %c0_i32_0 = arith.constant 0 : i32
    %c0_i32_1 = arith.constant 0 : i32
    return %c0_i32, %c0_i32_0 : i32, i32
  }
  func.func @transform_4(%arg0: i32) -> (i32, i32) {
    %c0_i32 = arith.constant 0 : i32
    %c0_i32_0 = arith.constant 0 : i32
    %c0_i32_1 = arith.constant 0 : i32
    return %c0_i32, %c0_i32_0 : i32, i32
  }
  func.func @transform_5(%arg0: i32) -> (i32, i32) {
    %c0_i32 = arith.constant 0 : i32
    %c0_i32_0 = arith.constant 0 : i32
    %c0_i32_1 = arith.constant 0 : i32
    return %c0_i32, %c0_i32_0 : i32, i32
  }
  func.func @transform_6(%arg0: i32) -> (i32, i32) {
    %c0_i32 = arith.constant 0 : i32
    %c0_i32_0 = arith.constant 0 : i32
    %c0_i32_1 = arith.constant 0 : i32
    return %c0_i32, %c0_i32_0 : i32, i32
  }
  func.func @transform_7(%arg0: i32) -> (i32, i32) {
    %c0_i32 = arith.constant 0 : i32
    %c0_i32_0 = arith.constant 0 : i32
    %c0_i32_1 = arith.constant 0 : i32
    return %c0_i32, %c0_i32_0 : i32, i32
  }
  func.func @transform_8(%arg0: i32) -> (i32, i32) {
    %c0_i32 = arith.constant 0 : i32
    %c0_i32_0 = arith.constant 0 : i32
    %c0_i32_1 = arith.constant 0 : i32
    return %c0_i32, %c0_i32_0 : i32, i32
  }
  func.func @transform_9(%arg0: i32) -> (i32, i32) {
    %c0_i32 = arith.constant 0 : i32
    %c0_i32_0 = arith.constant 0 : i32
    %c0_i32_1 = arith.constant 0 : i32
    return %c0_i32, %c0_i32_0 : i32, i32
  }
  func.func @transform_10(%arg0: i32) -> (i32, i32) {
    %c0_i32 = arith.constant 0 : i32
    %c0_i32_0 = arith.constant 0 : i32
    %c0_i32_1 = arith.constant 0 : i32
    return %c0_i32, %c0_i32_0 : i32, i32
  }
  func.func @transform_11(%arg0: i32) -> (i32, i32) {
    %c0_i32 = arith.constant 0 : i32
    %c0_i32_0 = arith.constant 0 : i32
    %c0_i32_1 = arith.constant 0 : i32
    return %c0_i32, %c0_i32_0 : i32, i32
  }
  func.func @transform_12(%arg0: i32) -> (i32, i32) {
    %c0_i32 = arith.constant 0 : i32
    %c0_i32_0 = arith.constant 0 : i32
    %c0_i32_1 = arith.constant 0 : i32
    return %c0_i32, %c0_i32_0 : i32, i32
  }
  func.func @transform_13(%arg0: i32) -> (i32, i32) {
    %c0_i32 = arith.constant 0 : i32
    %c0_i32_0 = arith.constant 0 : i32
    %c0_i32_1 = arith.constant 0 : i32
    return %c0_i32, %c0_i32_0 : i32, i32
  }
  func.func @transform_14(%arg0: i32) -> (i32, i32, i32) {
    %c0_i32 = arith.constant 0 : i32
    %c0_i32_0 = arith.constant 0 : i32
    %c0_i32_1 = arith.constant 0 : i32
    return %arg0, %c0_i32, %c0_i32_0 : i32, i32, i32
  }
}

module attributes {stable_mosaic.version = 11 : i64} {
  func.func @kernel(%arg0: i32, %arg1: memref<1x8x128xf32, #tpu.memory_space<vmem>>, %arg2: memref<1x1x8xf32, #tpu.memory_space<vmem>>, %arg3: memref<128x384xbf16, #tpu.memory_space<vmem>>, %arg4: memref<1x384xf32, #tpu.memory_space<vmem>>, %arg5: memref<128x128xbf16, #tpu.memory_space<vmem>>, %arg6: memref<1x128xf32, #tpu.memory_space<vmem>>, %arg7: memref<1x128xf32, #tpu.memory_space<vmem>>, %arg8: memref<1x128xf32, #tpu.memory_space<vmem>>, %arg9: memref<128x256xbf16, #tpu.memory_space<vmem>>, %arg10: memref<1x256xf32, #tpu.memory_space<vmem>>, %arg11: memref<256x128xbf16, #tpu.memory_space<vmem>>, %arg12: memref<1x128xf32, #tpu.memory_space<vmem>>, %arg13: memref<1x128xf32, #tpu.memory_space<vmem>>, %arg14: memref<1x128xf32, #tpu.memory_space<vmem>>, %arg15: memref<1x8x128xf32, #tpu.memory_space<vmem>>) attributes {dimension_semantics = [#tpu.dimension_semantics<parallel>], iteration_bounds = array<i64: 2>, scalar_prefetch = 0 : i64, scratch_operands = 0 : i64, tpu.core_type = #tpu.core_type<tc>, window_params = [{transform_indices = @transform_0, window_bounds = array<i64: 1, 8, 128>}, {transform_indices = @transform_1, window_bounds = array<i64: 1, 1, 8>}, {pipeline_mode = #tpu.pipeline_mode<synchronous>, transform_indices = @transform_2, window_bounds = array<i64: 128, 384>}, {pipeline_mode = #tpu.pipeline_mode<synchronous>, transform_indices = @transform_3, window_bounds = array<i64: 1, 384>}, {pipeline_mode = #tpu.pipeline_mode<synchronous>, transform_indices = @transform_4, window_bounds = array<i64: 128, 128>}, {pipeline_mode = #tpu.pipeline_mode<synchronous>, transform_indices = @transform_5, window_bounds = array<i64: 1, 128>}, {pipeline_mode = #tpu.pipeline_mode<synchronous>, transform_indices = @transform_6, window_bounds = array<i64: 1, 128>}, {pipeline_mode = #tpu.pipeline_mode<synchronous>, transform_indices = @transform_7, window_bounds = array<i64: 1, 128>}, {pipeline_mode = #tpu.pipeline_mode<synchronous>, transform_indices = @transform_8, window_bounds = array<i64: 128, 256>}, {pipeline_mode = #tpu.pipeline_mode<synchronous>, transform_indices = @transform_9, window_bounds = array<i64: 1, 256>}, {pipeline_mode = #tpu.pipeline_mode<synchronous>, transform_indices = @transform_10, window_bounds = array<i64: 256, 128>}, {pipeline_mode = #tpu.pipeline_mode<synchronous>, transform_indices = @transform_11, window_bounds = array<i64: 1, 128>}, {pipeline_mode = #tpu.pipeline_mode<synchronous>, transform_indices = @transform_12, window_bounds = array<i64: 1, 128>}, {pipeline_mode = #tpu.pipeline_mode<synchronous>, transform_indices = @transform_13, window_bounds = array<i64: 1, 128>}, {transform_indices = @transform_14, window_bounds = array<i64: 1, 8, 128>}]} {
    %c0 = arith.constant 0 : index
    %c0_0 = arith.constant 0 : index
    %c0_1 = arith.constant 0 : index
    %0 = vector.load %arg1[%c0, %c0_0, %c0_1] : memref<1x8x128xf32, #tpu.memory_space<vmem>>, vector<1x8x128xf32>
    %1 = vector.shape_cast %0 : vector<1x8x128xf32> to vector<8x128xf32>
    %2 = arith.truncf %1 : vector<8x128xf32> to vector<8x128xbf16>
    %c0_2 = arith.constant 0 : index
    %c0_3 = arith.constant 0 : index
    %3 = vector.load %arg3[%c0_2, %c0_3] : memref<128x384xbf16, #tpu.memory_space<vmem>>, vector<128x384xbf16>
    %cst = arith.constant dense<0.000000e+00> : vector<8x384xf32>
    %4 = tpu.matmul %2, %3, %cst {dimension_numbers = #tpu.dot_dimension_numbers<[1], [0], [0], [1], [0, 0, 1, 1], [], []>} : vector<8x128xbf16>, vector<128x384xbf16>, vector<8x384xf32> -> vector<8x384xf32>
    %c0_4 = arith.constant 0 : index
    %c0_5 = arith.constant 0 : index
    %5 = vector.load %arg4[%c0_4, %c0_5] : memref<1x384xf32, #tpu.memory_space<vmem>>, vector<1x384xf32>
    %6 = vector.broadcast %5 : vector<1x384xf32> to vector<8x384xf32>
    %7 = arith.addf %4, %6 : vector<8x384xf32>
    %8 = vector.extract_strided_slice %7 {offsets = [0, 0], sizes = [8, 128], strides = [1, 1]} : vector<8x384xf32> to vector<8x128xf32>
    %9 = arith.truncf %8 : vector<8x128xf32> to vector<8x128xbf16>
    %10 = vector.extract_strided_slice %7 {offsets = [0, 128], sizes = [8, 128], strides = [1, 1]} : vector<8x384xf32> to vector<8x128xf32>
    %11 = arith.truncf %10 : vector<8x128xf32> to vector<8x128xbf16>
    %12 = vector.extract_strided_slice %7 {offsets = [0, 256], sizes = [8, 128], strides = [1, 1]} : vector<8x384xf32> to vector<8x128xf32>
    %13 = arith.truncf %12 : vector<8x128xf32> to vector<8x128xbf16>
    %c0_6 = arith.constant 0 : index
    %c0_7 = arith.constant 0 : index
    %c0_8 = arith.constant 0 : index
    %14 = vector.load %arg2[%c0_6, %c0_7, %c0_8] : memref<1x1x8xf32, #tpu.memory_space<vmem>>, vector<1x1x8xf32>
    %15 = vector.shape_cast %14 : vector<1x1x8xf32> to vector<1x8xf32>
    %cst_9 = arith.constant 0.000000e+00 : f32
    %16 = vector.broadcast %cst_9 : f32 to vector<8x128xf32>
    %17 = vector.extract_strided_slice %9 {offsets = [0, 0], sizes = [8, 32], strides = [1, 1]} : vector<8x128xbf16> to vector<8x32xbf16>
    %18 = vector.extract_strided_slice %11 {offsets = [0, 0], sizes = [8, 32], strides = [1, 1]} : vector<8x128xbf16> to vector<8x32xbf16>
    %19 = vector.extract_strided_slice %13 {offsets = [0, 0], sizes = [8, 32], strides = [1, 1]} : vector<8x128xbf16> to vector<8x32xbf16>
    %cst_10 = arith.constant dense<0.000000e+00> : vector<8x8xf32>
    %20 = tpu.matmul %17, %18, %cst_10 {dimension_numbers = #tpu.dot_dimension_numbers<[1], [1], [0], [0], [0, 0, 1, 0], [], []>} : vector<8x32xbf16>, vector<8x32xbf16>, vector<8x8xf32> -> vector<8x8xf32>
    %cst_11 = arith.constant 0.176776692 : f32
    %21 = vector.broadcast %cst_11 : f32 to vector<8x8xf32>
    %22 = arith.mulf %20, %21 : vector<8x8xf32>
    %23 = vector.broadcast %15 : vector<1x8xf32> to vector<8x8xf32>
    %24 = arith.addf %22, %23 : vector<8x8xf32>
    %cst_12 = arith.constant dense<0xFF800000> : vector<8xf32>
    %25 = vector.multi_reduction <maximumf>, %24, %cst_12 [1] : vector<8x8xf32> to vector<8xf32>
    %26 = vector.shape_cast %25 : vector<8xf32> to vector<8x1xf32>
    %27 = vector.broadcast %26 : vector<8x1xf32> to vector<8x8xf32>
    %28 = arith.subf %24, %27 : vector<8x8xf32>
    %29 = math.exp %28 : vector<8x8xf32>
    %cst_13 = arith.constant dense<0.000000e+00> : vector<8xf32>
    %30 = vector.multi_reduction <add>, %29, %cst_13 [1] : vector<8x8xf32> to vector<8xf32>
    %31 = vector.shape_cast %30 : vector<8xf32> to vector<8x1xf32>
    %32 = tpu.reciprocal %31 {approx = true} : vector<8x1xf32> -> vector<8x1xf32>
    %33 = vector.broadcast %32 : vector<8x1xf32> to vector<8x8xf32>
    %34 = arith.mulf %29, %33 : vector<8x8xf32>
    %35 = arith.truncf %34 : vector<8x8xf32> to vector<8x8xbf16>
    %cst_14 = arith.constant dense<0.000000e+00> : vector<8x32xf32>
    %36 = tpu.matmul %35, %19, %cst_14 {dimension_numbers = #tpu.dot_dimension_numbers<[1], [0], [0], [1], [0, 0, 1, 1], [], []>} : vector<8x8xbf16>, vector<8x32xbf16>, vector<8x32xf32> -> vector<8x32xf32>
    %37 = arith.truncf %36 : vector<8x32xf32> to vector<8x32xbf16>
    %c0_15 = arith.constant 0 : index
    %c0_16 = arith.constant 0 : index
    %38 = vector.load %arg5[%c0_15, %c0_16] : memref<128x128xbf16, #tpu.memory_space<vmem>>, vector<32x128xbf16>
    %cst_17 = arith.constant dense<0.000000e+00> : vector<8x128xf32>
    %39 = tpu.matmul %37, %38, %cst_17 {dimension_numbers = #tpu.dot_dimension_numbers<[1], [0], [0], [1], [0, 0, 1, 1], [], []>} : vector<8x32xbf16>, vector<32x128xbf16>, vector<8x128xf32> -> vector<8x128xf32>
    %40 = arith.addf %16, %39 : vector<8x128xf32>
    %41 = vector.extract_strided_slice %9 {offsets = [0, 32], sizes = [8, 32], strides = [1, 1]} : vector<8x128xbf16> to vector<8x32xbf16>
    %42 = vector.extract_strided_slice %11 {offsets = [0, 32], sizes = [8, 32], strides = [1, 1]} : vector<8x128xbf16> to vector<8x32xbf16>
    %43 = vector.extract_strided_slice %13 {offsets = [0, 32], sizes = [8, 32], strides = [1, 1]} : vector<8x128xbf16> to vector<8x32xbf16>
    %cst_18 = arith.constant dense<0.000000e+00> : vector<8x8xf32>
    %44 = tpu.matmul %41, %42, %cst_18 {dimension_numbers = #tpu.dot_dimension_numbers<[1], [1], [0], [0], [0, 0, 1, 0], [], []>} : vector<8x32xbf16>, vector<8x32xbf16>, vector<8x8xf32> -> vector<8x8xf32>
    %cst_19 = arith.constant 0.176776692 : f32
    %45 = vector.broadcast %cst_19 : f32 to vector<8x8xf32>
    %46 = arith.mulf %44, %45 : vector<8x8xf32>
    %47 = vector.broadcast %15 : vector<1x8xf32> to vector<8x8xf32>
    %48 = arith.addf %46, %47 : vector<8x8xf32>
    %cst_20 = arith.constant dense<0xFF800000> : vector<8xf32>
    %49 = vector.multi_reduction <maximumf>, %48, %cst_20 [1] : vector<8x8xf32> to vector<8xf32>
    %50 = vector.shape_cast %49 : vector<8xf32> to vector<8x1xf32>
    %51 = vector.broadcast %50 : vector<8x1xf32> to vector<8x8xf32>
    %52 = arith.subf %48, %51 : vector<8x8xf32>
    %53 = math.exp %52 : vector<8x8xf32>
    %cst_21 = arith.constant dense<0.000000e+00> : vector<8xf32>
    %54 = vector.multi_reduction <add>, %53, %cst_21 [1] : vector<8x8xf32> to vector<8xf32>
    %55 = vector.shape_cast %54 : vector<8xf32> to vector<8x1xf32>
    %56 = tpu.reciprocal %55 {approx = true} : vector<8x1xf32> -> vector<8x1xf32>
    %57 = vector.broadcast %56 : vector<8x1xf32> to vector<8x8xf32>
    %58 = arith.mulf %53, %57 : vector<8x8xf32>
    %59 = arith.truncf %58 : vector<8x8xf32> to vector<8x8xbf16>
    %cst_22 = arith.constant dense<0.000000e+00> : vector<8x32xf32>
    %60 = tpu.matmul %59, %43, %cst_22 {dimension_numbers = #tpu.dot_dimension_numbers<[1], [0], [0], [1], [0, 0, 1, 1], [], []>} : vector<8x8xbf16>, vector<8x32xbf16>, vector<8x32xf32> -> vector<8x32xf32>
    %61 = arith.truncf %60 : vector<8x32xf32> to vector<8x32xbf16>
    %c32 = arith.constant 32 : index
    %c0_23 = arith.constant 0 : index
    %62 = vector.load %arg5[%c32, %c0_23] : memref<128x128xbf16, #tpu.memory_space<vmem>>, vector<32x128xbf16>
    %cst_24 = arith.constant dense<0.000000e+00> : vector<8x128xf32>
    %63 = tpu.matmul %61, %62, %cst_24 {dimension_numbers = #tpu.dot_dimension_numbers<[1], [0], [0], [1], [0, 0, 1, 1], [], []>} : vector<8x32xbf16>, vector<32x128xbf16>, vector<8x128xf32> -> vector<8x128xf32>
    %64 = arith.addf %40, %63 : vector<8x128xf32>
    %65 = vector.extract_strided_slice %9 {offsets = [0, 64], sizes = [8, 32], strides = [1, 1]} : vector<8x128xbf16> to vector<8x32xbf16>
    %66 = vector.extract_strided_slice %11 {offsets = [0, 64], sizes = [8, 32], strides = [1, 1]} : vector<8x128xbf16> to vector<8x32xbf16>
    %67 = vector.extract_strided_slice %13 {offsets = [0, 64], sizes = [8, 32], strides = [1, 1]} : vector<8x128xbf16> to vector<8x32xbf16>
    %cst_25 = arith.constant dense<0.000000e+00> : vector<8x8xf32>
    %68 = tpu.matmul %65, %66, %cst_25 {dimension_numbers = #tpu.dot_dimension_numbers<[1], [1], [0], [0], [0, 0, 1, 0], [], []>} : vector<8x32xbf16>, vector<8x32xbf16>, vector<8x8xf32> -> vector<8x8xf32>
    %cst_26 = arith.constant 0.176776692 : f32
    %69 = vector.broadcast %cst_26 : f32 to vector<8x8xf32>
    %70 = arith.mulf %68, %69 : vector<8x8xf32>
    %71 = vector.broadcast %15 : vector<1x8xf32> to vector<8x8xf32>
    %72 = arith.addf %70, %71 : vector<8x8xf32>
    %cst_27 = arith.constant dense<0xFF800000> : vector<8xf32>
    %73 = vector.multi_reduction <maximumf>, %72, %cst_27 [1] : vector<8x8xf32> to vector<8xf32>
    %74 = vector.shape_cast %73 : vector<8xf32> to vector<8x1xf32>
    %75 = vector.broadcast %74 : vector<8x1xf32> to vector<8x8xf32>
    %76 = arith.subf %72, %75 : vector<8x8xf32>
    %77 = math.exp %76 : vector<8x8xf32>
    %cst_28 = arith.constant dense<0.000000e+00> : vector<8xf32>
    %78 = vector.multi_reduction <add>, %77, %cst_28 [1] : vector<8x8xf32> to vector<8xf32>
    %79 = vector.shape_cast %78 : vector<8xf32> to vector<8x1xf32>
    %80 = tpu.reciprocal %79 {approx = true} : vector<8x1xf32> -> vector<8x1xf32>
    %81 = vector.broadcast %80 : vector<8x1xf32> to vector<8x8xf32>
    %82 = arith.mulf %77, %81 : vector<8x8xf32>
    %83 = arith.truncf %82 : vector<8x8xf32> to vector<8x8xbf16>
    %cst_29 = arith.constant dense<0.000000e+00> : vector<8x32xf32>
    %84 = tpu.matmul %83, %67, %cst_29 {dimension_numbers = #tpu.dot_dimension_numbers<[1], [0], [0], [1], [0, 0, 1, 1], [], []>} : vector<8x8xbf16>, vector<8x32xbf16>, vector<8x32xf32> -> vector<8x32xf32>
    %85 = arith.truncf %84 : vector<8x32xf32> to vector<8x32xbf16>
    %c64 = arith.constant 64 : index
    %c0_30 = arith.constant 0 : index
    %86 = vector.load %arg5[%c64, %c0_30] : memref<128x128xbf16, #tpu.memory_space<vmem>>, vector<32x128xbf16>
    %cst_31 = arith.constant dense<0.000000e+00> : vector<8x128xf32>
    %87 = tpu.matmul %85, %86, %cst_31 {dimension_numbers = #tpu.dot_dimension_numbers<[1], [0], [0], [1], [0, 0, 1, 1], [], []>} : vector<8x32xbf16>, vector<32x128xbf16>, vector<8x128xf32> -> vector<8x128xf32>
    %88 = arith.addf %64, %87 : vector<8x128xf32>
    %89 = vector.extract_strided_slice %9 {offsets = [0, 96], sizes = [8, 32], strides = [1, 1]} : vector<8x128xbf16> to vector<8x32xbf16>
    %90 = vector.extract_strided_slice %11 {offsets = [0, 96], sizes = [8, 32], strides = [1, 1]} : vector<8x128xbf16> to vector<8x32xbf16>
    %91 = vector.extract_strided_slice %13 {offsets = [0, 96], sizes = [8, 32], strides = [1, 1]} : vector<8x128xbf16> to vector<8x32xbf16>
    %cst_32 = arith.constant dense<0.000000e+00> : vector<8x8xf32>
    %92 = tpu.matmul %89, %90, %cst_32 {dimension_numbers = #tpu.dot_dimension_numbers<[1], [1], [0], [0], [0, 0, 1, 0], [], []>} : vector<8x32xbf16>, vector<8x32xbf16>, vector<8x8xf32> -> vector<8x8xf32>
    %cst_33 = arith.constant 0.176776692 : f32
    %93 = vector.broadcast %cst_33 : f32 to vector<8x8xf32>
    %94 = arith.mulf %92, %93 : vector<8x8xf32>
    %95 = vector.broadcast %15 : vector<1x8xf32> to vector<8x8xf32>
    %96 = arith.addf %94, %95 : vector<8x8xf32>
    %cst_34 = arith.constant dense<0xFF800000> : vector<8xf32>
    %97 = vector.multi_reduction <maximumf>, %96, %cst_34 [1] : vector<8x8xf32> to vector<8xf32>
    %98 = vector.shape_cast %97 : vector<8xf32> to vector<8x1xf32>
    %99 = vector.broadcast %98 : vector<8x1xf32> to vector<8x8xf32>
    %100 = arith.subf %96, %99 : vector<8x8xf32>
    %101 = math.exp %100 : vector<8x8xf32>
    %cst_35 = arith.constant dense<0.000000e+00> : vector<8xf32>
    %102 = vector.multi_reduction <add>, %101, %cst_35 [1] : vector<8x8xf32> to vector<8xf32>
    %103 = vector.shape_cast %102 : vector<8xf32> to vector<8x1xf32>
    %104 = tpu.reciprocal %103 {approx = true} : vector<8x1xf32> -> vector<8x1xf32>
    %105 = vector.broadcast %104 : vector<8x1xf32> to vector<8x8xf32>
    %106 = arith.mulf %101, %105 : vector<8x8xf32>
    %107 = arith.truncf %106 : vector<8x8xf32> to vector<8x8xbf16>
    %cst_36 = arith.constant dense<0.000000e+00> : vector<8x32xf32>
    %108 = tpu.matmul %107, %91, %cst_36 {dimension_numbers = #tpu.dot_dimension_numbers<[1], [0], [0], [1], [0, 0, 1, 1], [], []>} : vector<8x8xbf16>, vector<8x32xbf16>, vector<8x32xf32> -> vector<8x32xf32>
    %109 = arith.truncf %108 : vector<8x32xf32> to vector<8x32xbf16>
    %c96 = arith.constant 96 : index
    %c0_37 = arith.constant 0 : index
    %110 = vector.load %arg5[%c96, %c0_37] : memref<128x128xbf16, #tpu.memory_space<vmem>>, vector<32x128xbf16>
    %cst_38 = arith.constant dense<0.000000e+00> : vector<8x128xf32>
    %111 = tpu.matmul %109, %110, %cst_38 {dimension_numbers = #tpu.dot_dimension_numbers<[1], [0], [0], [1], [0, 0, 1, 1], [], []>} : vector<8x32xbf16>, vector<32x128xbf16>, vector<8x128xf32> -> vector<8x128xf32>
    %112 = arith.addf %88, %111 : vector<8x128xf32>
    %c0_39 = arith.constant 0 : index
    %c0_40 = arith.constant 0 : index
    %113 = vector.load %arg6[%c0_39, %c0_40] : memref<1x128xf32, #tpu.memory_space<vmem>>, vector<1x128xf32>
    %114 = vector.broadcast %113 : vector<1x128xf32> to vector<8x128xf32>
    %115 = arith.addf %112, %114 : vector<8x128xf32>
    %116 = arith.addf %115, %1 : vector<8x128xf32>
    %c0_41 = arith.constant 0 : index
    %c0_42 = arith.constant 0 : index
    %117 = vector.load %arg7[%c0_41, %c0_42] : memref<1x128xf32, #tpu.memory_space<vmem>>, vector<1x128xf32>
    %c0_43 = arith.constant 0 : index
    %c0_44 = arith.constant 0 : index
    %118 = vector.load %arg8[%c0_43, %c0_44] : memref<1x128xf32, #tpu.memory_space<vmem>>, vector<1x128xf32>
    %cst_45 = arith.constant dense<0.000000e+00> : vector<8xf32>
    %119 = vector.multi_reduction <add>, %116, %cst_45 [1] : vector<8x128xf32> to vector<8xf32>
    %120 = vector.shape_cast %119 : vector<8xf32> to vector<8x1xf32>
    %cst_46 = arith.constant 1.280000e+02 : f32
    %121 = vector.broadcast %cst_46 : f32 to vector<8x1xf32>
    %122 = arith.divf %120, %121 : vector<8x1xf32>
    %123 = vector.broadcast %122 : vector<8x1xf32> to vector<8x128xf32>
    %124 = arith.subf %116, %123 : vector<8x128xf32>
    %125 = arith.mulf %124, %124 : vector<8x128xf32>
    %cst_47 = arith.constant dense<0.000000e+00> : vector<8xf32>
    %126 = vector.multi_reduction <add>, %125, %cst_47 [1] : vector<8x128xf32> to vector<8xf32>
    %127 = vector.shape_cast %126 : vector<8xf32> to vector<8x1xf32>
    %cst_48 = arith.constant 1.280000e+02 : f32
    %128 = vector.broadcast %cst_48 : f32 to vector<8x1xf32>
    %129 = arith.divf %127, %128 : vector<8x1xf32>
    %cst_49 = arith.constant 9.99999996E-13 : f32
    %130 = vector.broadcast %cst_49 : f32 to vector<8x1xf32>
    %131 = arith.addf %129, %130 : vector<8x1xf32>
    %132 = math.rsqrt %131 : vector<8x1xf32>
    %133 = vector.broadcast %132 : vector<8x1xf32> to vector<8x128xf32>
    %134 = arith.mulf %124, %133 : vector<8x128xf32>
    %135 = vector.broadcast %117 : vector<1x128xf32> to vector<8x128xf32>
    %136 = arith.mulf %134, %135 : vector<8x128xf32>
    %137 = vector.broadcast %118 : vector<1x128xf32> to vector<8x128xf32>
    %138 = arith.addf %136, %137 : vector<8x128xf32>
    %139 = arith.truncf %138 : vector<8x128xf32> to vector<8x128xbf16>
    %c0_50 = arith.constant 0 : index
    %c0_51 = arith.constant 0 : index
    %140 = vector.load %arg9[%c0_50, %c0_51] : memref<128x256xbf16, #tpu.memory_space<vmem>>, vector<128x256xbf16>
    %cst_52 = arith.constant dense<0.000000e+00> : vector<8x256xf32>
    %141 = tpu.matmul %139, %140, %cst_52 {dimension_numbers = #tpu.dot_dimension_numbers<[1], [0], [0], [1], [0, 0, 1, 1], [], []>} : vector<8x128xbf16>, vector<128x256xbf16>, vector<8x256xf32> -> vector<8x256xf32>
    %c0_53 = arith.constant 0 : index
    %c0_54 = arith.constant 0 : index
    %142 = vector.load %arg10[%c0_53, %c0_54] : memref<1x256xf32, #tpu.memory_space<vmem>>, vector<1x256xf32>
    %143 = vector.broadcast %142 : vector<1x256xf32> to vector<8x256xf32>
    %144 = arith.addf %141, %143 : vector<8x256xf32>
    %145 = arith.mulf %144, %144 : vector<8x256xf32>
    %146 = arith.mulf %144, %145 : vector<8x256xf32>
    %cst_55 = arith.constant 4.471500e-02 : f32
    %147 = vector.broadcast %cst_55 : f32 to vector<8x256xf32>
    %148 = arith.mulf %147, %146 : vector<8x256xf32>
    %149 = arith.addf %144, %148 : vector<8x256xf32>
    %cst_56 = arith.constant 0.797884583 : f32
    %150 = vector.broadcast %cst_56 : f32 to vector<8x256xf32>
    %151 = arith.mulf %150, %149 : vector<8x256xf32>
    %152 = math.tanh %151 : vector<8x256xf32>
    %cst_57 = arith.constant 1.000000e+00 : f32
    %153 = vector.broadcast %cst_57 : f32 to vector<8x256xf32>
    %154 = arith.addf %153, %152 : vector<8x256xf32>
    %cst_58 = arith.constant 5.000000e-01 : f32
    %155 = vector.broadcast %cst_58 : f32 to vector<8x256xf32>
    %156 = arith.mulf %155, %154 : vector<8x256xf32>
    %157 = arith.mulf %144, %156 : vector<8x256xf32>
    %158 = arith.truncf %157 : vector<8x256xf32> to vector<8x256xbf16>
    %c0_59 = arith.constant 0 : index
    %c0_60 = arith.constant 0 : index
    %159 = vector.load %arg11[%c0_59, %c0_60] : memref<256x128xbf16, #tpu.memory_space<vmem>>, vector<256x128xbf16>
    %cst_61 = arith.constant dense<0.000000e+00> : vector<8x128xf32>
    %160 = tpu.matmul %158, %159, %cst_61 {dimension_numbers = #tpu.dot_dimension_numbers<[1], [0], [0], [1], [0, 0, 1, 1], [], []>} : vector<8x256xbf16>, vector<256x128xbf16>, vector<8x128xf32> -> vector<8x128xf32>
    %c0_62 = arith.constant 0 : index
    %c0_63 = arith.constant 0 : index
    %161 = vector.load %arg12[%c0_62, %c0_63] : memref<1x128xf32, #tpu.memory_space<vmem>>, vector<1x128xf32>
    %162 = vector.broadcast %161 : vector<1x128xf32> to vector<8x128xf32>
    %163 = arith.addf %160, %162 : vector<8x128xf32>
    %164 = arith.addf %163, %138 : vector<8x128xf32>
    %c0_64 = arith.constant 0 : index
    %c0_65 = arith.constant 0 : index
    %165 = vector.load %arg13[%c0_64, %c0_65] : memref<1x128xf32, #tpu.memory_space<vmem>>, vector<1x128xf32>
    %c0_66 = arith.constant 0 : index
    %c0_67 = arith.constant 0 : index
    %166 = vector.load %arg14[%c0_66, %c0_67] : memref<1x128xf32, #tpu.memory_space<vmem>>, vector<1x128xf32>
    %cst_68 = arith.constant dense<0.000000e+00> : vector<8xf32>
    %167 = vector.multi_reduction <add>, %164, %cst_68 [1] : vector<8x128xf32> to vector<8xf32>
    %168 = vector.shape_cast %167 : vector<8xf32> to vector<8x1xf32>
    %cst_69 = arith.constant 1.280000e+02 : f32
    %169 = vector.broadcast %cst_69 : f32 to vector<8x1xf32>
    %170 = arith.divf %168, %169 : vector<8x1xf32>
    %171 = vector.broadcast %170 : vector<8x1xf32> to vector<8x128xf32>
    %172 = arith.subf %164, %171 : vector<8x128xf32>
    %173 = arith.mulf %172, %172 : vector<8x128xf32>
    %cst_70 = arith.constant dense<0.000000e+00> : vector<8xf32>
    %174 = vector.multi_reduction <add>, %173, %cst_70 [1] : vector<8x128xf32> to vector<8xf32>
    %175 = vector.shape_cast %174 : vector<8xf32> to vector<8x1xf32>
    %cst_71 = arith.constant 1.280000e+02 : f32
    %176 = vector.broadcast %cst_71 : f32 to vector<8x1xf32>
    %177 = arith.divf %175, %176 : vector<8x1xf32>
    %cst_72 = arith.constant 9.99999996E-13 : f32
    %178 = vector.broadcast %cst_72 : f32 to vector<8x1xf32>
    %179 = arith.addf %177, %178 : vector<8x1xf32>
    %180 = math.rsqrt %179 : vector<8x1xf32>
    %181 = vector.broadcast %180 : vector<8x1xf32> to vector<8x128xf32>
    %182 = arith.mulf %172, %181 : vector<8x128xf32>
    %183 = vector.broadcast %165 : vector<1x128xf32> to vector<8x128xf32>
    %184 = arith.mulf %182, %183 : vector<8x128xf32>
    %185 = vector.broadcast %166 : vector<1x128xf32> to vector<8x128xf32>
    %186 = arith.addf %184, %185 : vector<8x128xf32>
    %c0_73 = arith.constant 0 : index
    %c0_74 = arith.constant 0 : index
    %c0_75 = arith.constant 0 : index
    %187 = vector.load %arg15[%c0_73, %c0_74, %c0_75] : memref<1x8x128xf32, #tpu.memory_space<vmem>>, vector<1x8x128xf32>
    %188 = vector.shape_cast %187 : vector<1x8x128xf32> to vector<8x128xf32>
    %189 = vector.shape_cast %186 : vector<8x128xf32> to vector<1x8x128xf32>
    tpu.vector_store %arg15[%c0_73, %c0_74, %c0_75], %189 {strides = array<i32>} : memref<1x8x128xf32, #tpu.memory_space<vmem>>, vector<1x8x128xf32>,
    return
  }
  func.func @transform_0(%arg0: i32) -> (i32, i32, i32) {
    %c0_i32 = arith.constant 0 : i32
    %c0_i32_0 = arith.constant 0 : i32
    %c0_i32_1 = arith.constant 0 : i32
    return %arg0, %c0_i32, %c0_i32_0 : i32, i32, i32
  }
  func.func @transform_1(%arg0: i32) -> (i32, i32, i32) {
    %c0_i32 = arith.constant 0 : i32
    %c0_i32_0 = arith.constant 0 : i32
    %c0_i32_1 = arith.constant 0 : i32
    return %arg0, %c0_i32, %c0_i32_0 : i32, i32, i32
  }
  func.func @transform_2(%arg0: i32) -> (i32, i32) {
    %c0_i32 = arith.constant 0 : i32
    %c0_i32_0 = arith.constant 0 : i32
    %c0_i32_1 = arith.constant 0 : i32
    return %c0_i32, %c0_i32_0 : i32, i32
  }
  func.func @transform_3(%arg0: i32) -> (i32, i32) {
    %c0_i32 = arith.constant 0 : i32
    %c0_i32_0 = arith.constant 0 : i32
    %c0_i32_1 = arith.constant 0 : i32
    return %c0_i32, %c0_i32_0 : i32, i32
  }
  func.func @transform_4(%arg0: i32) -> (i32, i32) {
    %c0_i32 = arith.constant 0 : i32
    %c0_i32_0 = arith.constant 0 : i32
    %c0_i32_1 = arith.constant 0 : i32
    return %c0_i32, %c0_i32_0 : i32, i32
  }
  func.func @transform_5(%arg0: i32) -> (i32, i32) {
    %c0_i32 = arith.constant 0 : i32
    %c0_i32_0 = arith.constant 0 : i32
    %c0_i32_1 = arith.constant 0 : i32
    return %c0_i32, %c0_i32_0 : i32, i32
  }
  func.func @transform_6(%arg0: i32) -> (i32, i32) {
    %c0_i32 = arith.constant 0 : i32
    %c0_i32_0 = arith.constant 0 : i32
    %c0_i32_1 = arith.constant 0 : i32
    return %c0_i32, %c0_i32_0 : i32, i32
  }
  func.func @transform_7(%arg0: i32) -> (i32, i32) {
    %c0_i32 = arith.constant 0 : i32
    %c0_i32_0 = arith.constant 0 : i32
    %c0_i32_1 = arith.constant 0 : i32
    return %c0_i32, %c0_i32_0 : i32, i32
  }
  func.func @transform_8(%arg0: i32) -> (i32, i32) {
    %c0_i32 = arith.constant 0 : i32
    %c0_i32_0 = arith.constant 0 : i32
    %c0_i32_1 = arith.constant 0 : i32
    return %c0_i32, %c0_i32_0 : i32, i32
  }
  func.func @transform_9(%arg0: i32) -> (i32, i32) {
    %c0_i32 = arith.constant 0 : i32
    %c0_i32_0 = arith.constant 0 : i32
    %c0_i32_1 = arith.constant 0 : i32
    return %c0_i32, %c0_i32_0 : i32, i32
  }
  func.func @transform_10(%arg0: i32) -> (i32, i32) {
    %c0_i32 = arith.constant 0 : i32
    %c0_i32_0 = arith.constant 0 : i32
    %c0_i32_1 = arith.constant 0 : i32
    return %c0_i32, %c0_i32_0 : i32, i32
  }
  func.func @transform_11(%arg0: i32) -> (i32, i32) {
    %c0_i32 = arith.constant 0 : i32
    %c0_i32_0 = arith.constant 0 : i32
    %c0_i32_1 = arith.constant 0 : i32
    return %c0_i32, %c0_i32_0 : i32, i32
  }
  func.func @transform_12(%arg0: i32) -> (i32, i32) {
    %c0_i32 = arith.constant 0 : i32
    %c0_i32_0 = arith.constant 0 : i32
    %c0_i32_1 = arith.constant 0 : i32
    return %c0_i32, %c0_i32_0 : i32, i32
  }
  func.func @transform_13(%arg0: i32) -> (i32, i32) {
    %c0_i32 = arith.constant 0 : i32
    %c0_i32_0 = arith.constant 0 : i32
    %c0_i32_1 = arith.constant 0 : i32
    return %c0_i32, %c0_i32_0 : i32, i32
  }
  func.func @transform_14(%arg0: i32) -> (i32, i32, i32) {
    %c0_i32 = arith.constant 0 : i32
    %c0_i32_0 = arith.constant 0 : i32
    %c0_i32_1 = arith.constant 0 : i32
    return %arg0, %c0_i32, %c0_i32_0 : i32, i32, i32
  }
}

module attributes {stable_mosaic.version = 11 : i64} {
  func.func @kernel(%arg0: i32, %arg1: memref<2x8x128xf32, #tpu.memory_space<vmem>>, %arg2: memref<128x128xbf16, #tpu.memory_space<vmem>>, %arg3: memref<1x128xf32, #tpu.memory_space<vmem>>, %arg4: memref<128x8xbf16, #tpu.memory_space<vmem>>, %arg5: memref<1x8xf32, #tpu.memory_space<vmem>>, %arg6: memref<16x128xbf16, #tpu.memory_space<vmem>>, %arg7: memref<16x1xf32, #tpu.memory_space<vmem>>, %arg8: memref<2x16x6xf32, #tpu.memory_space<vmem>>, %arg9: memref<2x8xf32, #tpu.memory_space<vmem>>) attributes {dimension_semantics = [#tpu.dimension_semantics<arbitrary>], iteration_bounds = array<i64: 1>, scalar_prefetch = 0 : i64, scratch_operands = 0 : i64, tpu.core_type = #tpu.core_type<tc>, window_params = [{pipeline_mode = #tpu.pipeline_mode<synchronous>, transform_indices = @transform_0, window_bounds = array<i64: 2, 8, 128>}, {pipeline_mode = #tpu.pipeline_mode<synchronous>, transform_indices = @transform_1, window_bounds = array<i64: 128, 128>}, {pipeline_mode = #tpu.pipeline_mode<synchronous>, transform_indices = @transform_2, window_bounds = array<i64: 1, 128>}, {pipeline_mode = #tpu.pipeline_mode<synchronous>, transform_indices = @transform_3, window_bounds = array<i64: 128, 8>}, {pipeline_mode = #tpu.pipeline_mode<synchronous>, transform_indices = @transform_4, window_bounds = array<i64: 1, 8>}, {pipeline_mode = #tpu.pipeline_mode<synchronous>, transform_indices = @transform_5, window_bounds = array<i64: 16, 128>}, {pipeline_mode = #tpu.pipeline_mode<synchronous>, transform_indices = @transform_6, window_bounds = array<i64: 16, 1>}, {pipeline_mode = #tpu.pipeline_mode<synchronous>, transform_indices = @transform_7, window_bounds = array<i64: 2, 16, 6>}, {pipeline_mode = #tpu.pipeline_mode<synchronous>, transform_indices = @transform_8, window_bounds = array<i64: 2, 8>}]} {
    %c0 = arith.constant 0 : index
    %c0_0 = arith.constant 0 : index
    %c0_1 = arith.constant 0 : index
    %0 = vector.load %arg1[%c0, %c0_0, %c0_1] : memref<2x8x128xf32, #tpu.memory_space<vmem>>, vector<1x8x128xf32>
    %1 = vector.shape_cast %0 : vector<1x8x128xf32> to vector<8x128xf32>
    %2 = arith.truncf %1 : vector<8x128xf32> to vector<8x128xbf16>
    %c0_2 = arith.constant 0 : index
    %c0_3 = arith.constant 0 : index
    %3 = vector.load %arg6[%c0_2, %c0_3] : memref<16x128xbf16, #tpu.memory_space<vmem>>, vector<16x128xbf16>
    %cst = arith.constant dense<0.000000e+00> : vector<16x8xf32>
    %4 = tpu.matmul %3, %2, %cst {dimension_numbers = #tpu.dot_dimension_numbers<[1], [1], [0], [0], [0, 0, 1, 0], [], []>} : vector<16x128xbf16>, vector<8x128xbf16>, vector<16x8xf32> -> vector<16x8xf32>
    %c0_4 = arith.constant 0 : index
    %c0_5 = arith.constant 0 : index
    %5 = vector.load %arg7[%c0_4, %c0_5] : memref<16x1xf32, #tpu.memory_space<vmem>>, vector<16x1xf32>
    %6 = vector.broadcast %5 : vector<16x1xf32> to vector<16x8xf32>
    %7 = arith.addf %4, %6 : vector<16x8xf32>
    %8 = vector.extract_strided_slice %7 {offsets = [0, 1], sizes = [16, 6], strides = [1, 1]} : vector<16x8xf32> to vector<16x6xf32>
    %c0_6 = arith.constant 0 : index
    %c0_7 = arith.constant 0 : index
    %c0_8 = arith.constant 0 : index
    %9 = vector.load %arg8[%c0_6, %c0_7, %c0_8] : memref<2x16x6xf32, #tpu.memory_space<vmem>>, vector<1x16x6xf32>
    %10 = vector.shape_cast %9 : vector<1x16x6xf32> to vector<16x6xf32>
    %11 = vector.shape_cast %8 : vector<16x6xf32> to vector<1x16x6xf32>
    tpu.vector_store %arg8[%c0_6, %c0_7, %c0_8], %11 {strides = array<i32>} : memref<2x16x6xf32, #tpu.memory_space<vmem>>, vector<1x16x6xf32>,
    %12 = vector.extract_strided_slice %2 {offsets = [0, 0], sizes = [1, 128], strides = [1, 1]} : vector<8x128xbf16> to vector<1x128xbf16>
    %c0_9 = arith.constant 0 : index
    %c0_10 = arith.constant 0 : index
    %13 = vector.load %arg2[%c0_9, %c0_10] : memref<128x128xbf16, #tpu.memory_space<vmem>>, vector<128x128xbf16>
    %cst_11 = arith.constant dense<0.000000e+00> : vector<1x128xf32>
    %14 = tpu.matmul %12, %13, %cst_11 {dimension_numbers = #tpu.dot_dimension_numbers<[1], [0], [0], [1], [0, 0, 1, 1], [], []>} : vector<1x128xbf16>, vector<128x128xbf16>, vector<1x128xf32> -> vector<1x128xf32>
    %c0_12 = arith.constant 0 : index
    %c0_13 = arith.constant 0 : index
    %15 = vector.load %arg3[%c0_12, %c0_13] : memref<1x128xf32, #tpu.memory_space<vmem>>, vector<1x128xf32>
    %16 = arith.addf %14, %15 : vector<1x128xf32>
    %17 = math.tanh %16 : vector<1x128xf32>
    %18 = arith.truncf %17 : vector<1x128xf32> to vector<1x128xbf16>
    %c0_14 = arith.constant 0 : index
    %c0_15 = arith.constant 0 : index
    %19 = vector.load %arg4[%c0_14, %c0_15] : memref<128x8xbf16, #tpu.memory_space<vmem>>, vector<128x8xbf16>
    %cst_16 = arith.constant dense<0.000000e+00> : vector<1x8xf32>
    %20 = tpu.matmul %18, %19, %cst_16 {dimension_numbers = #tpu.dot_dimension_numbers<[1], [0], [0], [1], [0, 0, 1, 1], [], []>} : vector<1x128xbf16>, vector<128x8xbf16>, vector<1x8xf32> -> vector<1x8xf32>
    %c0_17 = arith.constant 0 : index
    %c0_18 = arith.constant 0 : index
    %21 = vector.load %arg5[%c0_17, %c0_18] : memref<1x8xf32, #tpu.memory_space<vmem>>, vector<1x8xf32>
    %22 = arith.addf %20, %21 : vector<1x8xf32>
    %c0_19 = arith.constant 0 : index
    %c0_20 = arith.constant 0 : index
    %23 = vector.load %arg9[%c0_19, %c0_20] : memref<2x8xf32, #tpu.memory_space<vmem>>, vector<1x8xf32>
    tpu.vector_store %arg9[%c0_19, %c0_20], %22 {strides = array<i32>} : memref<2x8xf32, #tpu.memory_space<vmem>>, vector<1x8xf32>,
    %c1 = arith.constant 1 : index
    %c0_21 = arith.constant 0 : index
    %c0_22 = arith.constant 0 : index
    %24 = vector.load %arg1[%c1, %c0_21, %c0_22] : memref<2x8x128xf32, #tpu.memory_space<vmem>>, vector<1x8x128xf32>
    %25 = vector.shape_cast %24 : vector<1x8x128xf32> to vector<8x128xf32>
    %26 = arith.truncf %25 : vector<8x128xf32> to vector<8x128xbf16>
    %c0_23 = arith.constant 0 : index
    %c0_24 = arith.constant 0 : index
    %27 = vector.load %arg6[%c0_23, %c0_24] : memref<16x128xbf16, #tpu.memory_space<vmem>>, vector<16x128xbf16>
    %cst_25 = arith.constant dense<0.000000e+00> : vector<16x8xf32>
    %28 = tpu.matmul %27, %26, %cst_25 {dimension_numbers = #tpu.dot_dimension_numbers<[1], [1], [0], [0], [0, 0, 1, 0], [], []>} : vector<16x128xbf16>, vector<8x128xbf16>, vector<16x8xf32> -> vector<16x8xf32>
    %c0_26 = arith.constant 0 : index
    %c0_27 = arith.constant 0 : index
    %29 = vector.load %arg7[%c0_26, %c0_27] : memref<16x1xf32, #tpu.memory_space<vmem>>, vector<16x1xf32>
    %30 = vector.broadcast %29 : vector<16x1xf32> to vector<16x8xf32>
    %31 = arith.addf %28, %30 : vector<16x8xf32>
    %32 = vector.extract_strided_slice %31 {offsets = [0, 1], sizes = [16, 6], strides = [1, 1]} : vector<16x8xf32> to vector<16x6xf32>
    %c1_28 = arith.constant 1 : index
    %c0_29 = arith.constant 0 : index
    %c0_30 = arith.constant 0 : index
    %33 = vector.load %arg8[%c1_28, %c0_29, %c0_30] : memref<2x16x6xf32, #tpu.memory_space<vmem>>, vector<1x16x6xf32>
    %34 = vector.shape_cast %33 : vector<1x16x6xf32> to vector<16x6xf32>
    %35 = vector.shape_cast %32 : vector<16x6xf32> to vector<1x16x6xf32>
    tpu.vector_store %arg8[%c1_28, %c0_29, %c0_30], %35 {strides = array<i32>} : memref<2x16x6xf32, #tpu.memory_space<vmem>>, vector<1x16x6xf32>,
    %36 = vector.extract_strided_slice %26 {offsets = [0, 0], sizes = [1, 128], strides = [1, 1]} : vector<8x128xbf16> to vector<1x128xbf16>
    %c0_31 = arith.constant 0 : index
    %c0_32 = arith.constant 0 : index
    %37 = vector.load %arg2[%c0_31, %c0_32] : memref<128x128xbf16, #tpu.memory_space<vmem>>, vector<128x128xbf16>
    %cst_33 = arith.constant dense<0.000000e+00> : vector<1x128xf32>
    %38 = tpu.matmul %36, %37, %cst_33 {dimension_numbers = #tpu.dot_dimension_numbers<[1], [0], [0], [1], [0, 0, 1, 1], [], []>} : vector<1x128xbf16>, vector<128x128xbf16>, vector<1x128xf32> -> vector<1x128xf32>
    %c0_34 = arith.constant 0 : index
    %c0_35 = arith.constant 0 : index
    %39 = vector.load %arg3[%c0_34, %c0_35] : memref<1x128xf32, #tpu.memory_space<vmem>>, vector<1x128xf32>
    %40 = arith.addf %38, %39 : vector<1x128xf32>
    %41 = math.tanh %40 : vector<1x128xf32>
    %42 = arith.truncf %41 : vector<1x128xf32> to vector<1x128xbf16>
    %c0_36 = arith.constant 0 : index
    %c0_37 = arith.constant 0 : index
    %43 = vector.load %arg4[%c0_36, %c0_37] : memref<128x8xbf16, #tpu.memory_space<vmem>>, vector<128x8xbf16>
    %cst_38 = arith.constant dense<0.000000e+00> : vector<1x8xf32>
    %44 = tpu.matmul %42, %43, %cst_38 {dimension_numbers = #tpu.dot_dimension_numbers<[1], [0], [0], [1], [0, 0, 1, 1], [], []>} : vector<1x128xbf16>, vector<128x8xbf16>, vector<1x8xf32> -> vector<1x8xf32>
    %c0_39 = arith.constant 0 : index
    %c0_40 = arith.constant 0 : index
    %45 = vector.load %arg5[%c0_39, %c0_40] : memref<1x8xf32, #tpu.memory_space<vmem>>, vector<1x8xf32>
    %46 = arith.addf %44, %45 : vector<1x8xf32>
    %c1_41 = arith.constant 1 : index
    %c0_42 = arith.constant 0 : index
    %47 = vector.load %arg9[%c1_41, %c0_42] : memref<2x8xf32, #tpu.memory_space<vmem>>, vector<1x8xf32>
    tpu.vector_store %arg9[%c1_41, %c0_42], %46 {strides = array<i32>} : memref<2x8xf32, #tpu.memory_space<vmem>>, vector<1x8xf32>,
    return
  }
  func.func @transform_0(%arg0: i32) -> (i32, i32, i32) {
    %c0_i32 = arith.constant 0 : i32
    %c0_i32_0 = arith.constant 0 : i32
    %c0_i32_1 = arith.constant 0 : i32
    %c0_i32_2 = arith.constant 0 : i32
    return %c0_i32, %c0_i32_0, %c0_i32_1 : i32, i32, i32
  }
  func.func @transform_1(%arg0: i32) -> (i32, i32) {
    %c0_i32 = arith.constant 0 : i32
    %c0_i32_0 = arith.constant 0 : i32
    %c0_i32_1 = arith.constant 0 : i32
    return %c0_i32, %c0_i32_0 : i32, i32
  }
  func.func @transform_2(%arg0: i32) -> (i32, i32) {
    %c0_i32 = arith.constant 0 : i32
    %c0_i32_0 = arith.constant 0 : i32
    %c0_i32_1 = arith.constant 0 : i32
    return %c0_i32, %c0_i32_0 : i32, i32
  }
  func.func @transform_3(%arg0: i32) -> (i32, i32) {
    %c0_i32 = arith.constant 0 : i32
    %c0_i32_0 = arith.constant 0 : i32
    %c0_i32_1 = arith.constant 0 : i32
    return %c0_i32, %c0_i32_0 : i32, i32
  }
  func.func @transform_4(%arg0: i32) -> (i32, i32) {
    %c0_i32 = arith.constant 0 : i32
    %c0_i32_0 = arith.constant 0 : i32
    %c0_i32_1 = arith.constant 0 : i32
    return %c0_i32, %c0_i32_0 : i32, i32
  }
  func.func @transform_5(%arg0: i32) -> (i32, i32) {
    %c0_i32 = arith.constant 0 : i32
    %c0_i32_0 = arith.constant 0 : i32
    %c0_i32_1 = arith.constant 0 : i32
    return %c0_i32, %c0_i32_0 : i32, i32
  }
  func.func @transform_6(%arg0: i32) -> (i32, i32) {
    %c0_i32 = arith.constant 0 : i32
    %c0_i32_0 = arith.constant 0 : i32
    %c0_i32_1 = arith.constant 0 : i32
    return %c0_i32, %c0_i32_0 : i32, i32
  }
  func.func @transform_7(%arg0: i32) -> (i32, i32, i32) {
    %c0_i32 = arith.constant 0 : i32
    %c0_i32_0 = arith.constant 0 : i32
    %c0_i32_1 = arith.constant 0 : i32
    %c0_i32_2 = arith.constant 0 : i32
    return %c0_i32, %c0_i32_0, %c0_i32_1 : i32, i32, i32
  }
  func.func @transform_8(%arg0: i32) -> (i32, i32) {
    %c0_i32 = arith.constant 0 : i32
    %c0_i32_0 = arith.constant 0 : i32
    %c0_i32_1 = arith.constant 0 : i32
    return %c0_i32, %c0_i32_0 : i32, i32
  }
}

</mosaic_0001>

<llo_original>
// kernel: _lambda_.4
$region0: #{_lambda_.4}
  #allocation0 [shape = 'u32[]', space=smem, size = 0x4, offset = 0x4, fixed_abs, tag = 'smem constant byte address 0x4 - core index']
  #allocation1 [shape = 'u32[144,128]{1,0:T(1,128)}', space=vmem, size = 0x12000, scoped, tag = 'internal scratch']
  %s0 = inlined_call_operand.vmem [shape: f32[16,128], index: 0, kind: input, shape index: {}]
  %s1 = inlined_call_operand.vmem [shape: f32[16,128], index: 1, kind: input, shape index: {}]
  %s2 = inlined_call_operand.vmem [shape: f32[1,128], index: 2, kind: input, shape index: {}]
  %s3 = inlined_call_operand.vmem [shape: f32[1,128], index: 3, kind: input, shape index: {}]
  %s4 = inlined_call_operand.vmem [shape: f32[16,128], index: 4, kind: output, shape index: {}]
  %s5 = sld [smem:[#allocation0]]
  $region26: #{_lambda_.4} parent=0
    _
  %s7 = ssub.s32 1, %s5
  %s8 = scalar_select 0, %s7, %s5
  // Predicated region
  $region2: #{_lambda_.4} parent=0 // pred_check
    _
  $region3: #{_lambda_.4} parent=0 // pred_check_branch
    %10 = sbr.rel (0) target = $region5
  $region4: #{_lambda_.4} parent=0 // pred_region
    _
  $region5: #{_lambda_.4} parent=0 // pred_fallthru
    _
  // Predicated region
  $region6: #{_lambda_.4} parent=0 // pred_check
    _
  $region7: #{_lambda_.4} parent=0 // pred_check_branch
    %12 = sbr.rel (0) target = $region9
  $region8: #{_lambda_.4} parent=0 // pred_region
    _
  $region9: #{_lambda_.4} parent=0 // pred_fallthru
    _
  // Predicated region
  $region10: #{_lambda_.4} parent=0 // pred_check
    _
  $region11: #{_lambda_.4} parent=0 // pred_check_branch
    %14 = sbr.rel (0) target = $region13
  $region12: #{_lambda_.4} parent=0 // pred_region
    _
  $region13: #{_lambda_.4} parent=0 // pred_fallthru
    _
  // Predicated region
  $region14: #{_lambda_.4} parent=0 // pred_check
    _
  $region15: #{_lambda_.4} parent=0 // pred_check_branch
    %16 = sbr.rel (0) target = $region17
  $region16: #{_lambda_.4} parent=0 // pred_region
    _
  $region17: #{_lambda_.4} parent=0 // pred_fallthru
    _
  %v17 = vld [vmem:[%s0] sm:$0xff]
  %v18 = vld [vmem:[%s0 + $0x8] sm:$0xff]
  %v19 = vld [vmem:[%s1] sm:$0xff]
  %v20 = vld [vmem:[%s1 + $0x8] sm:$0xff]
  %v21 = vadd.f32 %v17, %v19
  %v22 = vadd.f32 %v18, %v20
  %v23 = vld [vmem:[%s2] sm:$0x1]
  %v24 = vld [vmem:[%s3] sm:$0x1]
  %25 = vadd.xlane.f32.xlu0 %v21
  %v26 = vpop.xlane.xlu0 %25
  %27 = vadd.xlane.f32.xlu0 %v22
  %v28 = vpop.xlane.xlu0 %27
  %v29 = vrcp.pop 128.0
  %v30 = vmul.f32 %v26, %v29
  %v31 = vmul.f32 %v28, %v29
  %v32 = vsub.f32 %v21, %v30
  %v33 = vsub.f32 %v22, %v31
  %v34 = vmul.f32 %v32, %v32
  %v35 = vmul.f32 %v33, %v33
  %36 = vadd.xlane.f32.xlu0 %v34
  %v37 = vpop.xlane.xlu0 %36
  %38 = vadd.xlane.f32.xlu0 %v35
  %v39 = vpop.xlane.xlu0 %38
  %v40 = vmul.f32 %v37, %v29
  %v41 = vmul.f32 %v39, %v29
  %v42 = vadd.f32 %v40, 1e-12
  %v43 = vadd.f32 %v41, 1e-12
  %v44 = vrsqrt.pop %v42
  %v45 = vrsqrt.pop %v43
  %v46 = vmul.f32 %v32, %v44
  %v47 = vmul.f32 %v33, %v45
  %v49 = vlaneseq
  %v50 = vshrl.u32 %v49, 7
  %v51 = vsub.s32 0, %v50
  %v52 = vrot.slane %v23, %v51
  %v54 = vmul.f32 %v46, %v52
  %v55 = vmul.f32 %v47, %v52
  %v57 = vlaneseq
  %v58 = vshrl.u32 %v57, 7
  %v59 = vsub.s32 0, %v58
  %v60 = vrot.slane %v24, %v59
  %v62 = vadd.f32 %v54, %v60
  %v63 = vadd.f32 %v55, %v60
  %64 = vst [vmem:[%s4] sm:$0xff] %v62
  %65 = vst [vmem:[%s4 + $0x8] sm:$0xff] %v63
  // Predicated region
  $region18: #{_lambda_.4} parent=0 // pred_check
    _
  $region19: #{_lambda_.4} parent=0 // pred_check_branch
    %67 = sbr.rel (0) target = $region21
  $region20: #{_lambda_.4} parent=0 // pred_region
    _
  $region21: #{_lambda_.4} parent=0 // pred_fallthru
    _
  // Predicated region
  $region22: #{_lambda_.4} parent=0 // pred_check
    _
  $region23: #{_lambda_.4} parent=0 // pred_check_branch
    %69 = sbr.rel (0) target = $region25
  $region24: #{_lambda_.4} parent=0 // pred_region
    _
  $region25: #{_lambda_.4} parent=0 // pred_fallthru
    _

// kernel: _lambda_.7
$region0: #{_lambda_.7}
  #allocation0 [shape = 'u32[]', space=smem, size = 0x4, offset = 0x4, fixed_abs, tag = 'smem constant byte address 0x4 - core index']
  #allocation1 [shape = 'u32[144,128]{1,0:T(1,128)}', space=vmem, size = 0x12000, scoped, tag = 'internal scratch']
  %s0 = inlined_call_operand.vmem [shape: f32[2,8,128], index: 0, kind: input, shape index: {}]
  %s1 = inlined_call_operand.vmem [shape: bf16[128,128], index: 1, kind: input, shape index: {}]
  %s2 = inlined_call_operand.vmem [shape: f32[1,128], index: 2, kind: input, shape index: {}]
  %s3 = inlined_call_operand.vmem [shape: bf16[128,8], index: 3, kind: input, shape index: {}]
  %s4 = inlined_call_operand.vmem [shape: f32[1,8], index: 4, kind: input, shape index: {}]
  %s5 = inlined_call_operand.vmem [shape: bf16[16,128], index: 5, kind: input, shape index: {}]
  %s6 = inlined_call_operand.vmem [shape: f32[16,1], index: 6, kind: input, shape index: {}]
  %s7 = inlined_call_operand.vmem [shape: f32[2,16,6], index: 7, kind: output, shape index: {0}]
  %s8 = inlined_call_operand.hbm [shape: f32[2,8], index: 8, kind: output, shape index: {1}]
  %9 = xla_tuple %s7, %s8
  %s10 = sld [smem:[#allocation0]]
  $region46: #{_lambda_.7} parent=0
    _
  %s12 = ssub.s32 1, %s10
  %s13 = scalar_select 0, %s12, %s10
  $region1: #{_lambda_.7} parent=0
    #allocation2 [shape = 'u8[1024]{0}', space=vmem, size = 0x400, scoped, tag = 'output window, operand 1, single buffered']
    #allocation3 [shape = 's32[1]{0}', space=sflag, size = 0x4, scoped, tag = 'scoped memory for _lambda_.7']
    %14 = vsyncpa [#allocation3], 0
    // Predicated region
    $region2: #{_lambda_.7} parent=1 // pred_check
      _
    $region3: #{_lambda_.7} parent=1 // pred_check_branch
      %16 = sbr.rel (0) target = $region5
    $region4: #{_lambda_.7} parent=1 // pred_region
      _
    $region5: #{_lambda_.7} parent=1 // pred_fallthru
      _
    // Predicated region
    $region6: #{_lambda_.7} parent=1 // pred_check
      _
    $region7: #{_lambda_.7} parent=1 // pred_check_branch
      %18 = sbr.rel (0) target = $region9
    $region8: #{_lambda_.7} parent=1 // pred_region
      _
    $region9: #{_lambda_.7} parent=1 // pred_fallthru
      _
    // Predicated region
    $region10: #{_lambda_.7} parent=1 // pred_check
      _
    $region11: #{_lambda_.7} parent=1 // pred_check_branch
      %20 = sbr.rel (0) target = $region13
    $region12: #{_lambda_.7} parent=1 // pred_region
      _
    $region13: #{_lambda_.7} parent=1 // pred_fallthru
      _
    // Predicated region
    $region14: #{_lambda_.7} parent=1 // pred_check
      _
    $region15: #{_lambda_.7} parent=1 // pred_check_branch
      %22 = sbr.rel (0) target = $region17
    $region16: #{_lambda_.7} parent=1 // pred_region
      _
    $region17: #{_lambda_.7} parent=1 // pred_fallthru
      _
    // Predicated region
    $region18: #{_lambda_.7} parent=1 // pred_check
      _
    $region19: #{_lambda_.7} parent=1 // pred_check_branch
      %24 = sbr.rel (0) target = $region21
    $region20: #{_lambda_.7} parent=1 // pred_region
      _
    $region21: #{_lambda_.7} parent=1 // pred_fallthru
      _
    // Predicated region
    $region22: #{_lambda_.7} parent=1 // pred_check
      _
    $region23: #{_lambda_.7} parent=1 // pred_check_branch
      %26 = sbr.rel (0) target = $region25
    $region24: #{_lambda_.7} parent=1 // pred_region
      _
    $region25: #{_lambda_.7} parent=1 // pred_fallthru
      _
    // Predicated region
    $region26: #{_lambda_.7} parent=1 // pred_check
      _
    $region27: #{_lambda_.7} parent=1 // pred_check_branch
      %28 = sbr.rel (0) target = $region29
    $region28: #{_lambda_.7} parent=1 // pred_region
      _
    $region29: #{_lambda_.7} parent=1 // pred_fallthru
      _
    %v30 = vld [vmem:[%s0] sm:$0xff]
    %v31 = vpack.c.bf16 %v30, %v30
    %v32 = vld [vmem:[%s5] sm:$0xf]
    %v33 = vld [vmem:[%s5 + $0x4] sm:$0xf]
    %v34 = vld [vmem:[%s6] sm:$0xff]
    %v35 = vld [vmem:[%s6 + $0x8] sm:$0xff]
    %37 = vset.pattern.permute.xlu0 0
    %38 = vperm.xlu0 %37, %v34
    %v39 = vpop.permute.xlu0 %38
    %42 = vset.pattern.permute.xlu0 0
    %43 = vperm.xlu0 %42, %v35
    %v44 = vpop.permute.xlu0 %43
    %v48 = vunpack.c.l.b16 %v32
    %v49 = vunpack.c.l.b16 %v33
    %v50 = vpack.c.b16 %v49, %v48
    %52 = vmatprep.subr.bf16.mxu0 0
    %53 = vmatpush1.bf16.xpose.msra.mxu0 0
    %54 = vmatprep.subr.bf16.mxu0 0
    %55 = vmatpush1.bf16.xpose.msra.mxu0 0
    %56 = vmatprep.subr.bf16.mxu0 0
    %57 = vmatpush1.bf16.xpose.msra.mxu0 0
    %58 = vmatprep.subr.bf16.mxu0 0
    %59 = vmatpush1.bf16.xpose.msra.mxu0 0
    %60 = vmatprep.subr.bf16.mxu0 0
    %61 = vmatpush1.bf16.xpose.msra.mxu0 0
    %62 = vmatprep.subr.bf16.mxu0 0
    %63 = vmatpush1.bf16.xpose.msra.mxu0 0
    %64 = vmatprep.subr.bf16.mxu0 0
    %65 = vmatpush1.bf16.xpose.msra.mxu0 0
    %66 = vmatprep.subr.bf16.mxu0 0
    %67 = vmatpush1.bf16.xpose.msra.mxu0 %v31
    %68 = vmatprep.subr.bf16.mxu0 0
    %69 = vmatpush2.bf16.xpose.msra.mxu0 0
    %70 = vmatprep.subr.bf16.mxu0 0
    %71 = vmatpush2.bf16.xpose.msra.mxu0 0
    %72 = vmatprep.subr.bf16.mxu0 0
    %73 = vmatpush2.bf16.xpose.msra.mxu0 0
    %74 = vmatprep.subr.bf16.mxu0 0
    %75 = vmatpush2.bf16.xpose.msra.mxu0 0
    %76 = vmatprep.subr.bf16.mxu0 0
    %77 = vmatpush2.bf16.xpose.msra.mxu0 0
    %78 = vmatprep.subr.bf16.mxu0 0
    %79 = vmatpush2.bf16.xpose.msra.mxu0 0
    %80 = vmatprep.subr.bf16.mxu0 0
    %81 = vmatpush2.bf16.xpose.msra.mxu0 0
    %82 = vmatprep.subr.bf16.mxu0 0
    %83 = vmatpush2.bf16.xpose.msra.mxu0 0
    %84 = vmatprep.mubr.bf16.mxu0 0
    %85 = vmatmul.mubr.bf16.gmra.mxu0 %v50
    %v86 = vpop.f32.mrf.mxu0
    %v87 = vadd.f32 %v39, %v86
    %v88 = vpop.f32.mrf.mxu0
    %v89 = vpop.f32.mrf.mxu0
    %v90 = vadd.f32 %v44, %v89
    %v91 = vpop.f32.mrf.mxu0
    %92 = vdwg.mxu0
    %95 = vrot.lane.b32.xlu0 %v87, 127
    %v96 = vpop.permute.xlu0 %95
    %97 = vrot.lane.b32.xlu0 %v90, 127
    %v98 = vpop.permute.xlu0 %97
    %vm101 = vcmask 48128
    %102 = vst.msk [vmem:[%s7] sm:$0xff] %vm101, %v96
    %103 = vst.msk [vmem:[%s7 + $0x8] sm:$0xff] %vm101, %v98
    %v104 = vld [vmem:[%s1] sm:$0xf]
    %v105 = vld [vmem:[%s1 + $0x4] sm:$0xf]
    %v106 = vld [vmem:[%s1 + $0x8] sm:$0xf]
    %v107 = vld [vmem:[%s1 + $0xc] sm:$0xf]
    %v108 = vld [vmem:[%s1 + $0x10] sm:$0xf]
    %v109 = vld [vmem:[%s1 + $0x14] sm:$0xf]
    %v110 = vld [vmem:[%s1 + $0x18] sm:$0xf]
    %v111 = vld [vmem:[%s1 + $0x1c] sm:$0xf]
    %v112 = vld [vmem:[%s1 + $0x20] sm:$0xf]
    %v113 = vld [vmem:[%s1 + $0x24] sm:$0xf]
    %v114 = vld [vmem:[%s1 + $0x28] sm:$0xf]
    %v115 = vld [vmem:[%s1 + $0x2c] sm:$0xf]
    %v116 = vld [vmem:[%s1 + $0x30] sm:$0xf]
    %v117 = vld [vmem:[%s1 + $0x34] sm:$0xf]
    %v118 = vld [vmem:[%s1 + $0x38] sm:$0xf]
    %v119 = vld [vmem:[%s1 + $0x3c] sm:$0xf]
    %v120 = vld [vmem:[%s2] sm:$0x1]
    %v137 = vunpack.c.l.b16 %v104
    %v138 = vunpack.c.l.b16 %v105
    %v139 = vunpack.c.l.b16 %v106
    %v140 = vunpack.c.l.b16 %v107
    %v141 = vunpack.c.l.b16 %v108
    %v142 = vunpack.c.l.b16 %v109
    %v143 = vunpack.c.l.b16 %v110
    %v144 = vunpack.c.l.b16 %v111
    %v145 = vunpack.c.l.b16 %v112
    %v146 = vunpack.c.l.b16 %v113
    %v147 = vunpack.c.l.b16 %v114
    %v148 = vunpack.c.l.b16 %v115
    %v149 = vunpack.c.l.b16 %v116
    %v150 = vunpack.c.l.b16 %v117
    %v151 = vunpack.c.l.b16 %v118
    %v152 = vunpack.c.l.b16 %v119
    %v153 = vpack.c.b16 %v138, %v137
    %v154 = vpack.c.b16 %v140, %v139
    %v155 = vpack.c.b16 %v142, %v141
    %v156 = vpack.c.b16 %v144, %v143
    %v157 = vpack.c.b16 %v146, %v145
    %v158 = vpack.c.b16 %v148, %v147
    %v159 = vpack.c.b16 %v150, %v149
    %v160 = vpack.c.b16 %v152, %v151
    %169 = vmatprep.subr.bf16.mxu0 0
    %170 = vmatpush1.bf16.msra.mxu0 %v160
    %171 = vmatprep.subr.bf16.mxu0 0
    %172 = vmatpush1.bf16.msra.mxu0 %v159
    %173 = vmatprep.subr.bf16.mxu0 0
    %174 = vmatpush1.bf16.msra.mxu0 %v158
    %175 = vmatprep.subr.bf16.mxu0 0
    %176 = vmatpush1.bf16.msra.mxu0 %v157
    %177 = vmatprep.subr.bf16.mxu0 0
    %178 = vmatpush1.bf16.msra.mxu0 %v156
    %179 = vmatprep.subr.bf16.mxu0 0
    %180 = vmatpush1.bf16.msra.mxu0 %v155
    %181 = vmatprep.subr.bf16.mxu0 0
    %182 = vmatpush1.bf16.msra.mxu0 %v154
    %183 = vmatprep.subr.bf16.mxu0 0
    %184 = vmatpush1.bf16.msra.mxu0 %v153
    %185 = vmatprep.subr.bf16.mxu0 0
    %186 = vmatpush2.bf16.msra.mxu0 0
    %187 = vmatprep.subr.bf16.mxu0 0
    %188 = vmatpush2.bf16.msra.mxu0 0
    %189 = vmatprep.subr.bf16.mxu0 0
    %190 = vmatpush2.bf16.msra.mxu0 0
    %191 = vmatprep.subr.bf16.mxu0 0
    %192 = vmatpush2.bf16.msra.mxu0 0
    %193 = vmatprep.subr.bf16.mxu0 0
    %194 = vmatpush2.bf16.msra.mxu0 0
    %195 = vmatprep.subr.bf16.mxu0 0
    %196 = vmatpush2.bf16.msra.mxu0 0
    %197 = vmatprep.subr.bf16.mxu0 0
    %198 = vmatpush2.bf16.msra.mxu0 0
    %199 = vmatprep.subr.bf16.mxu0 0
    %200 = vmatpush2.bf16.msra.mxu0 0
    %201 = vmatprep.mubr.bf16.mxu0 0
    %202 = vmatmul.mubr.bf16.gmra.mxu0 %v31
    %v203 = vpop.f32.mrf.mxu0
    %v204 = vadd.f32 %v120, %v203
    %v205 = vpop.f32.mrf.mxu0
    %v206 = vpop.f32.mrf.mxu0
    %v207 = vpop.f32.mrf.mxu0
    %208 = vdwg.mxu0
    %v209 = vtanh.pop %v204
    %v210 = vpack.c.bf16 %v209, %v209
    %v211 = vld [vmem:[%s3] sm:$0xf]
    %v212 = vld [vmem:[%s3 + $0x4] sm:$0xf]
    %v213 = vld [vmem:[%s3 + $0x8] sm:$0xf]
    %v214 = vld [vmem:[%s3 + $0xc] sm:$0xf]
    %v215 = vld [vmem:[%s3 + $0x10] sm:$0xf]
    %v216 = vld [vmem:[%s3 + $0x14] sm:$0xf]
    %v217 = vld [vmem:[%s3 + $0x18] sm:$0xf]
    %v218 = vld [vmem:[%s3 + $0x1c] sm:$0xf]
    %v219 = vld [vmem:[%s3 + $0x20] sm:$0xf]
    %v220 = vld [vmem:[%s3 + $0x24] sm:$0xf]
    %v221 = vld [vmem:[%s3 + $0x28] sm:$0xf]
    %v222 = vld [vmem:[%s3 + $0x2c] sm:$0xf]
    %v223 = vld [vmem:[%s3 + $0x30] sm:$0xf]
    %v224 = vld [vmem:[%s3 + $0x34] sm:$0xf]
    %v225 = vld [vmem:[%s3 + $0x38] sm:$0xf]
    %v226 = vld [vmem:[%s3 + $0x3c] sm:$0xf]
    %v227 = vld [vmem:[%s4] sm:$0x1]
    %v244 = vunpack.c.l.b16 %v211
    %v245 = vunpack.c.l.b16 %v212
    %v246 = vunpack.c.l.b16 %v213
    %v247 = vunpack.c.l.b16 %v214
    %v248 = vunpack.c.l.b16 %v215
    %v249 = vunpack.c.l.b16 %v216
    %v250 = vunpack.c.l.b16 %v217
    %v251 = vunpack.c.l.b16 %v218
    %v252 = vunpack.c.l.b16 %v219
    %v253 = vunpack.c.l.b16 %v220
    %v254 = vunpack.c.l.b16 %v221
    %v255 = vunpack.c.l.b16 %v222
    %v256 = vunpack.c.l.b16 %v223
    %v257 = vunpack.c.l.b16 %v224
    %v258 = vunpack.c.l.b16 %v225
    %v259 = vunpack.c.l.b16 %v226
    %v260 = vpack.c.b16 %v245, %v244
    %v261 = vpack.c.b16 %v247, %v246
    %v262 = vpack.c.b16 %v249, %v248
    %v263 = vpack.c.b16 %v251, %v250
    %v264 = vpack.c.b16 %v253, %v252
    %v265 = vpack.c.b16 %v255, %v254
    %v266 = vpack.c.b16 %v257, %v256
    %v267 = vpack.c.b16 %v259, %v258
    %276 = vmatprep.subr.bf16.mxu0 0
    %277 = vmatpush1.bf16.msra.mxu0 %v267
    %278 = vmatprep.subr.bf16.mxu0 0
    %279 = vmatpush1.bf16.msra.mxu0 %v266
    %280 = vmatprep.subr.bf16.mxu0 0
    %281 = vmatpush1.bf16.msra.mxu0 %v265
    %282 = vmatprep.subr.bf16.mxu0 0
    %283 = vmatpush1.bf16.msra.mxu0 %v264
    %284 = vmatprep.subr.bf16.mxu0 0
    %285 = vmatpush1.bf16.msra.mxu0 %v263
    %286 = vmatprep.subr.bf16.mxu0 0
    %287 = vmatpush1.bf16.msra.mxu0 %v262
    %288 = vmatprep.subr.bf16.mxu0 0
    %289 = vmatpush1.bf16.msra.mxu0 %v261
    %290 = vmatprep.subr.bf16.mxu0 0
    %291 = vmatpush1.bf16.msra.mxu0 %v260
    %292 = vmatprep.subr.bf16.mxu0 0
    %293 = vmatpush2.bf16.msra.mxu0 0
    %294 = vmatprep.subr.bf16.mxu0 0
    %295 = vmatpush2.bf16.msra.mxu0 0
    %296 = vmatprep.subr.bf16.mxu0 0
    %297 = vmatpush2.bf16.msra.mxu0 0
    %298 = vmatprep.subr.bf16.mxu0 0
    %299 = vmatpush2.bf16.msra.mxu0 0
    %300 = vmatprep.subr.bf16.mxu0 0
    %301 = vmatpush2.bf16.msra.mxu0 0
    %302 = vmatprep.subr.bf16.mxu0 0
    %303 = vmatpush2.bf16.msra.mxu0 0
    %304 = vmatprep.subr.bf16.mxu0 0
    %305 = vmatpush2.bf16.msra.mxu0 0
    %306 = vmatprep.subr.bf16.mxu0 0
    %307 = vmatpush2.bf16.msra.mxu0 0
    %308 = vmatprep.mubr.bf16.mxu0 0
    %309 = vmatmul.mubr.bf16.gmra.mxu0 %v210
    %v310 = vpop.f32.mrf.mxu0
    %v311 = vadd.f32 %v227, %v310
    %v312 = vpop.f32.mrf.mxu0
    %v313 = vpop.f32.mrf.mxu0
    %v314 = vpop.f32.mrf.mxu0
    %315 = vdwg.mxu0
    %vm316 = vcmask 57344
    %317 = vst.msk [vmem:[#allocation2] sm:$0x1] %vm316, %v311
    %s318 = scalar_lea.vmem %s0, 8
    %v319 = vld [vmem:[%s318] sm:$0xff]
    %v320 = vpack.c.bf16 %v319, %v319
    %v321 = vld [vmem:[%s5] sm:$0xf]
    %v322 = vld [vmem:[%s5 + $0x4] sm:$0xf]
    %v323 = vld [vmem:[%s6] sm:$0xff]
    %v324 = vld [vmem:[%s6 + $0x8] sm:$0xff]
    %326 = vset.pattern.permute.xlu0 0
    %327 = vperm.xlu0 %326, %v323
    %v328 = vpop.permute.xlu0 %327
    %331 = vset.pattern.permute.xlu0 0
    %332 = vperm.xlu0 %331, %v324
    %v333 = vpop.permute.xlu0 %332
    %v337 = vunpack.c.l.b16 %v321
    %v338 = vunpack.c.l.b16 %v322
    %v339 = vpack.c.b16 %v338, %v337
    %341 = vmatprep.subr.bf16.mxu0 0
    %342 = vmatpush1.bf16.xpose.msra.mxu0 0
    %343 = vmatprep.subr.bf16.mxu0 0
    %344 = vmatpush1.bf16.xpose.msra.mxu0 0
    %345 = vmatprep.subr.bf16.mxu0 0
    %346 = vmatpush1.bf16.xpose.msra.mxu0 0
    %347 = vmatprep.subr.bf16.mxu0 0
    %348 = vmatpush1.bf16.xpose.msra.mxu0 0
    %349 = vmatprep.subr.bf16.mxu0 0
    %350 = vmatpush1.bf16.xpose.msra.mxu0 0
    %351 = vmatprep.subr.bf16.mxu0 0
    %352 = vmatpush1.bf16.xpose.msra.mxu0 0
    %353 = vmatprep.subr.bf16.mxu0 0
    %354 = vmatpush1.bf16.xpose.msra.mxu0 0
    %355 = vmatprep.subr.bf16.mxu0 0
    %356 = vmatpush1.bf16.xpose.msra.mxu0 %v320
    %357 = vmatprep.subr.bf16.mxu0 0
    %358 = vmatpush2.bf16.xpose.msra.mxu0 0
    %359 = vmatprep.subr.bf16.mxu0 0
    %360 = vmatpush2.bf16.xpose.msra.mxu0 0
    %361 = vmatprep.subr.bf16.mxu0 0
    %362 = vmatpush2.bf16.xpose.msra.mxu0 0
    %363 = vmatprep.subr.bf16.mxu0 0
    %364 = vmatpush2.bf16.xpose.msra.mxu0 0
    %365 = vmatprep.subr.bf16.mxu0 0
    %366 = vmatpush2.bf16.xpose.msra.mxu0 0
    %367 = vmatprep.subr.bf16.mxu0 0
    %368 = vmatpush2.bf16.xpose.msra.mxu0 0
    %369 = vmatprep.subr.bf16.mxu0 0
    %370 = vmatpush2.bf16.xpose.msra.mxu0 0
    %371 = vmatprep.subr.bf16.mxu0 0
    %372 = vmatpush2.bf16.xpose.msra.mxu0 0
    %373 = vmatprep.mubr.bf16.mxu0 0
    %374 = vmatmul.mubr.bf16.gmra.mxu0 %v339
    %v375 = vpop.f32.mrf.mxu0
    %v376 = vadd.f32 %v328, %v375
    %v377 = vpop.f32.mrf.mxu0
    %v378 = vpop.f32.mrf.mxu0
    %v379 = vadd.f32 %v333, %v378
    %v380 = vpop.f32.mrf.mxu0
    %381 = vdwg.mxu0
    %384 = vrot.lane.b32.xlu0 %v376, 127
    %v385 = vpop.permute.xlu0 %384
    %386 = vrot.lane.b32.xlu0 %v379, 127
    %v387 = vpop.permute.xlu0 %386
    %s390 = scalar_lea.vmem %s7, 16
    %391 = vst.msk [vmem:[%s390] sm:$0xff] %vm101, %v385
    %392 = vst.msk [vmem:[%s390 + $0x8] sm:$0xff] %vm101, %v387
    %v393 = vld [vmem:[%s1] sm:$0xf]
    %v394 = vld [vmem:[%s1 + $0x4] sm:$0xf]
    %v395 = vld [vmem:[%s1 + $0x8] sm:$0xf]
    %v396 = vld [vmem:[%s1 + $0xc] sm:$0xf]
    %v397 = vld [vmem:[%s1 + $0x10] sm:$0xf]
    %v398 = vld [vmem:[%s1 + $0x14] sm:$0xf]
    %v399 = vld [vmem:[%s1 + $0x18] sm:$0xf]
    %v400 = vld [vmem:[%s1 + $0x1c] sm:$0xf]
    %v401 = vld [vmem:[%s1 + $0x20] sm:$0xf]
    %v402 = vld [vmem:[%s1 + $0x24] sm:$0xf]
    %v403 = vld [vmem:[%s1 + $0x28] sm:$0xf]
    %v404 = vld [vmem:[%s1 + $0x2c] sm:$0xf]
    %v405 = vld [vmem:[%s1 + $0x30] sm:$0xf]
    %v406 = vld [vmem:[%s1 + $0x34] sm:$0xf]
    %v407 = vld [vmem:[%s1 + $0x38] sm:$0xf]
    %v408 = vld [vmem:[%s1 + $0x3c] sm:$0xf]
    %v409 = vld [vmem:[%s2] sm:$0x1]
    %v426 = vunpack.c.l.b16 %v393
    %v427 = vunpack.c.l.b16 %v394
    %v428 = vunpack.c.l.b16 %v395
    %v429 = vunpack.c.l.b16 %v396
    %v430 = vunpack.c.l.b16 %v397
    %v431 = vunpack.c.l.b16 %v398
    %v432 = vunpack.c.l.b16 %v399
    %v433 = vunpack.c.l.b16 %v400
    %v434 = vunpack.c.l.b16 %v401
    %v435 = vunpack.c.l.b16 %v402
    %v436 = vunpack.c.l.b16 %v403
    %v437 = vunpack.c.l.b16 %v404
    %v438 = vunpack.c.l.b16 %v405
    %v439 = vunpack.c.l.b16 %v406
    %v440 = vunpack.c.l.b16 %v407
    %v441 = vunpack.c.l.b16 %v408
    %v442 = vpack.c.b16 %v427, %v426
    %v443 = vpack.c.b16 %v429, %v428
    %v444 = vpack.c.b16 %v431, %v430
    %v445 = vpack.c.b16 %v433, %v432
    %v446 = vpack.c.b16 %v435, %v434
    %v447 = vpack.c.b16 %v437, %v436
    %v448 = vpack.c.b16 %v439, %v438
    %v449 = vpack.c.b16 %v441, %v440
    %458 = vmatprep.subr.bf16.mxu0 0
    %459 = vmatpush1.bf16.msra.mxu0 %v449
    %460 = vmatprep.subr.bf16.mxu0 0
    %461 = vmatpush1.bf16.msra.mxu0 %v448
    %462 = vmatprep.subr.bf16.mxu0 0
    %463 = vmatpush1.bf16.msra.mxu0 %v447
    %464 = vmatprep.subr.bf16.mxu0 0
    %465 = vmatpush1.bf16.msra.mxu0 %v446
    %466 = vmatprep.subr.bf16.mxu0 0
    %467 = vmatpush1.bf16.msra.mxu0 %v445
    %468 = vmatprep.subr.bf16.mxu0 0
    %469 = vmatpush1.bf16.msra.mxu0 %v444
    %470 = vmatprep.subr.bf16.mxu0 0
    %471 = vmatpush1.bf16.msra.mxu0 %v443
    %472 = vmatprep.subr.bf16.mxu0 0
    %473 = vmatpush1.bf16.msra.mxu0 %v442
    %474 = vmatprep.subr.bf16.mxu0 0
    %475 = vmatpush2.bf16.msra.mxu0 0
    %476 = vmatprep.subr.bf16.mxu0 0
    %477 = vmatpush2.bf16.msra.mxu0 0
    %478 = vmatprep.subr.bf16.mxu0 0
    %479 = vmatpush2.bf16.msra.mxu0 0
    %480 = vmatprep.subr.bf16.mxu0 0
    %481 = vmatpush2.bf16.msra.mxu0 0
    %482 = vmatprep.subr.bf16.mxu0 0
    %483 = vmatpush2.bf16.msra.mxu0 0
    %484 = vmatprep.subr.bf16.mxu0 0
    %485 = vmatpush2.bf16.msra.mxu0 0
    %486 = vmatprep.subr.bf16.mxu0 0
    %487 = vmatpush2.bf16.msra.mxu0 0
    %488 = vmatprep.subr.bf16.mxu0 0
    %489 = vmatpush2.bf16.msra.mxu0 0
    %490 = vmatprep.mubr.bf16.mxu0 0
    %491 = vmatmul.mubr.bf16.gmra.mxu0 %v320
    %v492 = vpop.f32.mrf.mxu0
    %v493 = vadd.f32 %v409, %v492
    %v494 = vpop.f32.mrf.mxu0
    %v495 = vpop.f32.mrf.mxu0
    %v496 = vpop.f32.mrf.mxu0
    %497 = vdwg.mxu0
    %v498 = vtanh.pop %v493
    %v499 = vpack.c.bf16 %v498, %v498
    %v500 = vld [vmem:[%s3] sm:$0xf]
    %v501 = vld [vmem:[%s3 + $0x4] sm:$0xf]
    %v502 = vld [vmem:[%s3 + $0x8] sm:$0xf]
    %v503 = vld [vmem:[%s3 + $0xc] sm:$0xf]
    %v504 = vld [vmem:[%s3 + $0x10] sm:$0xf]
    %v505 = vld [vmem:[%s3 + $0x14] sm:$0xf]
    %v506 = vld [vmem:[%s3 + $0x18] sm:$0xf]
    %v507 = vld [vmem:[%s3 + $0x1c] sm:$0xf]
    %v508 = vld [vmem:[%s3 + $0x20] sm:$0xf]
    %v509 = vld [vmem:[%s3 + $0x24] sm:$0xf]
    %v510 = vld [vmem:[%s3 + $0x28] sm:$0xf]
    %v511 = vld [vmem:[%s3 + $0x2c] sm:$0xf]
    %v512 = vld [vmem:[%s3 + $0x30] sm:$0xf]
    %v513 = vld [vmem:[%s3 + $0x34] sm:$0xf]
    %v514 = vld [vmem:[%s3 + $0x38] sm:$0xf]
    %v515 = vld [vmem:[%s3 + $0x3c] sm:$0xf]
    %v516 = vld [vmem:[%s4] sm:$0x1]
    %v533 = vunpack.c.l.b16 %v500
    %v534 = vunpack.c.l.b16 %v501
    %v535 = vunpack.c.l.b16 %v502
    %v536 = vunpack.c.l.b16 %v503
    %v537 = vunpack.c.l.b16 %v504
    %v538 = vunpack.c.l.b16 %v505
    %v539 = vunpack.c.l.b16 %v506
    %v540 = vunpack.c.l.b16 %v507
    %v541 = vunpack.c.l.b16 %v508
    %v542 = vunpack.c.l.b16 %v509
    %v543 = vunpack.c.l.b16 %v510
    %v544 = vunpack.c.l.b16 %v511
    %v545 = vunpack.c.l.b16 %v512
    %v546 = vunpack.c.l.b16 %v513
    %v547 = vunpack.c.l.b16 %v514
    %v548 = vunpack.c.l.b16 %v515
    %v549 = vpack.c.b16 %v534, %v533
    %v550 = vpack.c.b16 %v536, %v535
    %v551 = vpack.c.b16 %v538, %v537
    %v552 = vpack.c.b16 %v540, %v539
    %v553 = vpack.c.b16 %v542, %v541
    %v554 = vpack.c.b16 %v544, %v543
    %v555 = vpack.c.b16 %v546, %v545
    %v556 = vpack.c.b16 %v548, %v547
    %565 = vmatprep.subr.bf16.mxu0 0
    %566 = vmatpush1.bf16.msra.mxu0 %v556
    %567 = vmatprep.subr.bf16.mxu0 0
    %568 = vmatpush1.bf16.msra.mxu0 %v555
    %569 = vmatprep.subr.bf16.mxu0 0
    %570 = vmatpush1.bf16.msra.mxu0 %v554
    %571 = vmatprep.subr.bf16.mxu0 0
    %572 = vmatpush1.bf16.msra.mxu0 %v553
    %573 = vmatprep.subr.bf16.mxu0 0
    %574 = vmatpush1.bf16.msra.mxu0 %v552
    %575 = vmatprep.subr.bf16.mxu0 0
    %576 = vmatpush1.bf16.msra.mxu0 %v551
    %577 = vmatprep.subr.bf16.mxu0 0
    %578 = vmatpush1.bf16.msra.mxu0 %v550
    %579 = vmatprep.subr.bf16.mxu0 0
    %580 = vmatpush1.bf16.msra.mxu0 %v549
    %581 = vmatprep.subr.bf16.mxu0 0
    %582 = vmatpush2.bf16.msra.mxu0 0
    %583 = vmatprep.subr.bf16.mxu0 0
    %584 = vmatpush2.bf16.msra.mxu0 0
    %585 = vmatprep.subr.bf16.mxu0 0
    %586 = vmatpush2.bf16.msra.mxu0 0
    %587 = vmatprep.subr.bf16.mxu0 0
    %588 = vmatpush2.bf16.msra.mxu0 0
    %589 = vmatprep.subr.bf16.mxu0 0
    %590 = vmatpush2.bf16.msra.mxu0 0
    %591 = vmatprep.subr.bf16.mxu0 0
    %592 = vmatpush2.bf16.msra.mxu0 0
    %593 = vmatprep.subr.bf16.mxu0 0
    %594 = vmatpush2.bf16.msra.mxu0 0
    %595 = vmatprep.subr.bf16.mxu0 0
    %596 = vmatpush2.bf16.msra.mxu0 0
    %597 = vmatprep.mubr.bf16.mxu0 0
    %598 = vmatmul.mubr.bf16.gmra.mxu0 %v499
    %v599 = vpop.f32.mrf.mxu0
    %v600 = vadd.f32 %v516, %v599
    %v601 = vpop.f32.mrf.mxu0
    %v602 = vpop.f32.mrf.mxu0
    %v603 = vpop.f32.mrf.mxu0
    %604 = vdwg.mxu0
    %605 = vst.msk [vmem:[#allocation2 + $0x1] sm:$0x1] %vm316, %v600
    // Predicated region
    $region30: #{_lambda_.7} parent=1 // pred_check
      _
    $region31: #{_lambda_.7} parent=1 // pred_check_branch
      %607 = sbr.rel (0) target = $region33
    $region32: #{_lambda_.7} parent=1 // pred_region
      _
    $region33: #{_lambda_.7} parent=1 // pred_fallthru
      _
    // Predicated region
    $region34: #{_lambda_.7} parent=1 // pred_check
      _
    $region35: #{_lambda_.7} parent=1 // pred_check_branch
      %609 = sbr.rel (0) target = $region37
    $region36: #{_lambda_.7} parent=1 // pred_region
      %s611 = ssub.s32 32, 32
      %612 = vsyncadd [#allocation3], %s611
      %s614 = sshll.u32 [#allocation2], 4
      %s615 = int_to_ptr.vmem [resolvable:$true] %s614
      %617 = dma.vmem_to_hbm [thread:$0]  %s615, 32, %s8, [#allocation3]
    $region37: #{_lambda_.7} parent=1 // pred_fallthru
      _
    // Predicated region
    $region38: #{_lambda_.7} parent=1 // pred_check
      _
    $region39: #{_lambda_.7} parent=1 // pred_check_branch
      %619 = sbr.rel (0) target = $region41
    $region40: #{_lambda_.7} parent=1 // pred_region
      _
    $region41: #{_lambda_.7} parent=1 // pred_fallthru
      _
    // Predicated region
    $region42: #{_lambda_.7} parent=1 // pred_check
      _
    $region43: #{_lambda_.7} parent=1 // pred_check_branch
      %621 = sbr.rel (0) target = $region45
    $region44: #{_lambda_.7} parent=1 // pred_region
      %622 = dma.done [#allocation3], 32
    $region45: #{_lambda_.7} parent=1 // pred_fallthru
      _
    %623 = vsyncpa [#allocation3], 1

// kernel: _lambda_.6
$region0: #{_lambda_.6}
  #allocation0 [shape = 'u32[]', space=smem, size = 0x4, offset = 0x4, fixed_abs, tag = 'smem constant byte address 0x4 - core index']
  #allocation1 [shape = 'u32[144,128]{1,0:T(1,128)}', space=vmem, size = 0x12000, scoped, tag = 'internal scratch']
  %s0 = inlined_call_operand.vmem [shape: f32[2,8,128], index: 0, kind: input, shape index: {}]
  %s1 = inlined_call_operand.vmem [shape: f32[2,1,8], index: 1, kind: input, shape index: {}]
  %s2 = inlined_call_operand.vmem [shape: bf16[128,384], index: 2, kind: input, shape index: {}]
  %s3 = inlined_call_operand.vmem [shape: f32[1,384], index: 3, kind: input, shape index: {}]
  %s4 = inlined_call_operand.vmem [shape: bf16[128,128], index: 4, kind: input, shape index: {}]
  %s5 = inlined_call_operand.vmem [shape: f32[1,128], index: 5, kind: input, shape index: {}, may-alias: {5,7,11,13}]
  %s6 = inlined_call_operand.vmem [shape: f32[1,128], index: 6, kind: input, shape index: {}, may-alias: {6,12}]
  %s7 = inlined_call_operand.vmem [shape: f32[1,128], index: 7, kind: input, shape index: {}, may-alias: {5,7,11,13}]
  %s8 = inlined_call_operand.vmem [shape: bf16[128,256], index: 8, kind: input, shape index: {}]
  %s9 = inlined_call_operand.vmem [shape: f32[1,256], index: 9, kind: input, shape index: {}]
  %s10 = inlined_call_operand.vmem [shape: bf16[256,128], index: 10, kind: input, shape index: {}]
  %s11 = inlined_call_operand.vmem [shape: f32[1,128], index: 11, kind: input, shape index: {}, may-alias: {5,7,11,13}]
  %s12 = inlined_call_operand.vmem [shape: f32[1,128], index: 12, kind: input, shape index: {}, may-alias: {6,12}]
  %s13 = inlined_call_operand.vmem [shape: f32[1,128], index: 13, kind: input, shape index: {}, may-alias: {5,7,11,13}]
  %s14 = inlined_call_operand.vmem [shape: f32[2,8,128], index: 14, kind: output, shape index: {}]
  %s15 = sld [smem:[#allocation0]]
  $region89: #{_lambda_.6} parent=0
    _
  %s17 = ssub.s32 1, %s15
  %s18 = scalar_select 0, %s17, %s15
  loop: start=0, step=1, limit=4
  $region2: #{_lambda_.6} parent=0 // loop_pre_header
    _
  $region3: #{_lambda_.6} parent=0 // loop_header
    %s20 = sphi 0, %s24
    %p21 = scmp.ge.s32.totalorder %s20, 4
    %s30 = sphi 0, %s32
    %s33 = sphi 0, %s30
    %s34 = sphi 0, %s33
    %s50 = sphi 0, %s34
    %s56 = sphi 0, %s58
    %s59 = sphi 0, %s56
    %s60 = sphi 0, %s59
    %s76 = sphi 0, %s60
    %s80 = sphi 0, %s80
    %s82 = sphi 0, %s80
    %s83 = sphi 0, %s82
    %s97 = sphi 0, %s83
    %s101 = sphi 0, %s101
    %s103 = sphi 0, %s101
    %s104 = sphi 0, %s103
    %s118 = sphi 0, %s104
    %s122 = sphi 0, %s122
    %s124 = sphi 0, %s122
    %s125 = sphi 0, %s124
    %s139 = sphi 0, %s125
    %s143 = sphi 0, %s143
    %s145 = sphi 0, %s143
    %s146 = sphi 0, %s145
    %s160 = sphi 0, %s146
    %s164 = sphi 0, %s164
    %s166 = sphi 0, %s164
    %s167 = sphi 0, %s166
    %s181 = sphi 0, %s167
    %s185 = sphi 0, %s185
    %s187 = sphi 0, %s185
    %s188 = sphi 0, %s187
    %s202 = sphi 0, %s188
    %s206 = sphi 0, %s206
    %s208 = sphi 0, %s206
    %s209 = sphi 0, %s208
    %s223 = sphi 0, %s209
    %s227 = sphi 0, %s227
    %s229 = sphi 0, %s227
    %s230 = sphi 0, %s229
    %s244 = sphi 0, %s230
    %s248 = sphi 0, %s248
    %s250 = sphi 0, %s248
    %s251 = sphi 0, %s250
    %s265 = sphi 0, %s251
    %s269 = sphi 0, %s269
    %s271 = sphi 0, %s269
    %s272 = sphi 0, %s271
    %s286 = sphi 0, %s272
    %s290 = sphi 0, %s290
    %s292 = sphi 0, %s290
    %s293 = sphi 0, %s292
    %s307 = sphi 0, %s293
    %s311 = sphi 0, %s311
    %s313 = sphi 0, %s311
    %s314 = sphi 0, %s313
    %s328 = sphi 0, %s314
    %s334 = sphi 0, %s336
    %s337 = sphi 0, %s334
    %s338 = sphi 0, %s337
    %s354 = sphi 0, %s338
  $region4: #{_lambda_.6} parent=0 // loop_header_branch
    %23 = sbr.rel (%p21) target = $region8
  $region5: #{_lambda_.6} parent=0 // loop_body
    %s25 = ssub.s32 %s20, 1
    %s26 = ssub.s32 %s20, 2
    %s27 = sadd.s32 %s20, 1
    %s28 = ssub.s32 %s20, %s27
    %p29 = scmp.eq.s32.totalorder %s28, 0
    %s31 = sadd.s32 %s30, 1
    %s32 = scalar_select %p29, %s30, %s31
    %p35 = pneg %p29
    %p36 = scmp.eq.s32.totalorder %s20, 1
    %p37 = por %p35, %p36
    %p38 = scmp.ne.s32.totalorder %s30, %s33
    %p39 = scmp.eq.s32.totalorder %s20, 0
    %p40 = por %p38, %p39
    %p41 = scmp.ne.s32.totalorder %s30, %s33
    %p42 = scmp.eq.s32.totalorder %s25, 1
    %p43 = por %p41, %p42
    %p44 = scmp.ne.s32.totalorder %s33, %s34
    %p45 = scmp.eq.s32.totalorder %s25, 0
    %p46 = por %p44, %p45
    %p47 = scmp.ne.s32.totalorder %s33, %s34
    %p48 = scmp.eq.s32.totalorder %s26, 1
    %p49 = por %p47, %p48
    %p51 = scmp.ne.s32.totalorder %s34, %s50
    %p52 = scmp.eq.s32.totalorder %s26, 0
    %p53 = por %p51, %p52
    %s54 = ssub.s32 %s20, %s27
    %p55 = scmp.eq.s32.totalorder %s54, 0
    %s57 = sadd.s32 %s56, 1
    %s58 = scalar_select %p55, %s56, %s57
    %p61 = pneg %p55
    %p62 = scmp.eq.s32.totalorder %s20, 1
    %p63 = por %p61, %p62
    %p64 = scmp.ne.s32.totalorder %s56, %s59
    %p65 = scmp.eq.s32.totalorder %s20, 0
    %p66 = por %p64, %p65
    %p67 = scmp.ne.s32.totalorder %s56, %s59
    %p68 = scmp.eq.s32.totalorder %s25, 1
    %p69 = por %p67, %p68
    %p70 = scmp.ne.s32.totalorder %s59, %s60
    %p71 = scmp.eq.s32.totalorder %s25, 0
    %p72 = por %p70, %p71
    %p73 = scmp.ne.s32.totalorder %s59, %s60
    %p74 = scmp.eq.s32.totalorder %s26, 1
    %p75 = por %p73, %p74
    %p77 = scmp.ne.s32.totalorder %s60, %s76
    %p78 = scmp.eq.s32.totalorder %s26, 0
    %p79 = por %p77, %p78
    %s81 = sadd.s32 %s80, 1
    %p84 = scmp.eq.s32.totalorder %s20, 1
    %p85 = scmp.ne.s32.totalorder %s80, %s82
    %p86 = scmp.eq.s32.totalorder %s20, 0
    %p87 = por %p85, %p86
    %p88 = scmp.ne.s32.totalorder %s80, %s82
    %p89 = scmp.eq.s32.totalorder %s25, 1
    %p90 = por %p88, %p89
    %p91 = scmp.ne.s32.totalorder %s82, %s83
    %p92 = scmp.eq.s32.totalorder %s25, 0
    %p93 = por %p91, %p92
    %p94 = scmp.ne.s32.totalorder %s82, %s83
    %p95 = scmp.eq.s32.totalorder %s26, 1
    %p96 = por %p94, %p95
    %p98 = scmp.ne.s32.totalorder %s83, %s97
    %p99 = scmp.eq.s32.totalorder %s26, 0
    %p100 = por %p98, %p99
    %s102 = sadd.s32 %s101, 1
    %p105 = scmp.eq.s32.totalorder %s20, 1
    %p106 = scmp.ne.s32.totalorder %s101, %s103
    %p107 = scmp.eq.s32.totalorder %s20, 0
    %p108 = por %p106, %p107
    %p109 = scmp.ne.s32.totalorder %s101, %s103
    %p110 = scmp.eq.s32.totalorder %s25, 1
    %p111 = por %p109, %p110
    %p112 = scmp.ne.s32.totalorder %s103, %s104
    %p113 = scmp.eq.s32.totalorder %s25, 0
    %p114 = por %p112, %p113
    %p115 = scmp.ne.s32.totalorder %s103, %s104
    %p116 = scmp.eq.s32.totalorder %s26, 1
    %p117 = por %p115, %p116
    %p119 = scmp.ne.s32.totalorder %s104, %s118
    %p120 = scmp.eq.s32.totalorder %s26, 0
    %p121 = por %p119, %p120
    %s123 = sadd.s32 %s122, 1
    %p126 = scmp.eq.s32.totalorder %s20, 1
    %p127 = scmp.ne.s32.totalorder %s122, %s124
    %p128 = scmp.eq.s32.totalorder %s20, 0
    %p129 = por %p127, %p128
    %p130 = scmp.ne.s32.totalorder %s122, %s124
    %p131 = scmp.eq.s32.totalorder %s25, 1
    %p132 = por %p130, %p131
    %p133 = scmp.ne.s32.totalorder %s124, %s125
    %p134 = scmp.eq.s32.totalorder %s25, 0
    %p135 = por %p133, %p134
    %p136 = scmp.ne.s32.totalorder %s124, %s125
    %p137 = scmp.eq.s32.totalorder %s26, 1
    %p138 = por %p136, %p137
    %p140 = scmp.ne.s32.totalorder %s125, %s139
    %p141 = scmp.eq.s32.totalorder %s26, 0
    %p142 = por %p140, %p141
    %s144 = sadd.s32 %s143, 1
    %p147 = scmp.eq.s32.totalorder %s20, 1
    %p148 = scmp.ne.s32.totalorder %s143, %s145
    %p149 = scmp.eq.s32.totalorder %s20, 0
    %p150 = por %p148, %p149
    %p151 = scmp.ne.s32.totalorder %s143, %s145
    %p152 = scmp.eq.s32.totalorder %s25, 1
    %p153 = por %p151, %p152
    %p154 = scmp.ne.s32.totalorder %s145, %s146
    %p155 = scmp.eq.s32.totalorder %s25, 0
    %p156 = por %p154, %p155
    %p157 = scmp.ne.s32.totalorder %s145, %s146
    %p158 = scmp.eq.s32.totalorder %s26, 1
    %p159 = por %p157, %p158
    %p161 = scmp.ne.s32.totalorder %s146, %s160
    %p162 = scmp.eq.s32.totalorder %s26, 0
    %p163 = por %p161, %p162
    %s165 = sadd.s32 %s164, 1
    %p168 = scmp.eq.s32.totalorder %s20, 1
    %p169 = scmp.ne.s32.totalorder %s164, %s166
    %p170 = scmp.eq.s32.totalorder %s20, 0
    %p171 = por %p169, %p170
    %p172 = scmp.ne.s32.totalorder %s164, %s166
    %p173 = scmp.eq.s32.totalorder %s25, 1
    %p174 = por %p172, %p173
    %p175 = scmp.ne.s32.totalorder %s166, %s167
    %p176 = scmp.eq.s32.totalorder %s25, 0
    %p177 = por %p175, %p176
    %p178 = scmp.ne.s32.totalorder %s166, %s167
    %p179 = scmp.eq.s32.totalorder %s26, 1
    %p180 = por %p178, %p179
    %p182 = scmp.ne.s32.totalorder %s167, %s181
    %p183 = scmp.eq.s32.totalorder %s26, 0
    %p184 = por %p182, %p183
    %s186 = sadd.s32 %s185, 1
    %p189 = scmp.eq.s32.totalorder %s20, 1
    %p190 = scmp.ne.s32.totalorder %s185, %s187
    %p191 = scmp.eq.s32.totalorder %s20, 0
    %p192 = por %p190, %p191
    %p193 = scmp.ne.s32.totalorder %s185, %s187
    %p194 = scmp.eq.s32.totalorder %s25, 1
    %p195 = por %p193, %p194
    %p196 = scmp.ne.s32.totalorder %s187, %s188
    %p197 = scmp.eq.s32.totalorder %s25, 0
    %p198 = por %p196, %p197
    %p199 = scmp.ne.s32.totalorder %s187, %s188
    %p200 = scmp.eq.s32.totalorder %s26, 1
    %p201 = por %p199, %p200
    %p203 = scmp.ne.s32.totalorder %s188, %s202
    %p204 = scmp.eq.s32.totalorder %s26, 0
    %p205 = por %p203, %p204
    %s207 = sadd.s32 %s206, 1
    %p210 = scmp.eq.s32.totalorder %s20, 1
    %p211 = scmp.ne.s32.totalorder %s206, %s208
    %p212 = scmp.eq.s32.totalorder %s20, 0
    %p213 = por %p211, %p212
    %p214 = scmp.ne.s32.totalorder %s206, %s208
    %p215 = scmp.eq.s32.totalorder %s25, 1
    %p216 = por %p214, %p215
    %p217 = scmp.ne.s32.totalorder %s208, %s209
    %p218 = scmp.eq.s32.totalorder %s25, 0
    %p219 = por %p217, %p218
    %p220 = scmp.ne.s32.totalorder %s208, %s209
    %p221 = scmp.eq.s32.totalorder %s26, 1
    %p222 = por %p220, %p221
    %p224 = scmp.ne.s32.totalorder %s209, %s223
    %p225 = scmp.eq.s32.totalorder %s26, 0
    %p226 = por %p224, %p225
    %s228 = sadd.s32 %s227, 1
    %p231 = scmp.eq.s32.totalorder %s20, 1
    %p232 = scmp.ne.s32.totalorder %s227, %s229
    %p233 = scmp.eq.s32.totalorder %s20, 0
    %p234 = por %p232, %p233
    %p235 = scmp.ne.s32.totalorder %s227, %s229
    %p236 = scmp.eq.s32.totalorder %s25, 1
    %p237 = por %p235, %p236
    %p238 = scmp.ne.s32.totalorder %s229, %s230
    %p239 = scmp.eq.s32.totalorder %s25, 0
    %p240 = por %p238, %p239
    %p241 = scmp.ne.s32.totalorder %s229, %s230
    %p242 = scmp.eq.s32.totalorder %s26, 1
    %p243 = por %p241, %p242
    %p245 = scmp.ne.s32.totalorder %s230, %s244
    %p246 = scmp.eq.s32.totalorder %s26, 0
    %p247 = por %p245, %p246
    %s249 = sadd.s32 %s248, 1
    %p252 = scmp.eq.s32.totalorder %s20, 1
    %p253 = scmp.ne.s32.totalorder %s248, %s250
    %p254 = scmp.eq.s32.totalorder %s20, 0
    %p255 = por %p253, %p254
    %p256 = scmp.ne.s32.totalorder %s248, %s250
    %p257 = scmp.eq.s32.totalorder %s25, 1
    %p258 = por %p256, %p257
    %p259 = scmp.ne.s32.totalorder %s250, %s251
    %p260 = scmp.eq.s32.totalorder %s25, 0
    %p261 = por %p259, %p260
    %p262 = scmp.ne.s32.totalorder %s250, %s251
    %p263 = scmp.eq.s32.totalorder %s26, 1
    %p264 = por %p262, %p263
    %p266 = scmp.ne.s32.totalorder %s251, %s265
    %p267 = scmp.eq.s32.totalorder %s26, 0
    %p268 = por %p266, %p267
    %s270 = sadd.s32 %s269, 1
    %p273 = scmp.eq.s32.totalorder %s20, 1
    %p274 = scmp.ne.s32.totalorder %s269, %s271
    %p275 = scmp.eq.s32.totalorder %s20, 0
    %p276 = por %p274, %p275
    %p277 = scmp.ne.s32.totalorder %s269, %s271
    %p278 = scmp.eq.s32.totalorder %s25, 1
    %p279 = por %p277, %p278
    %p280 = scmp.ne.s32.totalorder %s271, %s272
    %p281 = scmp.eq.s32.totalorder %s25, 0
    %p282 = por %p280, %p281
    %p283 = scmp.ne.s32.totalorder %s271, %s272
    %p284 = scmp.eq.s32.totalorder %s26, 1
    %p285 = por %p283, %p284
    %p287 = scmp.ne.s32.totalorder %s272, %s286
    %p288 = scmp.eq.s32.totalorder %s26, 0
    %p289 = por %p287, %p288
    %s291 = sadd.s32 %s290, 1
    %p294 = scmp.eq.s32.totalorder %s20, 1
    %p295 = scmp.ne.s32.totalorder %s290, %s292
    %p296 = scmp.eq.s32.totalorder %s20, 0
    %p297 = por %p295, %p296
    %p298 = scmp.ne.s32.totalorder %s290, %s292
    %p299 = scmp.eq.s32.totalorder %s25, 1
    %p300 = por %p298, %p299
    %p301 = scmp.ne.s32.totalorder %s292, %s293
    %p302 = scmp.eq.s32.totalorder %s25, 0
    %p303 = por %p301, %p302
    %p304 = scmp.ne.s32.totalorder %s292, %s293
    %p305 = scmp.eq.s32.totalorder %s26, 1
    %p306 = por %p304, %p305
    %p308 = scmp.ne.s32.totalorder %s293, %s307
    %p309 = scmp.eq.s32.totalorder %s26, 0
    %p310 = por %p308, %p309
    %s312 = sadd.s32 %s311, 1
    %p315 = scmp.eq.s32.totalorder %s20, 1
    %p316 = scmp.ne.s32.totalorder %s311, %s313
    %p317 = scmp.eq.s32.totalorder %s20, 0
    %p318 = por %p316, %p317
    %p319 = scmp.ne.s32.totalorder %s311, %s313
    %p320 = scmp.eq.s32.totalorder %s25, 1
    %p321 = por %p319, %p320
    %p322 = scmp.ne.s32.totalorder %s313, %s314
    %p323 = scmp.eq.s32.totalorder %s25, 0
    %p324 = por %p322, %p323
    %p325 = scmp.ne.s32.totalorder %s313, %s314
    %p326 = scmp.eq.s32.totalorder %s26, 1
    %p327 = por %p325, %p326
    %p329 = scmp.ne.s32.totalorder %s314, %s328
    %p330 = scmp.eq.s32.totalorder %s26, 0
    %p331 = por %p329, %p330
    %s332 = ssub.s32 %s20, %s27
    %p333 = scmp.eq.s32.totalorder %s332, 0
    %s335 = sadd.s32 %s334, 1
    %s336 = scalar_select %p333, %s334, %s335
    %p339 = pneg %p333
    %p340 = scmp.eq.s32.totalorder %s20, 1
    %p341 = por %p339, %p340
    %p342 = scmp.ne.s32.totalorder %s334, %s337
    %p343 = scmp.eq.s32.totalorder %s20, 0
    %p344 = por %p342, %p343
    %p345 = scmp.ne.s32.totalorder %s334, %s337
    %p346 = scmp.eq.s32.totalorder %s25, 1
    %p347 = por %p345, %p346
    %p348 = scmp.ne.s32.totalorder %s337, %s338
    %p349 = scmp.eq.s32.totalorder %s25, 0
    %p350 = por %p348, %p349
    %p351 = scmp.ne.s32.totalorder %s337, %s338
    %p352 = scmp.eq.s32.totalorder %s26, 1
    %p353 = por %p351, %p352
    %p355 = scmp.ne.s32.totalorder %s338, %s354
    %p356 = scmp.eq.s32.totalorder %s26, 0
    %p357 = por %p355, %p356
    %p358 = scmp.le.s32.totalorder 1, %s20
    %p359 = scmp.lt.s32.totalorder %s20, 3
    %p360 = pnand %p358, %p359
    %p361 = pneg %p360
    // Predicated region
    $region9: #{_lambda_.6} parent=5 // pred_check
      _
    $region10: #{_lambda_.6} parent=5 // pred_check_branch
      %363 = sbr.rel (%p360) target = $region12
    $region11: #{_lambda_.6} parent=5 // pred_region
      %s364 = ssub.s32 %s20, 1
      // Predicated region
      $region13: #{_lambda_.6} parent=11 // pred_check
        %p365 = pneg %p93
      $region14: #{_lambda_.6} parent=11 // pred_check_branch
        %367 = sbr.rel (%p365) target = $region16
      $region15: #{_lambda_.6} parent=11 // pred_region
        _
      $region16: #{_lambda_.6} parent=11 // pred_fallthru
        _
      // Predicated region
      $region17: #{_lambda_.6} parent=11 // pred_check
        %p368 = pneg %p114
      $region18: #{_lambda_.6} parent=11 // pred_check_branch
        %370 = sbr.rel (%p368) target = $region20
      $region19: #{_lambda_.6} parent=11 // pred_region
        _
      $region20: #{_lambda_.6} parent=11 // pred_fallthru
        _
      // Predicated region
      $region21: #{_lambda_.6} parent=11 // pred_check
        %p371 = pneg %p135
      $region22: #{_lambda_.6} parent=11 // pred_check_branch
        %373 = sbr.rel (%p371) target = $region24
      $region23: #{_lambda_.6} parent=11 // pred_region
        _
      $region24: #{_lambda_.6} parent=11 // pred_fallthru
        _
      // Predicated region
      $region25: #{_lambda_.6} parent=11 // pred_check
        %p374 = pneg %p156
      $region26: #{_lambda_.6} parent=11 // pred_check_branch
        %376 = sbr.rel (%p374) target = $region28
      $region27: #{_lambda_.6} parent=11 // pred_region
        _
      $region28: #{_lambda_.6} parent=11 // pred_fallthru
        _
      // Predicated region
      $region29: #{_lambda_.6} parent=11 // pred_check
        %p377 = pneg %p177
      $region30: #{_lambda_.6} parent=11 // pred_check_branch
        %379 = sbr.rel (%p377) target = $region32
      $region31: #{_lambda_.6} parent=11 // pred_region
        _
      $region32: #{_lambda_.6} parent=11 // pred_fallthru
        _
      // Predicated region
      $region33: #{_lambda_.6} parent=11 // pred_check
        %p380 = pneg %p198
      $region34: #{_lambda_.6} parent=11 // pred_check_branch
        %382 = sbr.rel (%p380) target = $region36
      $region35: #{_lambda_.6} parent=11 // pred_region
        _
      $region36: #{_lambda_.6} parent=11 // pred_fallthru
        _
      // Predicated region
      $region37: #{_lambda_.6} parent=11 // pred_check
        %p383 = pneg %p219
      $region38: #{_lambda_.6} parent=11 // pred_check_branch
        %385 = sbr.rel (%p383) target = $region40
      $region39: #{_lambda_.6} parent=11 // pred_region
        _
      $region40: #{_lambda_.6} parent=11 // pred_fallthru
        _
      // Predicated region
      $region41: #{_lambda_.6} parent=11 // pred_check
        %p386 = pneg %p240
      $region42: #{_lambda_.6} parent=11 // pred_check_branch
        %388 = sbr.rel (%p386) target = $region44
      $region43: #{_lambda_.6} parent=11 // pred_region
        _
      $region44: #{_lambda_.6} parent=11 // pred_fallthru
        _
      // Predicated region
      $region45: #{_lambda_.6} parent=11 // pred_check
        %p389 = pneg %p261
      $region46: #{_lambda_.6} parent=11 // pred_check_branch
        %391 = sbr.rel (%p389) target = $region48
      $region47: #{_lambda_.6} parent=11 // pred_region
        _
      $region48: #{_lambda_.6} parent=11 // pred_fallthru
        _
      // Predicated region
      $region49: #{_lambda_.6} parent=11 // pred_check
        %p392 = pneg %p282
      $region50: #{_lambda_.6} parent=11 // pred_check_branch
        %394 = sbr.rel (%p392) target = $region52
      $region51: #{_lambda_.6} parent=11 // pred_region
        _
      $region52: #{_lambda_.6} parent=11 // pred_fallthru
        _
      // Predicated region
      $region53: #{_lambda_.6} parent=11 // pred_check
        %p395 = pneg %p303
      $region54: #{_lambda_.6} parent=11 // pred_check_branch
        %397 = sbr.rel (%p395) target = $region56
      $region55: #{_lambda_.6} parent=11 // pred_region
        _
      $region56: #{_lambda_.6} parent=11 // pred_fallthru
        _
      // Predicated region
      $region57: #{_lambda_.6} parent=11 // pred_check
        %p398 = pneg %p324
      $region58: #{_lambda_.6} parent=11 // pred_check_branch
        %400 = sbr.rel (%p398) target = $region60
      $region59: #{_lambda_.6} parent=11 // pred_region
        _
      $region60: #{_lambda_.6} parent=11 // pred_fallthru
        _
    $region12: #{_lambda_.6} parent=5 // pred_fallthru
      _
    %p401 = scmp.lt.s32.totalorder %s20, 2
    // Predicated region
    $region61: #{_lambda_.6} parent=5 // pred_check
      %p402 = pneg %p401
    $region62: #{_lambda_.6} parent=5 // pred_check_branch
      %404 = sbr.rel (%p402) target = $region64
    $region63: #{_lambda_.6} parent=5 // pred_region
      // Predicated region
      $region65: #{_lambda_.6} parent=63 // pred_check
        %p405 = pneg %p40
      $region66: #{_lambda_.6} parent=63 // pred_check_branch
        %407 = sbr.rel (%p405) target = $region68
      $region67: #{_lambda_.6} parent=63 // pred_region
        %p408 = scmp.lt.s32.totalorder %s20, 1
        %s409 = scalar_select %p408, %s20, 1
        %s410 = smul.addr %s409, 8
        %s411 = scalar_lea.vmem %s0, %s410
      $region68: #{_lambda_.6} parent=63 // pred_fallthru
        _
      // Predicated region
      $region69: #{_lambda_.6} parent=63 // pred_check
        %p412 = pneg %p66
      $region70: #{_lambda_.6} parent=63 // pred_check_branch
        %414 = sbr.rel (%p412) target = $region72
      $region71: #{_lambda_.6} parent=63 // pred_region
        %p415 = scmp.lt.s32.totalorder %s20, 1
        %s416 = scalar_select %p415, %s20, 1
        %s417 = scalar_lea.vmem %s1, %s416
      $region72: #{_lambda_.6} parent=63 // pred_fallthru
        _
    $region64: #{_lambda_.6} parent=5 // pred_fallthru
      _
    %p418 = scmp.le.s32.totalorder 1, %s20
    %p419 = scmp.lt.s32.totalorder %s20, 3
    %p420 = pnand %p418, %p419
    %p421 = pneg %p420
    // Predicated region
    $region73: #{_lambda_.6} parent=5 // pred_check
      _
    $region74: #{_lambda_.6} parent=5 // pred_check_branch
      %423 = sbr.rel (%p420) target = $region76
    $region75: #{_lambda_.6} parent=5 // pred_region
      %s424 = ssub.s32 %s20, 1
      %p425 = scmp.lt.s32.totalorder %s25, 1
      %s426 = scalar_select %p425, %s25, 1
      %s427 = smul.addr %s426, 8
      %s428 = scalar_lea.vmem %s0, %s427
      %p429 = pneg %p46
      %p430 = pneg %p43
      %p431 = scmp.lt.s32.totalorder %s25, 1
      %s432 = scalar_select %p431, %s25, 1
      %s433 = scalar_lea.vmem %s1, %s432
      %p434 = pneg %p72
      %p435 = pneg %p69
      %p436 = pneg %p93
      %p437 = pneg %p90
      %p438 = pneg %p114
      %p439 = pneg %p111
      %p440 = pneg %p135
      %p441 = pneg %p132
      %p442 = pneg %p156
      %p443 = pneg %p153
      %p444 = pneg %p177
      %p445 = pneg %p174
      %p446 = pneg %p198
      %p447 = pneg %p195
      %p448 = pneg %p219
      %p449 = pneg %p216
      %p450 = pneg %p240
      %p451 = pneg %p237
      %p452 = pneg %p261
      %p453 = pneg %p258
      %p454 = pneg %p282
      %p455 = pneg %p279
      %p456 = pneg %p303
      %p457 = pneg %p300
      %p458 = pneg %p324
      %p459 = pneg %p321
      %p460 = pneg %p350
      %p461 = pneg %p347
      %p462 = scmp.lt.s32.totalorder %s25, 1
      %s463 = scalar_select %p462, %s25, 1
      %s464 = smul.addr %s463, 8
      %s465 = scalar_lea.vmem %s14, %s464
      %p466 = scmp.lt.s32.totalorder %s25, 1
      %s467 = scalar_select %p466, %s25, 1
      %s468 = smul.addr %s467, 8
      %s469 = scalar_lea.vmem %s0, %s468
      %p470 = scmp.lt.s32.totalorder %s25, 1
      %s471 = scalar_select %p470, %s25, 1
      %s472 = scalar_lea.vmem %s1, %s471
      %p473 = scmp.lt.s32.totalorder %s25, 1
      %s474 = scalar_select %p473, %s25, 1
      %s475 = smul.addr %s474, 8
      %s476 = scalar_lea.vmem %s14, %s475
      %v478 = vld [vmem:[%s469] sm:$0xff]
      %v479 = vpack.c.bf16 %v478, %v478
      %v480 = vld [vmem:[%s2] sm:$0xff]
      %v481 = vld [vmem:[%s2 + $0x8] sm:$0xf]
      %v482 = vld [vmem:[%s2 + $0xc] sm:$0xff]
      %v483 = vld [vmem:[%s2 + $0x14] sm:$0xf]
      %v484 = vld [vmem:[%s2 + $0x18] sm:$0xff]
      %v485 = vld [vmem:[%s2 + $0x20] sm:$0xf]
      %v486 = vld [vmem:[%s2 + $0x24] sm:$0xff]
      %v487 = vld [vmem:[%s2 + $0x2c] sm:$0xf]
      %v488 = vld [vmem:[%s2 + $0x30] sm:$0xff]
      %v489 = vld [vmem:[%s2 + $0x38] sm:$0xf]
      %v490 = vld [vmem:[%s2 + $0x3c] sm:$0xff]
      %v491 = vld [vmem:[%s2 + $0x44] sm:$0xf]
      %v492 = vld [vmem:[%s2 + $0x48] sm:$0xff]
      %v493 = vld [vmem:[%s2 + $0x50] sm:$0xf]
      %v494 = vld [vmem:[%s2 + $0x54] sm:$0xff]
      %v495 = vld [vmem:[%s2 + $0x5c] sm:$0xf]
      %v496 = vld [vmem:[%s2 + $0x60] sm:$0xff]
      %v497 = vld [vmem:[%s2 + $0x68] sm:$0xf]
      %v498 = vld [vmem:[%s2 + $0x6c] sm:$0xff]
      %v499 = vld [vmem:[%s2 + $0x74] sm:$0xf]
      %v500 = vld [vmem:[%s2 + $0x78] sm:$0xff]
      %v501 = vld [vmem:[%s2 + $0x80] sm:$0xf]
      %v502 = vld [vmem:[%s2 + $0x84] sm:$0xff]
      %v503 = vld [vmem:[%s2 + $0x8c] sm:$0xf]
      %v504 = vld [vmem:[%s2 + $0x90] sm:$0xff]
      %v505 = vld [vmem:[%s2 + $0x98] sm:$0xf]
      %v506 = vld [vmem:[%s2 + $0x9c] sm:$0xff]
      %v507 = vld [vmem:[%s2 + $0xa4] sm:$0xf]
      %v508 = vld [vmem:[%s2 + $0xa8] sm:$0xff]
      %v509 = vld [vmem:[%s2 + $0xb0] sm:$0xf]
      %v510 = vld [vmem:[%s2 + $0xb4] sm:$0xff]
      %v511 = vld [vmem:[%s2 + $0xbc] sm:$0xf]
      %v512 = vld [vmem:[%s3] sm:$0x7]
      %v514 = vlaneseq
      %v515 = vshrl.u32 %v514, 7
      %v516 = vsub.s32 0, %v515
      %v517 = vrot.slane %v512, %v516
      %v518 = vlaneseq
      %v519 = vshrl.u32 %v518, 7
      %v520 = vsub.s32 1, %v519
      %v521 = vrot.slane %v512, %v520
      %v522 = vlaneseq
      %v523 = vshrl.u32 %v522, 7
      %v524 = vsub.s32 2, %v523
      %v525 = vrot.slane %v512, %v524
      %v561 = vunpack.c.l.b16 %v480
      %v562 = vunpack.c.h.b16 %v480
      %v563 = vunpack.c.l.b16 %v481
      %v564 = vunpack.c.l.b16 %v482
      %v565 = vunpack.c.h.b16 %v482
      %v566 = vunpack.c.l.b16 %v483
      %v567 = vunpack.c.l.b16 %v484
      %v568 = vunpack.c.h.b16 %v484
      %v569 = vunpack.c.l.b16 %v485
      %v570 = vunpack.c.l.b16 %v486
      %v571 = vunpack.c.h.b16 %v486
      %v572 = vunpack.c.l.b16 %v487
      %v573 = vunpack.c.l.b16 %v488
      %v574 = vunpack.c.h.b16 %v488
      %v575 = vunpack.c.l.b16 %v489
      %v576 = vunpack.c.l.b16 %v490
      %v577 = vunpack.c.h.b16 %v490
      %v578 = vunpack.c.l.b16 %v491
      %v579 = vunpack.c.l.b16 %v492
      %v580 = vunpack.c.h.b16 %v492
      %v581 = vunpack.c.l.b16 %v493
      %v582 = vunpack.c.l.b16 %v494
      %v583 = vunpack.c.h.b16 %v494
      %v584 = vunpack.c.l.b16 %v495
      %v585 = vunpack.c.l.b16 %v496
      %v586 = vunpack.c.h.b16 %v496
      %v587 = vunpack.c.l.b16 %v497
      %v588 = vunpack.c.l.b16 %v498
      %v589 = vunpack.c.h.b16 %v498
      %v590 = vunpack.c.l.b16 %v499
      %v591 = vunpack.c.l.b16 %v500
      %v592 = vunpack.c.h.b16 %v500
      %v593 = vunpack.c.l.b16 %v501
      %v594 = vunpack.c.l.b16 %v502
      %v595 = vunpack.c.h.b16 %v502
      %v596 = vunpack.c.l.b16 %v503
      %v597 = vunpack.c.l.b16 %v504
      %v598 = vunpack.c.h.b16 %v504
      %v599 = vunpack.c.l.b16 %v505
      %v600 = vunpack.c.l.b16 %v506
      %v601 = vunpack.c.h.b16 %v506
      %v602 = vunpack.c.l.b16 %v507
      %v603 = vunpack.c.l.b16 %v508
      %v604 = vunpack.c.h.b16 %v508
      %v605 = vunpack.c.l.b16 %v509
      %v606 = vunpack.c.l.b16 %v510
      %v607 = vunpack.c.h.b16 %v510
      %v608 = vunpack.c.l.b16 %v511
      %v609 = vpack.c.b16 %v564, %v561
      %v610 = vpack.c.b16 %v565, %v562
      %v611 = vpack.c.b16 %v566, %v563
      %v612 = vpack.c.b16 %v570, %v567
      %v613 = vpack.c.b16 %v571, %v568
      %v614 = vpack.c.b16 %v572, %v569
      %v615 = vpack.c.b16 %v576, %v573
      %v616 = vpack.c.b16 %v577, %v574
      %v617 = vpack.c.b16 %v578, %v575
      %v618 = vpack.c.b16 %v582, %v579
      %v619 = vpack.c.b16 %v583, %v580
      %v620 = vpack.c.b16 %v584, %v581
      %v621 = vpack.c.b16 %v588, %v585
      %v622 = vpack.c.b16 %v589, %v586
      %v623 = vpack.c.b16 %v590, %v587
      %v624 = vpack.c.b16 %v594, %v591
      %v625 = vpack.c.b16 %v595, %v592
      %v626 = vpack.c.b16 %v596, %v593
      %v627 = vpack.c.b16 %v600, %v597
      %v628 = vpack.c.b16 %v601, %v598
      %v629 = vpack.c.b16 %v602, %v599
      %v630 = vpack.c.b16 %v606, %v603
      %v631 = vpack.c.b16 %v607, %v604
      %v632 = vpack.c.b16 %v608, %v605
      %657 = vmatprep.subr.bf16.mxu0 %v631
      %658 = vmatpush1.bf16.msra.mxu0 %v630
      %659 = vmatprep.subr.bf16.mxu0 %v628
      %660 = vmatpush1.bf16.msra.mxu0 %v627
      %661 = vmatprep.subr.bf16.mxu0 %v625
      %662 = vmatpush1.bf16.msra.mxu0 %v624
      %663 = vmatprep.subr.bf16.mxu0 %v622
      %664 = vmatpush1.bf16.msra.mxu0 %v621
      %665 = vmatprep.subr.bf16.mxu0 %v619
      %666 = vmatpush1.bf16.msra.mxu0 %v618
      %667 = vmatprep.subr.bf16.mxu0 %v616
      %668 = vmatpush1.bf16.msra.mxu0 %v615
      %669 = vmatprep.subr.bf16.mxu0 %v613
      %670 = vmatpush1.bf16.msra.mxu0 %v612
      %671 = vmatprep.subr.bf16.mxu0 %v610
      %672 = vmatpush1.bf16.msra.mxu0 %v609
      %673 = vmatprep.subr.bf16.mxu0 0
      %674 = vmatpush2.bf16.msra.mxu0 0
      %675 = vmatprep.subr.bf16.mxu0 0
      %676 = vmatpush2.bf16.msra.mxu0 0
      %677 = vmatprep.subr.bf16.mxu0 0
      %678 = vmatpush2.bf16.msra.mxu0 0
      %679 = vmatprep.subr.bf16.mxu0 0
      %680 = vmatpush2.bf16.msra.mxu0 0
      %681 = vmatprep.subr.bf16.mxu0 0
      %682 = vmatpush2.bf16.msra.mxu0 0
      %683 = vmatprep.subr.bf16.mxu0 0
      %684 = vmatpush2.bf16.msra.mxu0 0
      %685 = vmatprep.subr.bf16.mxu0 0
      %686 = vmatpush2.bf16.msra.mxu0 0
      %687 = vmatprep.subr.bf16.mxu0 0
      %688 = vmatpush2.bf16.msra.mxu0 0
      %689 = vmatprep.mubr.bf16.mxu0 0
      %690 = vmatmul.mubr.bf16.gmra.mxu0 %v479
      %v691 = vpop.f32.mrf.mxu0
      %v692 = vadd.f32 %v517, %v691
      %v693 = vpop.f32.mrf.mxu0
      %v694 = vadd.f32 %v521, %v693
      %v695 = vpop.f32.mrf.mxu0
      %v696 = vpop.f32.mrf.mxu0
      %697 = vdwg.mxu0
      %698 = vmatprep.subr.bf16.mxu0 0
      %699 = vmatpush1.bf16.msra.mxu0 %v632
      %700 = vmatprep.subr.bf16.mxu0 0
      %701 = vmatpush1.bf16.msra.mxu0 %v629
      %702 = vmatprep.subr.bf16.mxu0 0
      %703 = vmatpush1.bf16.msra.mxu0 %v626
      %704 = vmatprep.subr.bf16.mxu0 0
      %705 = vmatpush1.bf16.msra.mxu0 %v623
      %706 = vmatprep.subr.bf16.mxu0 0
      %707 = vmatpush1.bf16.msra.mxu0 %v620
      %708 = vmatprep.subr.bf16.mxu0 0
      %709 = vmatpush1.bf16.msra.mxu0 %v617
      %710 = vmatprep.subr.bf16.mxu0 0
      %711 = vmatpush1.bf16.msra.mxu0 %v614
      %712 = vmatprep.subr.bf16.mxu0 0
      %713 = vmatpush1.bf16.msra.mxu0 %v611
      %714 = vmatprep.subr.bf16.mxu0 0
      %715 = vmatpush2.bf16.msra.mxu0 0
      %716 = vmatprep.subr.bf16.mxu0 0
      %717 = vmatpush2.bf16.msra.mxu0 0
      %718 = vmatprep.subr.bf16.mxu0 0
      %719 = vmatpush2.bf16.msra.mxu0 0
      %720 = vmatprep.subr.bf16.mxu0 0
      %721 = vmatpush2.bf16.msra.mxu0 0
      %722 = vmatprep.subr.bf16.mxu0 0
      %723 = vmatpush2.bf16.msra.mxu0 0
      %724 = vmatprep.subr.bf16.mxu0 0
      %725 = vmatpush2.bf16.msra.mxu0 0
      %726 = vmatprep.subr.bf16.mxu0 0
      %727 = vmatpush2.bf16.msra.mxu0 0
      %728 = vmatprep.subr.bf16.mxu0 0
      %729 = vmatpush2.bf16.msra.mxu0 0
      %730 = vmatprep.mubr.bf16.mxu0 0
      %731 = vmatmul.mubr.bf16.gmra.mxu0 %v479
      %v732 = vpop.f32.mrf.mxu0
      %v733 = vadd.f32 %v525, %v732
      %v734 = vpop.f32.mrf.mxu0
      %v735 = vpop.f32.mrf.mxu0
      %v736 = vpop.f32.mrf.mxu0
      %737 = vdwg.mxu0
      %v738 = vpack.c.bf16 %v692, %v692
      %v739 = vpack.c.bf16 %v694, %v694
      %v740 = vpack.c.bf16 %v733, %v733
      %v741 = vld [vmem:[%s472] sm:$0x1]
      %vm742 = vcmask 261120
      %v744 = vsel %vm742, %v738, 0
      %v747 = vsel %vm742, %v739, 0
      %749 = vmatprep.subr.bf16.mxu0 0
      %750 = vmatpush1.bf16.xpose.msra.mxu0 0
      %751 = vmatprep.subr.bf16.mxu0 0
      %752 = vmatpush1.bf16.xpose.msra.mxu0 0
      %753 = vmatprep.subr.bf16.mxu0 0
      %754 = vmatpush1.bf16.xpose.msra.mxu0 0
      %755 = vmatprep.subr.bf16.mxu0 0
      %756 = vmatpush1.bf16.xpose.msra.mxu0 0
      %757 = vmatprep.subr.bf16.mxu0 0
      %758 = vmatpush1.bf16.xpose.msra.mxu0 0
      %759 = vmatprep.subr.bf16.mxu0 0
      %760 = vmatpush1.bf16.xpose.msra.mxu0 0
      %761 = vmatprep.subr.bf16.mxu0 0
      %762 = vmatpush1.bf16.xpose.msra.mxu0 0
      %763 = vmatprep.subr.bf16.mxu0 0
      %764 = vmatpush1.bf16.xpose.msra.mxu0 %v747
      %765 = vmatprep.subr.bf16.mxu0 0
      %766 = vmatpush2.bf16.xpose.msra.mxu0 0
      %767 = vmatprep.subr.bf16.mxu0 0
      %768 = vmatpush2.bf16.xpose.msra.mxu0 0
      %769 = vmatprep.subr.bf16.mxu0 0
      %770 = vmatpush2.bf16.xpose.msra.mxu0 0
      %771 = vmatprep.subr.bf16.mxu0 0
      %772 = vmatpush2.bf16.xpose.msra.mxu0 0
      %773 = vmatprep.subr.bf16.mxu0 0
      %774 = vmatpush2.bf16.xpose.msra.mxu0 0
      %775 = vmatprep.subr.bf16.mxu0 0
      %776 = vmatpush2.bf16.xpose.msra.mxu0 0
      %777 = vmatprep.subr.bf16.mxu0 0
      %778 = vmatpush2.bf16.xpose.msra.mxu0 0
      %779 = vmatprep.subr.bf16.mxu0 0
      %780 = vmatpush2.bf16.xpose.msra.mxu0 0
      %781 = vmatprep.mubr.bf16.mxu0 0
      %782 = vmatmul.mubr.bf16.gmra.mxu0 %v744
      %v783 = vpop.f32.mrf.mxu0
      %v784 = vadd.f32 0.0, %v783
      %v785 = vpop.f32.mrf.mxu0
      %v786 = vpop.f32.mrf.mxu0
      %v787 = vpop.f32.mrf.mxu0
      %788 = vdwg.mxu0
      %v789 = vmul.f32 %v784, 0.17677669
      %v791 = vlaneseq
      %v792 = vshrl.u32 %v791, 7
      %v793 = vsub.s32 0, %v792
      %v794 = vrot.slane %v741, %v793
      %v796 = vadd.f32 %v789, %v794
      %vm797 = vcmask 64512
      %v798 = vsel %vm797, %v796, -inf
      %799 = vmax.xlane.f32.xlu0 %v798
      %v800 = vpop.xlane.xlu0 %799
      %v801 = vsub.f32 %v796, %v800
      %v802 = vmul.f32 %v801, 1.442695
      %v803 = vpow.pop %v802
      %v804 = vsel %vm797, %v803, 0.0
      %805 = vadd.xlane.f32.xlu0 %v804
      %v806 = vpop.xlane.xlu0 %805
      %v807 = vrcp.pop %v806
      %v808 = vmul.f32 %v803, %v807
      %v809 = vpack.c.bf16 %v808, %v808
      %v811 = vsel %vm797, %v809, 0
      %vm813 = vcmask 1043456
      %v815 = vsel %vm813, %v740, 0
      %817 = vmatprep.subr.bf16.mxu0 0
      %818 = vmatpush1.bf16.msra.mxu0 0
      %819 = vmatprep.subr.bf16.mxu0 0
      %820 = vmatpush1.bf16.msra.mxu0 0
      %821 = vmatprep.subr.bf16.mxu0 0
      %822 = vmatpush1.bf16.msra.mxu0 0
      %823 = vmatprep.subr.bf16.mxu0 0
      %824 = vmatpush1.bf16.msra.mxu0 0
      %825 = vmatprep.subr.bf16.mxu0 0
      %826 = vmatpush1.bf16.msra.mxu0 0
      %827 = vmatprep.subr.bf16.mxu0 0
      %828 = vmatpush1.bf16.msra.mxu0 0
      %829 = vmatprep.subr.bf16.mxu0 0
      %830 = vmatpush1.bf16.msra.mxu0 0
      %831 = vmatprep.subr.bf16.mxu0 0
      %832 = vmatpush1.bf16.msra.mxu0 %v815
      %833 = vmatprep.subr.bf16.mxu0 0
      %834 = vmatpush2.bf16.msra.mxu0 0
      %835 = vmatprep.subr.bf16.mxu0 0
      %836 = vmatpush2.bf16.msra.mxu0 0
      %837 = vmatprep.subr.bf16.mxu0 0
      %838 = vmatpush2.bf16.msra.mxu0 0
      %839 = vmatprep.subr.bf16.mxu0 0
      %840 = vmatpush2.bf16.msra.mxu0 0
      %841 = vmatprep.subr.bf16.mxu0 0
      %842 = vmatpush2.bf16.msra.mxu0 0
      %843 = vmatprep.subr.bf16.mxu0 0
      %844 = vmatpush2.bf16.msra.mxu0 0
      %845 = vmatprep.subr.bf16.mxu0 0
      %846 = vmatpush2.bf16.msra.mxu0 0
      %847 = vmatprep.subr.bf16.mxu0 0
      %848 = vmatpush2.bf16.msra.mxu0 0
      %849 = vmatprep.mubr.bf16.mxu0 0
      %850 = vmatmul.mubr.bf16.gmra.mxu0 %v811
      %v851 = vpop.f32.mrf.mxu0
      %v852 = vadd.f32 0.0, %v851
      %v853 = vpop.f32.mrf.mxu0
      %v854 = vpop.f32.mrf.mxu0
      %v855 = vpop.f32.mrf.mxu0
      %856 = vdwg.mxu0
      %v857 = vpack.c.bf16 %v852, %v852
      %v858 = vld [vmem:[%s4] sm:$0xf]
      %v859 = vld [vmem:[%s4 + $0x4] sm:$0xf]
      %v860 = vld [vmem:[%s4 + $0x8] sm:$0xf]
      %v861 = vld [vmem:[%s4 + $0xc] sm:$0xf]
      %863 = vrot.lane.b32.xlu0 %v738, 96
      %v864 = vpop.permute.xlu0 %863
      %866 = vrot.lane.b32.xlu0 %v739, 96
      %v867 = vpop.permute.xlu0 %866
      %v869 = vsel %vm742, %v864, 0
      %v872 = vsel %vm742, %v867, 0
      %874 = vmatprep.subr.bf16.mxu0 0
      %875 = vmatpush1.bf16.xpose.msra.mxu0 0
      %876 = vmatprep.subr.bf16.mxu0 0
      %877 = vmatpush1.bf16.xpose.msra.mxu0 0
      %878 = vmatprep.subr.bf16.mxu0 0
      %879 = vmatpush1.bf16.xpose.msra.mxu0 0
      %880 = vmatprep.subr.bf16.mxu0 0
      %881 = vmatpush1.bf16.xpose.msra.mxu0 0
      %882 = vmatprep.subr.bf16.mxu0 0
      %883 = vmatpush1.bf16.xpose.msra.mxu0 0
      %884 = vmatprep.subr.bf16.mxu0 0
      %885 = vmatpush1.bf16.xpose.msra.mxu0 0
      %886 = vmatprep.subr.bf16.mxu0 0
      %887 = vmatpush1.bf16.xpose.msra.mxu0 0
      %888 = vmatprep.subr.bf16.mxu0 0
      %889 = vmatpush1.bf16.xpose.msra.mxu0 %v872
      %890 = vmatprep.subr.bf16.mxu0 0
      %891 = vmatpush2.bf16.xpose.msra.mxu0 0
      %892 = vmatprep.subr.bf16.mxu0 0
      %893 = vmatpush2.bf16.xpose.msra.mxu0 0
      %894 = vmatprep.subr.bf16.mxu0 0
      %895 = vmatpush2.bf16.xpose.msra.mxu0 0
      %896 = vmatprep.subr.bf16.mxu0 0
      %897 = vmatpush2.bf16.xpose.msra.mxu0 0
      %898 = vmatprep.subr.bf16.mxu0 0
      %899 = vmatpush2.bf16.xpose.msra.mxu0 0
      %900 = vmatprep.subr.bf16.mxu0 0
      %901 = vmatpush2.bf16.xpose.msra.mxu0 0
      %902 = vmatprep.subr.bf16.mxu0 0
      %903 = vmatpush2.bf16.xpose.msra.mxu0 0
      %904 = vmatprep.subr.bf16.mxu0 0
      %905 = vmatpush2.bf16.xpose.msra.mxu0 0
      %906 = vmatprep.mubr.bf16.mxu0 0
      %907 = vmatmul.mubr.bf16.gmra.mxu0 %v869
      %v908 = vpop.f32.mrf.mxu0
      %v909 = vadd.f32 0.0, %v908
      %v910 = vpop.f32.mrf.mxu0
      %v911 = vpop.f32.mrf.mxu0
      %v912 = vpop.f32.mrf.mxu0
      %913 = vdwg.mxu0
      %v914 = vmul.f32 %v909, 0.17677669
      %v915 = vadd.f32 %v914, %v794
      %v916 = vsel %vm797, %v915, -inf
      %917 = vmax.xlane.f32.xlu0 %v916
      %v918 = vpop.xlane.xlu0 %917
      %v919 = vsub.f32 %v915, %v918
      %v920 = vmul.f32 %v919, 1.442695
      %v921 = vpow.pop %v920
      %v922 = vsel %vm797, %v921, 0.0
      %923 = vadd.xlane.f32.xlu0 %v922
      %v924 = vpop.xlane.xlu0 %923
      %v925 = vrcp.pop %v924
      %v926 = vmul.f32 %v921, %v925
      %v927 = vpack.c.bf16 %v926, %v926
      %929 = vrot.lane.b32.xlu0 %v740, 96
      %v930 = vpop.permute.xlu0 %929
      %v932 = vsel %vm797, %v927, 0
      %v935 = vsel %vm813, %v930, 0
      %937 = vmatprep.subr.bf16.mxu0 0
      %938 = vmatpush1.bf16.msra.mxu0 0
      %939 = vmatprep.subr.bf16.mxu0 0
      %940 = vmatpush1.bf16.msra.mxu0 0
      %941 = vmatprep.subr.bf16.mxu0 0
      %942 = vmatpush1.bf16.msra.mxu0 0
      %943 = vmatprep.subr.bf16.mxu0 0
      %944 = vmatpush1.bf16.msra.mxu0 0
      %945 = vmatprep.subr.bf16.mxu0 0
      %946 = vmatpush1.bf16.msra.mxu0 0
      %947 = vmatprep.subr.bf16.mxu0 0
      %948 = vmatpush1.bf16.msra.mxu0 0
      %949 = vmatprep.subr.bf16.mxu0 0
      %950 = vmatpush1.bf16.msra.mxu0 0
      %951 = vmatprep.subr.bf16.mxu0 0
      %952 = vmatpush1.bf16.msra.mxu0 %v935
      %953 = vmatprep.subr.bf16.mxu0 0
      %954 = vmatpush2.bf16.msra.mxu0 0
      %955 = vmatprep.subr.bf16.mxu0 0
      %956 = vmatpush2.bf16.msra.mxu0 0
      %957 = vmatprep.subr.bf16.mxu0 0
      %958 = vmatpush2.bf16.msra.mxu0 0
      %959 = vmatprep.subr.bf16.mxu0 0
      %960 = vmatpush2.bf16.msra.mxu0 0
      %961 = vmatprep.subr.bf16.mxu0 0
      %962 = vmatpush2.bf16.msra.mxu0 0
      %963 = vmatprep.subr.bf16.mxu0 0
      %964 = vmatpush2.bf16.msra.mxu0 0
      %965 = vmatprep.subr.bf16.mxu0 0
      %966 = vmatpush2.bf16.msra.mxu0 0
      %967 = vmatprep.subr.bf16.mxu0 0
      %968 = vmatpush2.bf16.msra.mxu0 0
      %969 = vmatprep.mubr.bf16.mxu0 0
      %970 = vmatmul.mubr.bf16.gmra.mxu0 %v932
      %v971 = vpop.f32.mrf.mxu0
      %v972 = vadd.f32 0.0, %v971
      %v973 = vpop.f32.mrf.mxu0
      %v974 = vpop.f32.mrf.mxu0
      %v975 = vpop.f32.mrf.mxu0
      %976 = vdwg.mxu0
      %v977 = vpack.c.bf16 %v972, %v972
      %v978 = vld [vmem:[%s4 + $0x10] sm:$0xf]
      %v979 = vld [vmem:[%s4 + $0x14] sm:$0xf]
      %v980 = vld [vmem:[%s4 + $0x18] sm:$0xf]
      %v981 = vld [vmem:[%s4 + $0x1c] sm:$0xf]
      %v986 = vunpack.c.l.b16 %v978
      %v987 = vunpack.c.l.b16 %v979
      %v988 = vunpack.c.l.b16 %v980
      %v989 = vunpack.c.l.b16 %v981
      %v990 = vpack.c.b16 %v987, %v986
      %v991 = vpack.c.b16 %v989, %v988
      %v995 = vsel %vm742, %v977, 0
      %997 = vmatprep.subr.bf16.mxu0 0
      %998 = vmatpush1.bf16.msra.mxu0 0
      %999 = vmatprep.subr.bf16.mxu0 0
      %1000 = vmatpush1.bf16.msra.mxu0 0
      %1001 = vmatprep.subr.bf16.mxu0 0
      %1002 = vmatpush1.bf16.msra.mxu0 0
      %1003 = vmatprep.subr.bf16.mxu0 0
      %1004 = vmatpush1.bf16.msra.mxu0 0
      %1005 = vmatprep.subr.bf16.mxu0 0
      %1006 = vmatpush1.bf16.msra.mxu0 0
      %1007 = vmatprep.subr.bf16.mxu0 0
      %1008 = vmatpush1.bf16.msra.mxu0 0
      %1009 = vmatprep.subr.bf16.mxu0 0
      %1010 = vmatpush1.bf16.msra.mxu0 %v991
      %1011 = vmatprep.subr.bf16.mxu0 0
      %1012 = vmatpush1.bf16.msra.mxu0 %v990
      %1013 = vmatprep.subr.bf16.mxu0 0
      %1014 = vmatpush2.bf16.msra.mxu0 0
      %1015 = vmatprep.subr.bf16.mxu0 0
      %1016 = vmatpush2.bf16.msra.mxu0 0
      %1017 = vmatprep.subr.bf16.mxu0 0
      %1018 = vmatpush2.bf16.msra.mxu0 0
      %1019 = vmatprep.subr.bf16.mxu0 0
      %1020 = vmatpush2.bf16.msra.mxu0 0
      %1021 = vmatprep.subr.bf16.mxu0 0
      %1022 = vmatpush2.bf16.msra.mxu0 0
      %1023 = vmatprep.subr.bf16.mxu0 0
      %1024 = vmatpush2.bf16.msra.mxu0 0
      %1025 = vmatprep.subr.bf16.mxu0 0
      %1026 = vmatpush2.bf16.msra.mxu0 0
      %1027 = vmatprep.subr.bf16.mxu0 0
      %1028 = vmatpush2.bf16.msra.mxu0 0
      %1029 = vmatprep.mubr.bf16.mxu0 0
      %1030 = vmatmul.mubr.bf16.gmra.mxu0 %v995
      %v1031 = vpop.f32.mrf.mxu0
      %v1032 = vadd.f32 0.0, %v1031
      %v1033 = vpop.f32.mrf.mxu0
      %v1034 = vpop.f32.mrf.mxu0
      %v1035 = vpop.f32.mrf.mxu0
      %1036 = vdwg.mxu0
      %v1041 = vunpack.c.l.b16 %v858
      %v1042 = vunpack.c.l.b16 %v859
      %v1043 = vunpack.c.l.b16 %v860
      %v1044 = vunpack.c.l.b16 %v861
      %v1045 = vpack.c.b16 %v1042, %v1041
      %v1046 = vpack.c.b16 %v1044, %v1043
      %v1050 = vsel %vm742, %v857, 0
      %1052 = vmatprep.subr.bf16.mxu0 0
      %1053 = vmatpush1.bf16.msra.mxu0 0
      %1054 = vmatprep.subr.bf16.mxu0 0
      %1055 = vmatpush1.bf16.msra.mxu0 0
      %1056 = vmatprep.subr.bf16.mxu0 0
      %1057 = vmatpush1.bf16.msra.mxu0 0
      %1058 = vmatprep.subr.bf16.mxu0 0
      %1059 = vmatpush1.bf16.msra.mxu0 0
      %1060 = vmatprep.subr.bf16.mxu0 0
      %1061 = vmatpush1.bf16.msra.mxu0 0
      %1062 = vmatprep.subr.bf16.mxu0 0
      %1063 = vmatpush1.bf16.msra.mxu0 0
      %1064 = vmatprep.subr.bf16.mxu0 0
      %1065 = vmatpush1.bf16.msra.mxu0 %v1046
      %1066 = vmatprep.subr.bf16.mxu0 0
      %1067 = vmatpush1.bf16.msra.mxu0 %v1045
      %1068 = vmatprep.subr.bf16.mxu0 0
      %1069 = vmatpush2.bf16.msra.mxu0 0
      %1070 = vmatprep.subr.bf16.mxu0 0
      %1071 = vmatpush2.bf16.msra.mxu0 0
      %1072 = vmatprep.subr.bf16.mxu0 0
      %1073 = vmatpush2.bf16.msra.mxu0 0
      %1074 = vmatprep.subr.bf16.mxu0 0
      %1075 = vmatpush2.bf16.msra.mxu0 0
      %1076 = vmatprep.subr.bf16.mxu0 0
      %1077 = vmatpush2.bf16.msra.mxu0 0
      %1078 = vmatprep.subr.bf16.mxu0 0
      %1079 = vmatpush2.bf16.msra.mxu0 0
      %1080 = vmatprep.subr.bf16.mxu0 0
      %1081 = vmatpush2.bf16.msra.mxu0 0
      %1082 = vmatprep.subr.bf16.mxu0 0
      %1083 = vmatpush2.bf16.msra.mxu0 0
      %1084 = vmatprep.mubr.bf16.mxu0 0
      %1085 = vmatmul.mubr.bf16.gmra.mxu0 %v1050
      %v1086 = vpop.f32.mrf.mxu0
      %v1087 = vadd.f32 %v1032, %v1086
      %v1088 = vpop.f32.mrf.mxu0
      %v1089 = vpop.f32.mrf.mxu0
      %v1090 = vpop.f32.mrf.mxu0
      %1091 = vdwg.mxu0
      %1092 = vrot.lane.b32.xlu0 %v738, 64
      %v1093 = vpop.permute.xlu0 %1092
      %1094 = vrot.lane.b32.xlu0 %v739, 64
      %v1095 = vpop.permute.xlu0 %1094
      %v1097 = vsel %vm742, %v1093, 0
      %v1100 = vsel %vm742, %v1095, 0
      %1102 = vmatprep.subr.bf16.mxu0 0
      %1103 = vmatpush1.bf16.xpose.msra.mxu0 0
      %1104 = vmatprep.subr.bf16.mxu0 0
      %1105 = vmatpush1.bf16.xpose.msra.mxu0 0
      %1106 = vmatprep.subr.bf16.mxu0 0
      %1107 = vmatpush1.bf16.xpose.msra.mxu0 0
      %1108 = vmatprep.subr.bf16.mxu0 0
      %1109 = vmatpush1.bf16.xpose.msra.mxu0 0
      %1110 = vmatprep.subr.bf16.mxu0 0
      %1111 = vmatpush1.bf16.xpose.msra.mxu0 0
      %1112 = vmatprep.subr.bf16.mxu0 0
      %1113 = vmatpush1.bf16.xpose.msra.mxu0 0
      %1114 = vmatprep.subr.bf16.mxu0 0
      %1115 = vmatpush1.bf16.xpose.msra.mxu0 0
      %1116 = vmatprep.subr.bf16.mxu0 0
      %1117 = vmatpush1.bf16.xpose.msra.mxu0 %v1100
      %1118 = vmatprep.subr.bf16.mxu0 0
      %1119 = vmatpush2.bf16.xpose.msra.mxu0 0
      %1120 = vmatprep.subr.bf16.mxu0 0
      %1121 = vmatpush2.bf16.xpose.msra.mxu0 0
      %1122 = vmatprep.subr.bf16.mxu0 0
      %1123 = vmatpush2.bf16.xpose.msra.mxu0 0
      %1124 = vmatprep.subr.bf16.mxu0 0
      %1125 = vmatpush2.bf16.xpose.msra.mxu0 0
      %1126 = vmatprep.subr.bf16.mxu0 0
      %1127 = vmatpush2.bf16.xpose.msra.mxu0 0
      %1128 = vmatprep.subr.bf16.mxu0 0
      %1129 = vmatpush2.bf16.xpose.msra.mxu0 0
      %1130 = vmatprep.subr.bf16.mxu0 0
      %1131 = vmatpush2.bf16.xpose.msra.mxu0 0
      %1132 = vmatprep.subr.bf16.mxu0 0
      %1133 = vmatpush2.bf16.xpose.msra.mxu0 0
      %1134 = vmatprep.mubr.bf16.mxu0 0
      %1135 = vmatmul.mubr.bf16.gmra.mxu0 %v1097
      %v1136 = vpop.f32.mrf.mxu0
      %v1137 = vadd.f32 0.0, %v1136
      %v1138 = vpop.f32.mrf.mxu0
      %v1139 = vpop.f32.mrf.mxu0
      %v1140 = vpop.f32.mrf.mxu0
      %1141 = vdwg.mxu0
      %v1142 = vmul.f32 %v1137, 0.17677669
      %v1143 = vadd.f32 %v1142, %v794
      %v1144 = vsel %vm797, %v1143, -inf
      %1145 = vmax.xlane.f32.xlu0 %v1144
      %v1146 = vpop.xlane.xlu0 %1145
      %v1147 = vsub.f32 %v1143, %v1146
      %v1148 = vmul.f32 %v1147, 1.442695
      %v1149 = vpow.pop %v1148
      %v1150 = vsel %vm797, %v1149, 0.0
      %1151 = vadd.xlane.f32.xlu0 %v1150
      %v1152 = vpop.xlane.xlu0 %1151
      %v1153 = vrcp.pop %v1152
      %v1154 = vmul.f32 %v1149, %v1153
      %v1155 = vpack.c.bf16 %v1154, %v1154
      %1156 = vrot.lane.b32.xlu0 %v740, 64
      %v1157 = vpop.permute.xlu0 %1156
      %v1159 = vsel %vm797, %v1155, 0
      %v1162 = vsel %vm813, %v1157, 0
      %1164 = vmatprep.subr.bf16.mxu0 0
      %1165 = vmatpush1.bf16.msra.mxu0 0
      %1166 = vmatprep.subr.bf16.mxu0 0
      %1167 = vmatpush1.bf16.msra.mxu0 0
      %1168 = vmatprep.subr.bf16.mxu0 0
      %1169 = vmatpush1.bf16.msra.mxu0 0
      %1170 = vmatprep.subr.bf16.mxu0 0
      %1171 = vmatpush1.bf16.msra.mxu0 0
      %1172 = vmatprep.subr.bf16.mxu0 0
      %1173 = vmatpush1.bf16.msra.mxu0 0
      %1174 = vmatprep.subr.bf16.mxu0 0
      %1175 = vmatpush1.bf16.msra.mxu0 0
      %1176 = vmatprep.subr.bf16.mxu0 0
      %1177 = vmatpush1.bf16.msra.mxu0 0
      %1178 = vmatprep.subr.bf16.mxu0 0
      %1179 = vmatpush1.bf16.msra.mxu0 %v1162
      %1180 = vmatprep.subr.bf16.mxu0 0
      %1181 = vmatpush2.bf16.msra.mxu0 0
      %1182 = vmatprep.subr.bf16.mxu0 0
      %1183 = vmatpush2.bf16.msra.mxu0 0
      %1184 = vmatprep.subr.bf16.mxu0 0
      %1185 = vmatpush2.bf16.msra.mxu0 0
      %1186 = vmatprep.subr.bf16.mxu0 0
      %1187 = vmatpush2.bf16.msra.mxu0 0
      %1188 = vmatprep.subr.bf16.mxu0 0
      %1189 = vmatpush2.bf16.msra.mxu0 0
      %1190 = vmatprep.subr.bf16.mxu0 0
      %1191 = vmatpush2.bf16.msra.mxu0 0
      %1192 = vmatprep.subr.bf16.mxu0 0
      %1193 = vmatpush2.bf16.msra.mxu0 0
      %1194 = vmatprep.subr.bf16.mxu0 0
      %1195 = vmatpush2.bf16.msra.mxu0 0
      %1196 = vmatprep.mubr.bf16.mxu0 0
      %1197 = vmatmul.mubr.bf16.gmra.mxu0 %v1159
      %v1198 = vpop.f32.mrf.mxu0
      %v1199 = vadd.f32 0.0, %v1198
      %v1200 = vpop.f32.mrf.mxu0
      %v1201 = vpop.f32.mrf.mxu0
      %v1202 = vpop.f32.mrf.mxu0
      %1203 = vdwg.mxu0
      %v1204 = vpack.c.bf16 %v1199, %v1199
      %v1205 = vld [vmem:[%s4 + $0x20] sm:$0xf]
      %v1206 = vld [vmem:[%s4 + $0x24] sm:$0xf]
      %v1207 = vld [vmem:[%s4 + $0x28] sm:$0xf]
      %v1208 = vld [vmem:[%s4 + $0x2c] sm:$0xf]
      %v1213 = vunpack.c.l.b16 %v1205
      %v1214 = vunpack.c.l.b16 %v1206
      %v1215 = vunpack.c.l.b16 %v1207
      %v1216 = vunpack.c.l.b16 %v1208
      %v1217 = vpack.c.b16 %v1214, %v1213
      %v1218 = vpack.c.b16 %v1216, %v1215
      %v1222 = vsel %vm742, %v1204, 0
      %1224 = vmatprep.subr.bf16.mxu0 0
      %1225 = vmatpush1.bf16.msra.mxu0 0
      %1226 = vmatprep.subr.bf16.mxu0 0
      %1227 = vmatpush1.bf16.msra.mxu0 0
      %1228 = vmatprep.subr.bf16.mxu0 0
      %1229 = vmatpush1.bf16.msra.mxu0 0
      %1230 = vmatprep.subr.bf16.mxu0 0
      %1231 = vmatpush1.bf16.msra.mxu0 0
      %1232 = vmatprep.subr.bf16.mxu0 0
      %1233 = vmatpush1.bf16.msra.mxu0 0
      %1234 = vmatprep.subr.bf16.mxu0 0
      %1235 = vmatpush1.bf16.msra.mxu0 0
      %1236 = vmatprep.subr.bf16.mxu0 0
      %1237 = vmatpush1.bf16.msra.mxu0 %v1218
      %1238 = vmatprep.subr.bf16.mxu0 0
      %1239 = vmatpush1.bf16.msra.mxu0 %v1217
      %1240 = vmatprep.subr.bf16.mxu0 0
      %1241 = vmatpush2.bf16.msra.mxu0 0
      %1242 = vmatprep.subr.bf16.mxu0 0
      %1243 = vmatpush2.bf16.msra.mxu0 0
      %1244 = vmatprep.subr.bf16.mxu0 0
      %1245 = vmatpush2.bf16.msra.mxu0 0
      %1246 = vmatprep.subr.bf16.mxu0 0
      %1247 = vmatpush2.bf16.msra.mxu0 0
      %1248 = vmatprep.subr.bf16.mxu0 0
      %1249 = vmatpush2.bf16.msra.mxu0 0
      %1250 = vmatprep.subr.bf16.mxu0 0
      %1251 = vmatpush2.bf16.msra.mxu0 0
      %1252 = vmatprep.subr.bf16.mxu0 0
      %1253 = vmatpush2.bf16.msra.mxu0 0
      %1254 = vmatprep.subr.bf16.mxu0 0
      %1255 = vmatpush2.bf16.msra.mxu0 0
      %1256 = vmatprep.mubr.bf16.mxu0 0
      %1257 = vmatmul.mubr.bf16.gmra.mxu0 %v1222
      %v1258 = vpop.f32.mrf.mxu0
      %v1259 = vadd.f32 0.0, %v1258
      %v1260 = vpop.f32.mrf.mxu0
      %v1261 = vpop.f32.mrf.mxu0
      %v1262 = vpop.f32.mrf.mxu0
      %1263 = vdwg.mxu0
      %v1264 = vadd.f32 %v1087, %v1259
      %1265 = vrot.lane.b32.xlu0 %v738, 32
      %v1266 = vpop.permute.xlu0 %1265
      %1267 = vrot.lane.b32.xlu0 %v739, 32
      %v1268 = vpop.permute.xlu0 %1267
      %v1270 = vsel %vm742, %v1266, 0
      %v1273 = vsel %vm742, %v1268, 0
      %1275 = vmatprep.subr.bf16.mxu0 0
      %1276 = vmatpush1.bf16.xpose.msra.mxu0 0
      %1277 = vmatprep.subr.bf16.mxu0 0
      %1278 = vmatpush1.bf16.xpose.msra.mxu0 0
      %1279 = vmatprep.subr.bf16.mxu0 0
      %1280 = vmatpush1.bf16.xpose.msra.mxu0 0
      %1281 = vmatprep.subr.bf16.mxu0 0
      %1282 = vmatpush1.bf16.xpose.msra.mxu0 0
      %1283 = vmatprep.subr.bf16.mxu0 0
      %1284 = vmatpush1.bf16.xpose.msra.mxu0 0
      %1285 = vmatprep.subr.bf16.mxu0 0
      %1286 = vmatpush1.bf16.xpose.msra.mxu0 0
      %1287 = vmatprep.subr.bf16.mxu0 0
      %1288 = vmatpush1.bf16.xpose.msra.mxu0 0
      %1289 = vmatprep.subr.bf16.mxu0 0
      %1290 = vmatpush1.bf16.xpose.msra.mxu0 %v1273
      %1291 = vmatprep.subr.bf16.mxu0 0
      %1292 = vmatpush2.bf16.xpose.msra.mxu0 0
      %1293 = vmatprep.subr.bf16.mxu0 0
      %1294 = vmatpush2.bf16.xpose.msra.mxu0 0
      %1295 = vmatprep.subr.bf16.mxu0 0
      %1296 = vmatpush2.bf16.xpose.msra.mxu0 0
      %1297 = vmatprep.subr.bf16.mxu0 0
      %1298 = vmatpush2.bf16.xpose.msra.mxu0 0
      %1299 = vmatprep.subr.bf16.mxu0 0
      %1300 = vmatpush2.bf16.xpose.msra.mxu0 0
      %1301 = vmatprep.subr.bf16.mxu0 0
      %1302 = vmatpush2.bf16.xpose.msra.mxu0 0
      %1303 = vmatprep.subr.bf16.mxu0 0
      %1304 = vmatpush2.bf16.xpose.msra.mxu0 0
      %1305 = vmatprep.subr.bf16.mxu0 0
      %1306 = vmatpush2.bf16.xpose.msra.mxu0 0
      %1307 = vmatprep.mubr.bf16.mxu0 0
      %1308 = vmatmul.mubr.bf16.gmra.mxu0 %v1270
      %v1309 = vpop.f32.mrf.mxu0
      %v1310 = vadd.f32 0.0, %v1309
      %v1311 = vpop.f32.mrf.mxu0
      %v1312 = vpop.f32.mrf.mxu0
      %v1313 = vpop.f32.mrf.mxu0
      %1314 = vdwg.mxu0
      %v1315 = vmul.f32 %v1310, 0.17677669
      %v1316 = vadd.f32 %v1315, %v794
      %v1317 = vsel %vm797, %v1316, -inf
      %1318 = vmax.xlane.f32.xlu0 %v1317
      %v1319 = vpop.xlane.xlu0 %1318
      %v1320 = vsub.f32 %v1316, %v1319
      %v1321 = vmul.f32 %v1320, 1.442695
      %v1322 = vpow.pop %v1321
      %v1323 = vsel %vm797, %v1322, 0.0
      %1324 = vadd.xlane.f32.xlu0 %v1323
      %v1325 = vpop.xlane.xlu0 %1324
      %v1326 = vrcp.pop %v1325
      %v1327 = vmul.f32 %v1322, %v1326
      %v1328 = vpack.c.bf16 %v1327, %v1327
      %1329 = vrot.lane.b32.xlu0 %v740, 32
      %v1330 = vpop.permute.xlu0 %1329
      %v1332 = vsel %vm797, %v1328, 0
      %v1335 = vsel %vm813, %v1330, 0
      %1337 = vmatprep.subr.bf16.mxu0 0
      %1338 = vmatpush1.bf16.msra.mxu0 0
      %1339 = vmatprep.subr.bf16.mxu0 0
      %1340 = vmatpush1.bf16.msra.mxu0 0
      %1341 = vmatprep.subr.bf16.mxu0 0
      %1342 = vmatpush1.bf16.msra.mxu0 0
      %1343 = vmatprep.subr.bf16.mxu0 0
      %1344 = vmatpush1.bf16.msra.mxu0 0
      %1345 = vmatprep.subr.bf16.mxu0 0
      %1346 = vmatpush1.bf16.msra.mxu0 0
      %1347 = vmatprep.subr.bf16.mxu0 0
      %1348 = vmatpush1.bf16.msra.mxu0 0
      %1349 = vmatprep.subr.bf16.mxu0 0
      %1350 = vmatpush1.bf16.msra.mxu0 0
      %1351 = vmatprep.subr.bf16.mxu0 0
      %1352 = vmatpush1.bf16.msra.mxu0 %v1335
      %1353 = vmatprep.subr.bf16.mxu0 0
      %1354 = vmatpush2.bf16.msra.mxu0 0
      %1355 = vmatprep.subr.bf16.mxu0 0
      %1356 = vmatpush2.bf16.msra.mxu0 0
      %1357 = vmatprep.subr.bf16.mxu0 0
      %1358 = vmatpush2.bf16.msra.mxu0 0
      %1359 = vmatprep.subr.bf16.mxu0 0
      %1360 = vmatpush2.bf16.msra.mxu0 0
      %1361 = vmatprep.subr.bf16.mxu0 0
      %1362 = vmatpush2.bf16.msra.mxu0 0
      %1363 = vmatprep.subr.bf16.mxu0 0
      %1364 = vmatpush2.bf16.msra.mxu0 0
      %1365 = vmatprep.subr.bf16.mxu0 0
      %1366 = vmatpush2.bf16.msra.mxu0 0
      %1367 = vmatprep.subr.bf16.mxu0 0
      %1368 = vmatpush2.bf16.msra.mxu0 0
      %1369 = vmatprep.mubr.bf16.mxu0 0
      %1370 = vmatmul.mubr.bf16.gmra.mxu0 %v1332
      %v1371 = vpop.f32.mrf.mxu0
      %v1372 = vadd.f32 0.0, %v1371
      %v1373 = vpop.f32.mrf.mxu0
      %v1374 = vpop.f32.mrf.mxu0
      %v1375 = vpop.f32.mrf.mxu0
      %1376 = vdwg.mxu0
      %v1377 = vpack.c.bf16 %v1372, %v1372
      %v1378 = vld [vmem:[%s4 + $0x30] sm:$0xf]
      %v1379 = vld [vmem:[%s4 + $0x34] sm:$0xf]
      %v1380 = vld [vmem:[%s4 + $0x38] sm:$0xf]
      %v1381 = vld [vmem:[%s4 + $0x3c] sm:$0xf]
      %v1386 = vunpack.c.l.b16 %v1378
      %v1387 = vunpack.c.l.b16 %v1379
      %v1388 = vunpack.c.l.b16 %v1380
      %v1389 = vunpack.c.l.b16 %v1381
      %v1390 = vpack.c.b16 %v1387, %v1386
      %v1391 = vpack.c.b16 %v1389, %v1388
      %v1395 = vsel %vm742, %v1377, 0
      %1397 = vmatprep.subr.bf16.mxu0 0
      %1398 = vmatpush1.bf16.msra.mxu0 0
      %1399 = vmatprep.subr.bf16.mxu0 0
      %1400 = vmatpush1.bf16.msra.mxu0 0
      %1401 = vmatprep.subr.bf16.mxu0 0
      %1402 = vmatpush1.bf16.msra.mxu0 0
      %1403 = vmatprep.subr.bf16.mxu0 0
      %1404 = vmatpush1.bf16.msra.mxu0 0
      %1405 = vmatprep.subr.bf16.mxu0 0
      %1406 = vmatpush1.bf16.msra.mxu0 0
      %1407 = vmatprep.subr.bf16.mxu0 0
      %1408 = vmatpush1.bf16.msra.mxu0 0
      %1409 = vmatprep.subr.bf16.mxu0 0
      %1410 = vmatpush1.bf16.msra.mxu0 %v1391
      %1411 = vmatprep.subr.bf16.mxu0 0
      %1412 = vmatpush1.bf16.msra.mxu0 %v1390
      %1413 = vmatprep.subr.bf16.mxu0 0
      %1414 = vmatpush2.bf16.msra.mxu0 0
      %1415 = vmatprep.subr.bf16.mxu0 0
      %1416 = vmatpush2.bf16.msra.mxu0 0
      %1417 = vmatprep.subr.bf16.mxu0 0
      %1418 = vmatpush2.bf16.msra.mxu0 0
      %1419 = vmatprep.subr.bf16.mxu0 0
      %1420 = vmatpush2.bf16.msra.mxu0 0
      %1421 = vmatprep.subr.bf16.mxu0 0
      %1422 = vmatpush2.bf16.msra.mxu0 0
      %1423 = vmatprep.subr.bf16.mxu0 0
      %1424 = vmatpush2.bf16.msra.mxu0 0
      %1425 = vmatprep.subr.bf16.mxu0 0
      %1426 = vmatpush2.bf16.msra.mxu0 0
      %1427 = vmatprep.subr.bf16.mxu0 0
      %1428 = vmatpush2.bf16.msra.mxu0 0
      %1429 = vmatprep.mubr.bf16.mxu0 0
      %1430 = vmatmul.mubr.bf16.gmra.mxu0 %v1395
      %v1431 = vpop.f32.mrf.mxu0
      %v1432 = vadd.f32 0.0, %v1431
      %v1433 = vpop.f32.mrf.mxu0
      %v1434 = vpop.f32.mrf.mxu0
      %v1435 = vpop.f32.mrf.mxu0
      %1436 = vdwg.mxu0
      %v1437 = vadd.f32 %v1264, %v1432
      %v1438 = vld [vmem:[%s5] sm:$0x1]
      %v1440 = vlaneseq
      %v1441 = vshrl.u32 %v1440, 7
      %v1442 = vsub.s32 0, %v1441
      %v1443 = vrot.slane %v1438, %v1442
      %v1445 = vadd.f32 %v1437, %v1443
      %v1446 = vadd.f32 %v1445, %v478
      %v1447 = vld [vmem:[%s6] sm:$0x1]
      %v1448 = vld [vmem:[%s7] sm:$0x1]
      %1449 = vadd.xlane.f32.xlu0 %v1446
      %v1450 = vpop.xlane.xlu0 %1449
      %v1451 = vrcp.pop 128.0
      %v1452 = vmul.f32 %v1450, %v1451
      %v1453 = vsub.f32 %v1446, %v1452
      %v1454 = vmul.f32 %v1453, %v1453
      %1455 = vadd.xlane.f32.xlu0 %v1454
      %v1456 = vpop.xlane.xlu0 %1455
      %v1457 = vmul.f32 %v1456, %v1451
      %v1458 = vadd.f32 %v1457, 1e-12
      %v1459 = vrsqrt.pop %v1458
      %v1460 = vmul.f32 %v1453, %v1459
      %v1462 = vlaneseq
      %v1463 = vshrl.u32 %v1462, 7
      %v1464 = vsub.s32 0, %v1463
      %v1465 = vrot.slane %v1447, %v1464
      %v1467 = vmul.f32 %v1460, %v1465
      %v1469 = vlaneseq
      %v1470 = vshrl.u32 %v1469, 7
      %v1471 = vsub.s32 0, %v1470
      %v1472 = vrot.slane %v1448, %v1471
      %v1474 = vadd.f32 %v1467, %v1472
      %v1475 = vpack.c.bf16 %v1474, %v1474
      %v1476 = vld [vmem:[%s8] sm:$0xff]
      %v1477 = vld [vmem:[%s8 + $0x8] sm:$0xff]
      %v1478 = vld [vmem:[%s8 + $0x10] sm:$0xff]
      %v1479 = vld [vmem:[%s8 + $0x18] sm:$0xff]
      %v1480 = vld [vmem:[%s8 + $0x20] sm:$0xff]
      %v1481 = vld [vmem:[%s8 + $0x28] sm:$0xff]
      %v1482 = vld [vmem:[%s8 + $0x30] sm:$0xff]
      %v1483 = vld [vmem:[%s8 + $0x38] sm:$0xff]
      %v1484 = vld [vmem:[%s8 + $0x40] sm:$0xff]
      %v1485 = vld [vmem:[%s8 + $0x48] sm:$0xff]
      %v1486 = vld [vmem:[%s8 + $0x50] sm:$0xff]
      %v1487 = vld [vmem:[%s8 + $0x58] sm:$0xff]
      %v1488 = vld [vmem:[%s8 + $0x60] sm:$0xff]
      %v1489 = vld [vmem:[%s8 + $0x68] sm:$0xff]
      %v1490 = vld [vmem:[%s8 + $0x70] sm:$0xff]
      %v1491 = vld [vmem:[%s8 + $0x78] sm:$0xff]
      %v1492 = vld [vmem:[%s9] sm:$0x3]
      %v1494 = vlaneseq
      %v1495 = vshrl.u32 %v1494, 7
      %v1496 = vsub.s32 0, %v1495
      %v1497 = vrot.slane %v1492, %v1496
      %v1498 = vlaneseq
      %v1499 = vshrl.u32 %v1498, 7
      %v1500 = vsub.s32 1, %v1499
      %v1501 = vrot.slane %v1492, %v1500
      %v1520 = vunpack.c.l.b16 %v1476
      %v1521 = vunpack.c.h.b16 %v1476
      %v1522 = vunpack.c.l.b16 %v1477
      %v1523 = vunpack.c.h.b16 %v1477
      %v1524 = vunpack.c.l.b16 %v1478
      %v1525 = vunpack.c.h.b16 %v1478
      %v1526 = vunpack.c.l.b16 %v1479
      %v1527 = vunpack.c.h.b16 %v1479
      %v1528 = vunpack.c.l.b16 %v1480
      %v1529 = vunpack.c.h.b16 %v1480
      %v1530 = vunpack.c.l.b16 %v1481
      %v1531 = vunpack.c.h.b16 %v1481
      %v1532 = vunpack.c.l.b16 %v1482
      %v1533 = vunpack.c.h.b16 %v1482
      %v1534 = vunpack.c.l.b16 %v1483
      %v1535 = vunpack.c.h.b16 %v1483
      %v1536 = vunpack.c.l.b16 %v1484
      %v1537 = vunpack.c.h.b16 %v1484
      %v1538 = vunpack.c.l.b16 %v1485
      %v1539 = vunpack.c.h.b16 %v1485
      %v1540 = vunpack.c.l.b16 %v1486
      %v1541 = vunpack.c.h.b16 %v1486
      %v1542 = vunpack.c.l.b16 %v1487
      %v1543 = vunpack.c.h.b16 %v1487
      %v1544 = vunpack.c.l.b16 %v1488
      %v1545 = vunpack.c.h.b16 %v1488
      %v1546 = vunpack.c.l.b16 %v1489
      %v1547 = vunpack.c.h.b16 %v1489
      %v1548 = vunpack.c.l.b16 %v1490
      %v1549 = vunpack.c.h.b16 %v1490
      %v1550 = vunpack.c.l.b16 %v1491
      %v1551 = vunpack.c.h.b16 %v1491
      %v1552 = vpack.c.b16 %v1522, %v1520
      %v1553 = vpack.c.b16 %v1523, %v1521
      %v1554 = vpack.c.b16 %v1526, %v1524
      %v1555 = vpack.c.b16 %v1527, %v1525
      %v1556 = vpack.c.b16 %v1530, %v1528
      %v1557 = vpack.c.b16 %v1531, %v1529
      %v1558 = vpack.c.b16 %v1534, %v1532
      %v1559 = vpack.c.b16 %v1535, %v1533
      %v1560 = vpack.c.b16 %v1538, %v1536
      %v1561 = vpack.c.b16 %v1539, %v1537
      %v1562 = vpack.c.b16 %v1542, %v1540
      %v1563 = vpack.c.b16 %v1543, %v1541
      %v1564 = vpack.c.b16 %v1546, %v1544
      %v1565 = vpack.c.b16 %v1547, %v1545
      %v1566 = vpack.c.b16 %v1550, %v1548
      %v1567 = vpack.c.b16 %v1551, %v1549
      %1584 = vmatprep.subr.bf16.mxu0 %v1567
      %1585 = vmatpush1.bf16.msra.mxu0 %v1566
      %1586 = vmatprep.subr.bf16.mxu0 %v1565
      %1587 = vmatpush1.bf16.msra.mxu0 %v1564
      %1588 = vmatprep.subr.bf16.mxu0 %v1563
      %1589 = vmatpush1.bf16.msra.mxu0 %v1562
      %1590 = vmatprep.subr.bf16.mxu0 %v1561
      %1591 = vmatpush1.bf16.msra.mxu0 %v1560
      %1592 = vmatprep.subr.bf16.mxu0 %v1559
      %1593 = vmatpush1.bf16.msra.mxu0 %v1558
      %1594 = vmatprep.subr.bf16.mxu0 %v1557
      %1595 = vmatpush1.bf16.msra.mxu0 %v1556
      %1596 = vmatprep.subr.bf16.mxu0 %v1555
      %1597 = vmatpush1.bf16.msra.mxu0 %v1554
      %1598 = vmatprep.subr.bf16.mxu0 %v1553
      %1599 = vmatpush1.bf16.msra.mxu0 %v1552
      %1600 = vmatprep.subr.bf16.mxu0 0
      %1601 = vmatpush2.bf16.msra.mxu0 0
      %1602 = vmatprep.subr.bf16.mxu0 0
      %1603 = vmatpush2.bf16.msra.mxu0 0
      %1604 = vmatprep.subr.bf16.mxu0 0
      %1605 = vmatpush2.bf16.msra.mxu0 0
      %1606 = vmatprep.subr.bf16.mxu0 0
      %1607 = vmatpush2.bf16.msra.mxu0 0
      %1608 = vmatprep.subr.bf16.mxu0 0
      %1609 = vmatpush2.bf16.msra.mxu0 0
      %1610 = vmatprep.subr.bf16.mxu0 0
      %1611 = vmatpush2.bf16.msra.mxu0 0
      %1612 = vmatprep.subr.bf16.mxu0 0
      %1613 = vmatpush2.bf16.msra.mxu0 0
      %1614 = vmatprep.subr.bf16.mxu0 0
      %1615 = vmatpush2.bf16.msra.mxu0 0
      %1616 = vmatprep.mubr.bf16.mxu0 0
      %1617 = vmatmul.mubr.bf16.gmra.mxu0 %v1475
      %v1618 = vpop.f32.mrf.mxu0
      %v1619 = vadd.f32 %v1497, %v1618
      %v1620 = vpop.f32.mrf.mxu0
      %v1621 = vadd.f32 %v1501, %v1620
      %v1622 = vpop.f32.mrf.mxu0
      %v1623 = vpop.f32.mrf.mxu0
      %1624 = vdwg.mxu0
      %v1625 = vmul.f32 %v1619, %v1619
      %v1626 = vmul.f32 %v1621, %v1621
      %v1627 = vmul.f32 %v1619, %v1625
      %v1628 = vmul.f32 %v1621, %v1626
      %v1629 = vmul.f32 %v1627, 0.044715
      %v1630 = vmul.f32 %v1628, 0.044715
      %v1631 = vadd.f32 %v1619, %v1629
      %v1632 = vadd.f32 %v1621, %v1630
      %v1633 = vmul.f32 %v1631, 0.7978846
      %v1634 = vmul.f32 %v1632, 0.7978846
      %v1635 = vtanh.pop %v1633
      %v1636 = vtanh.pop %v1634
      %v1637 = vadd.f32 %v1635, 1.0
      %v1638 = vadd.f32 %v1636, 1.0
      %v1639 = vmul.f32 %v1637, 0.5
      %v1640 = vmul.f32 %v1638, 0.5
      %v1641 = vmul.f32 %v1619, %v1639
      %v1642 = vmul.f32 %v1621, %v1640
      %v1643 = vpack.c.bf16 %v1641, %v1641
      %v1644 = vpack.c.bf16 %v1642, %v1642
      %v1645 = vld [vmem:[%s10] sm:$0xf]
      %v1646 = vld [vmem:[%s10 + $0x4] sm:$0xf]
      %v1647 = vld [vmem:[%s10 + $0x8] sm:$0xf]
      %v1648 = vld [vmem:[%s10 + $0xc] sm:$0xf]
      %v1649 = vld [vmem:[%s10 + $0x10] sm:$0xf]
      %v1650 = vld [vmem:[%s10 + $0x14] sm:$0xf]
      %v1651 = vld [vmem:[%s10 + $0x18] sm:$0xf]
      %v1652 = vld [vmem:[%s10 + $0x1c] sm:$0xf]
      %v1653 = vld [vmem:[%s10 + $0x20] sm:$0xf]
      %v1654 = vld [vmem:[%s10 + $0x24] sm:$0xf]
      %v1655 = vld [vmem:[%s10 + $0x28] sm:$0xf]
      %v1656 = vld [vmem:[%s10 + $0x2c] sm:$0xf]
      %v1657 = vld [vmem:[%s10 + $0x30] sm:$0xf]
      %v1658 = vld [vmem:[%s10 + $0x34] sm:$0xf]
      %v1659 = vld [vmem:[%s10 + $0x38] sm:$0xf]
      %v1660 = vld [vmem:[%s10 + $0x3c] sm:$0xf]
      %v1661 = vld [vmem:[%s10 + $0x40] sm:$0xf]
      %v1662 = vld [vmem:[%s10 + $0x44] sm:$0xf]
      %v1663 = vld [vmem:[%s10 + $0x48] sm:$0xf]
      %v1664 = vld [vmem:[%s10 + $0x4c] sm:$0xf]
      %v1665 = vld [vmem:[%s10 + $0x50] sm:$0xf]
      %v1666 = vld [vmem:[%s10 + $0x54] sm:$0xf]
      %v1667 = vld [vmem:[%s10 + $0x58] sm:$0xf]
      %v1668 = vld [vmem:[%s10 + $0x5c] sm:$0xf]
      %v1669 = vld [vmem:[%s10 + $0x60] sm:$0xf]
      %v1670 = vld [vmem:[%s10 + $0x64] sm:$0xf]
      %v1671 = vld [vmem:[%s10 + $0x68] sm:$0xf]
      %v1672 = vld [vmem:[%s10 + $0x6c] sm:$0xf]
      %v1673 = vld [vmem:[%s10 + $0x70] sm:$0xf]
      %v1674 = vld [vmem:[%s10 + $0x74] sm:$0xf]
      %v1675 = vld [vmem:[%s10 + $0x78] sm:$0xf]
      %v1676 = vld [vmem:[%s10 + $0x7c] sm:$0xf]
      %v1677 = vld [vmem:[%s11] sm:$0x1]
      %v1679 = vlaneseq
      %v1680 = vshrl.u32 %v1679, 7
      %v1681 = vsub.s32 0, %v1680
      %v1682 = vrot.slane %v1677, %v1681
      %v1716 = vunpack.c.l.b16 %v1645
      %v1717 = vunpack.c.l.b16 %v1646
      %v1718 = vunpack.c.l.b16 %v1647
      %v1719 = vunpack.c.l.b16 %v1648
      %v1720 = vunpack.c.l.b16 %v1649
      %v1721 = vunpack.c.l.b16 %v1650
      %v1722 = vunpack.c.l.b16 %v1651
      %v1723 = vunpack.c.l.b16 %v1652
      %v1724 = vunpack.c.l.b16 %v1653
      %v1725 = vunpack.c.l.b16 %v1654
      %v1726 = vunpack.c.l.b16 %v1655
      %v1727 = vunpack.c.l.b16 %v1656
      %v1728 = vunpack.c.l.b16 %v1657
      %v1729 = vunpack.c.l.b16 %v1658
      %v1730 = vunpack.c.l.b16 %v1659
      %v1731 = vunpack.c.l.b16 %v1660
      %v1732 = vunpack.c.l.b16 %v1661
      %v1733 = vunpack.c.l.b16 %v1662
      %v1734 = vunpack.c.l.b16 %v1663
      %v1735 = vunpack.c.l.b16 %v1664
      %v1736 = vunpack.c.l.b16 %v1665
      %v1737 = vunpack.c.l.b16 %v1666
      %v1738 = vunpack.c.l.b16 %v1667
      %v1739 = vunpack.c.l.b16 %v1668
      %v1740 = vunpack.c.l.b16 %v1669
      %v1741 = vunpack.c.l.b16 %v1670
      %v1742 = vunpack.c.l.b16 %v1671
      %v1743 = vunpack.c.l.b16 %v1672
      %v1744 = vunpack.c.l.b16 %v1673
      %v1745 = vunpack.c.l.b16 %v1674
      %v1746 = vunpack.c.l.b16 %v1675
      %v1747 = vunpack.c.l.b16 %v1676
      %v1748 = vpack.c.b16 %v1717, %v1716
      %v1749 = vpack.c.b16 %v1719, %v1718
      %v1750 = vpack.c.b16 %v1721, %v1720
      %v1751 = vpack.c.b16 %v1723, %v1722
      %v1752 = vpack.c.b16 %v1725, %v1724
      %v1753 = vpack.c.b16 %v1727, %v1726
      %v1754 = vpack.c.b16 %v1729, %v1728
      %v1755 = vpack.c.b16 %v1731, %v1730
      %v1756 = vpack.c.b16 %v1733, %v1732
      %v1757 = vpack.c.b16 %v1735, %v1734
      %v1758 = vpack.c.b16 %v1737, %v1736
      %v1759 = vpack.c.b16 %v1739, %v1738
      %v1760 = vpack.c.b16 %v1741, %v1740
      %v1761 = vpack.c.b16 %v1743, %v1742
      %v1762 = vpack.c.b16 %v1745, %v1744
      %v1763 = vpack.c.b16 %v1747, %v1746
      %1780 = vmatprep.subr.bf16.mxu0 0
      %1781 = vmatpush1.bf16.msra.mxu0 %v1755
      %1782 = vmatprep.subr.bf16.mxu0 0
      %1783 = vmatpush1.bf16.msra.mxu0 %v1754
      %1784 = vmatprep.subr.bf16.mxu0 0
      %1785 = vmatpush1.bf16.msra.mxu0 %v1753
      %1786 = vmatprep.subr.bf16.mxu0 0
      %1787 = vmatpush1.bf16.msra.mxu0 %v1752
      %1788 = vmatprep.subr.bf16.mxu0 0
      %1789 = vmatpush1.bf16.msra.mxu0 %v1751
      %1790 = vmatprep.subr.bf16.mxu0 0
      %1791 = vmatpush1.bf16.msra.mxu0 %v1750
      %1792 = vmatprep.subr.bf16.mxu0 0
      %1793 = vmatpush1.bf16.msra.mxu0 %v1749
      %1794 = vmatprep.subr.bf16.mxu0 0
      %1795 = vmatpush1.bf16.msra.mxu0 %v1748
      %1796 = vmatprep.subr.bf16.mxu0 0
      %1797 = vmatpush2.bf16.msra.mxu0 %v1763
      %1798 = vmatprep.subr.bf16.mxu0 0
      %1799 = vmatpush2.bf16.msra.mxu0 %v1762
      %1800 = vmatprep.subr.bf16.mxu0 0
      %1801 = vmatpush2.bf16.msra.mxu0 %v1761
      %1802 = vmatprep.subr.bf16.mxu0 0
      %1803 = vmatpush2.bf16.msra.mxu0 %v1760
      %1804 = vmatprep.subr.bf16.mxu0 0
      %1805 = vmatpush2.bf16.msra.mxu0 %v1759
      %1806 = vmatprep.subr.bf16.mxu0 0
      %1807 = vmatpush2.bf16.msra.mxu0 %v1758
      %1808 = vmatprep.subr.bf16.mxu0 0
      %1809 = vmatpush2.bf16.msra.mxu0 %v1757
      %1810 = vmatprep.subr.bf16.mxu0 0
      %1811 = vmatpush2.bf16.msra.mxu0 %v1756
      %1812 = vmatprep.mubr.bf16.mxu0 %v1644
      %1813 = vmatmul.mubr.bf16.gmra.mxu0 %v1643
      %v1814 = vpop.f32.mrf.mxu0
      %v1815 = vadd.f32 %v1682, %v1814
      %v1816 = vpop.f32.mrf.mxu0
      %v1817 = vpop.f32.mrf.mxu0
      %v1818 = vpop.f32.mrf.mxu0
      %1819 = vdwg.mxu0
      %v1820 = vadd.f32 %v1815, %v1474
      %v1821 = vld [vmem:[%s12] sm:$0x1]
      %v1822 = vld [vmem:[%s13] sm:$0x1]
      %1823 = vadd.xlane.f32.xlu0 %v1820
      %v1824 = vpop.xlane.xlu0 %1823
      %v1825 = vmul.f32 %v1824, %v1451
      %v1826 = vsub.f32 %v1820, %v1825
      %v1827 = vmul.f32 %v1826, %v1826
      %1828 = vadd.xlane.f32.xlu0 %v1827
      %v1829 = vpop.xlane.xlu0 %1828
      %v1830 = vmul.f32 %v1829, %v1451
      %v1831 = vadd.f32 %v1830, 1e-12
      %v1832 = vrsqrt.pop %v1831
      %v1833 = vmul.f32 %v1826, %v1832
      %v1835 = vlaneseq
      %v1836 = vshrl.u32 %v1835, 7
      %v1837 = vsub.s32 0, %v1836
      %v1838 = vrot.slane %v1821, %v1837
      %v1840 = vmul.f32 %v1833, %v1838
      %v1842 = vlaneseq
      %v1843 = vshrl.u32 %v1842, 7
      %v1844 = vsub.s32 0, %v1843
      %v1845 = vrot.slane %v1822, %v1844
      %v1847 = vadd.f32 %v1840, %v1845
      %1848 = vst [vmem:[%s476] sm:$0xff] %v1847
      %p1849 = scmp.lt.s32.totalorder %s25, 1
      %s1850 = scalar_select %p1849, %s25, 1
      %s1851 = smul.addr %s1850, 8
      %s1852 = scalar_lea.vmem %s14, %s1851
      // Predicated region
      $region77: #{_lambda_.6} parent=75 // pred_check
        %p1853 = pneg %p347
      $region78: #{_lambda_.6} parent=75 // pred_check_branch
        %1855 = sbr.rel (%p1853) target = $region80
      $region79: #{_lambda_.6} parent=75 // pred_region
        _
      $region80: #{_lambda_.6} parent=75 // pred_fallthru
        _
    $region76: #{_lambda_.6} parent=5 // pred_fallthru
      _
    %p1856 = scmp.le.s32.totalorder 2, %s20
    // Predicated region
    $region81: #{_lambda_.6} parent=5 // pred_check
      %p1857 = pneg %p1856
    $region82: #{_lambda_.6} parent=5 // pred_check_branch
      %1859 = sbr.rel (%p1857) target = $region84
    $region83: #{_lambda_.6} parent=5 // pred_region
      %s1860 = ssub.s32 %s20, 2
      // Predicated region
      $region85: #{_lambda_.6} parent=83 // pred_check
        %p1861 = pneg %p353
      $region86: #{_lambda_.6} parent=83 // pred_check_branch
        %1863 = sbr.rel (%p1861) target = $region88
      $region87: #{_lambda_.6} parent=83 // pred_region
        %p1864 = scmp.lt.s32.totalorder %s26, 1
        %s1865 = scalar_select %p1864, %s26, 1
        %s1866 = smul.addr %s1865, 8
        %s1867 = scalar_lea.vmem %s14, %s1866
      $region88: #{_lambda_.6} parent=83 // pred_fallthru
        _
    $region84: #{_lambda_.6} parent=5 // pred_fallthru
      _
  $region6: #{_lambda_.6} parent=0 // loop_footer
    %s24 = sadd.s32 1, %s20
  $region7: #{_lambda_.6} parent=0 // loop_footer_branch
    %19 = sbr.rel target = $region3
  $region8: #{_lambda_.6} parent=0 // loop_exit
    _

// kernel: _lambda_.5
$region0: #{_lambda_.5}
  #allocation0 [shape = 'u32[]', space=smem, size = 0x4, offset = 0x4, fixed_abs, tag = 'smem constant byte address 0x4 - core index']
  #allocation1 [shape = 'u32[144,128]{1,0:T(1,128)}', space=vmem, size = 0x12000, scoped, tag = 'internal scratch']
  %s0 = inlined_call_operand.vmem [shape: f32[2,8,128], index: 0, kind: input, shape index: {}]
  %s1 = inlined_call_operand.vmem [shape: f32[2,1,8], index: 1, kind: input, shape index: {}]
  %s2 = inlined_call_operand.vmem [shape: bf16[128,384], index: 2, kind: input, shape index: {}]
  %s3 = inlined_call_operand.vmem [shape: f32[1,384], index: 3, kind: input, shape index: {}]
  %s4 = inlined_call_operand.vmem [shape: bf16[128,128], index: 4, kind: input, shape index: {}]
  %s5 = inlined_call_operand.vmem [shape: f32[1,128], index: 5, kind: input, shape index: {}, may-alias: {5,7,11,13}]
  %s6 = inlined_call_operand.vmem [shape: f32[1,128], index: 6, kind: input, shape index: {}, may-alias: {6,12}]
  %s7 = inlined_call_operand.vmem [shape: f32[1,128], index: 7, kind: input, shape index: {}, may-alias: {5,7,11,13}]
  %s8 = inlined_call_operand.hbm [shape: bf16[128,256], index: 8, kind: input, shape index: {}]
  %s9 = inlined_call_operand.vmem [shape: f32[1,256], index: 9, kind: input, shape index: {}]
  %s10 = inlined_call_operand.hbm [shape: bf16[256,128], index: 10, kind: input, shape index: {}]
  %s11 = inlined_call_operand.vmem [shape: f32[1,128], index: 11, kind: input, shape index: {}, may-alias: {5,7,11,13}]
  %s12 = inlined_call_operand.vmem [shape: f32[1,128], index: 12, kind: input, shape index: {}, may-alias: {6,12}]
  %s13 = inlined_call_operand.vmem [shape: f32[1,128], index: 13, kind: input, shape index: {}, may-alias: {5,7,11,13}]
  %s14 = inlined_call_operand.vmem [shape: f32[2,8,128], index: 14, kind: output, shape index: {}]
  %s15 = sld [smem:[#allocation0]]
  $region97: #{_lambda_.5} parent=0
    _
  %s17 = ssub.s32 1, %s15
  %s18 = scalar_select 0, %s17, %s15
  $region1: #{_lambda_.5} parent=0
    #allocation2 [shape = 'u8[65536]{0}', space=vmem, size = 0x10000, scoped, tag = 'input window, operand 8, single buffered']
    #allocation3 [shape = 's32[2]{0}', space=sflag, size = 0x8, scoped, tag = 'scoped memory for _lambda_.5']
    #allocation4 [shape = 'u8[65536]{0}', space=vmem, size = 0x10000, scoped, tag = 'input window, operand 10, single buffered']
    #allocation5 [shape = 's32[1]{0}', space=sflag, size = 0x4, scoped, tag = 'scoped memory for _lambda_.5']
    %19 = vsyncpa [#allocation3], 0
    %20 = vsyncpa [#allocation5], 0
    loop: start=0, step=1, limit=4
    $region2: #{_lambda_.5} parent=1 // loop_pre_header
      _
    $region3: #{_lambda_.5} parent=1 // loop_header
      %s22 = sphi 0, %s26
      %p23 = scmp.ge.s32.totalorder %s22, 4
      %s32 = sphi 0, %s34
      %s35 = sphi 0, %s32
      %s36 = sphi 0, %s35
      %s52 = sphi 0, %s36
      %s58 = sphi 0, %s60
      %s61 = sphi 0, %s58
      %s62 = sphi 0, %s61
      %s78 = sphi 0, %s62
      %s82 = sphi 0, %s82
      %s84 = sphi 0, %s82
      %s85 = sphi 0, %s84
      %s99 = sphi 0, %s85
      %s103 = sphi 0, %s103
      %s105 = sphi 0, %s103
      %s106 = sphi 0, %s105
      %s120 = sphi 0, %s106
      %s124 = sphi 0, %s124
      %s126 = sphi 0, %s124
      %s127 = sphi 0, %s126
      %s141 = sphi 0, %s127
      %s145 = sphi 0, %s145
      %s147 = sphi 0, %s145
      %s148 = sphi 0, %s147
      %s162 = sphi 0, %s148
      %s166 = sphi 0, %s166
      %s168 = sphi 0, %s166
      %s169 = sphi 0, %s168
      %s183 = sphi 0, %s169
      %s187 = sphi 0, %s187
      %s189 = sphi 0, %s187
      %s190 = sphi 0, %s189
      %s204 = sphi 0, %s190
      %s208 = sphi 0, %s208
      %s210 = sphi 0, %s208
      %s211 = sphi 0, %s210
      %s225 = sphi 0, %s211
      %s229 = sphi 0, %s229
      %s231 = sphi 0, %s229
      %s232 = sphi 0, %s231
      %s246 = sphi 0, %s232
      %s250 = sphi 0, %s250
      %s252 = sphi 0, %s250
      %s253 = sphi 0, %s252
      %s267 = sphi 0, %s253
      %s271 = sphi 0, %s271
      %s273 = sphi 0, %s271
      %s274 = sphi 0, %s273
      %s288 = sphi 0, %s274
      %s292 = sphi 0, %s292
      %s294 = sphi 0, %s292
      %s295 = sphi 0, %s294
      %s309 = sphi 0, %s295
      %s313 = sphi 0, %s313
      %s315 = sphi 0, %s313
      %s316 = sphi 0, %s315
      %s330 = sphi 0, %s316
      %s336 = sphi 0, %s338
      %s339 = sphi 0, %s336
      %s340 = sphi 0, %s339
      %s356 = sphi 0, %s340
    $region4: #{_lambda_.5} parent=1 // loop_header_branch
      %25 = sbr.rel (%p23) target = $region8
    $region5: #{_lambda_.5} parent=1 // loop_body
      %s27 = ssub.s32 %s22, 1
      %s28 = ssub.s32 %s22, 2
      %s29 = sadd.s32 %s22, 1
      %s30 = ssub.s32 %s22, %s29
      %p31 = scmp.eq.s32.totalorder %s30, 0
      %s33 = sadd.s32 %s32, 1
      %s34 = scalar_select %p31, %s32, %s33
      %p37 = pneg %p31
      %p38 = scmp.eq.s32.totalorder %s22, 1
      %p39 = por %p37, %p38
      %p40 = scmp.ne.s32.totalorder %s32, %s35
      %p41 = scmp.eq.s32.totalorder %s22, 0
      %p42 = por %p40, %p41
      %p43 = scmp.ne.s32.totalorder %s32, %s35
      %p44 = scmp.eq.s32.totalorder %s27, 1
      %p45 = por %p43, %p44
      %p46 = scmp.ne.s32.totalorder %s35, %s36
      %p47 = scmp.eq.s32.totalorder %s27, 0
      %p48 = por %p46, %p47
      %p49 = scmp.ne.s32.totalorder %s35, %s36
      %p50 = scmp.eq.s32.totalorder %s28, 1
      %p51 = por %p49, %p50
      %p53 = scmp.ne.s32.totalorder %s36, %s52
      %p54 = scmp.eq.s32.totalorder %s28, 0
      %p55 = por %p53, %p54
      %s56 = ssub.s32 %s22, %s29
      %p57 = scmp.eq.s32.totalorder %s56, 0
      %s59 = sadd.s32 %s58, 1
      %s60 = scalar_select %p57, %s58, %s59
      %p63 = pneg %p57
      %p64 = scmp.eq.s32.totalorder %s22, 1
      %p65 = por %p63, %p64
      %p66 = scmp.ne.s32.totalorder %s58, %s61
      %p67 = scmp.eq.s32.totalorder %s22, 0
      %p68 = por %p66, %p67
      %p69 = scmp.ne.s32.totalorder %s58, %s61
      %p70 = scmp.eq.s32.totalorder %s27, 1
      %p71 = por %p69, %p70
      %p72 = scmp.ne.s32.totalorder %s61, %s62
      %p73 = scmp.eq.s32.totalorder %s27, 0
      %p74 = por %p72, %p73
      %p75 = scmp.ne.s32.totalorder %s61, %s62
      %p76 = scmp.eq.s32.totalorder %s28, 1
      %p77 = por %p75, %p76
      %p79 = scmp.ne.s32.totalorder %s62, %s78
      %p80 = scmp.eq.s32.totalorder %s28, 0
      %p81 = por %p79, %p80
      %s83 = sadd.s32 %s82, 1
      %p86 = scmp.eq.s32.totalorder %s22, 1
      %p87 = scmp.ne.s32.totalorder %s82, %s84
      %p88 = scmp.eq.s32.totalorder %s22, 0
      %p89 = por %p87, %p88
      %p90 = scmp.ne.s32.totalorder %s82, %s84
      %p91 = scmp.eq.s32.totalorder %s27, 1
      %p92 = por %p90, %p91
      %p93 = scmp.ne.s32.totalorder %s84, %s85
      %p94 = scmp.eq.s32.totalorder %s27, 0
      %p95 = por %p93, %p94
      %p96 = scmp.ne.s32.totalorder %s84, %s85
      %p97 = scmp.eq.s32.totalorder %s28, 1
      %p98 = por %p96, %p97
      %p100 = scmp.ne.s32.totalorder %s85, %s99
      %p101 = scmp.eq.s32.totalorder %s28, 0
      %p102 = por %p100, %p101
      %s104 = sadd.s32 %s103, 1
      %p107 = scmp.eq.s32.totalorder %s22, 1
      %p108 = scmp.ne.s32.totalorder %s103, %s105
      %p109 = scmp.eq.s32.totalorder %s22, 0
      %p110 = por %p108, %p109
      %p111 = scmp.ne.s32.totalorder %s103, %s105
      %p112 = scmp.eq.s32.totalorder %s27, 1
      %p113 = por %p111, %p112
      %p114 = scmp.ne.s32.totalorder %s105, %s106
      %p115 = scmp.eq.s32.totalorder %s27, 0
      %p116 = por %p114, %p115
      %p117 = scmp.ne.s32.totalorder %s105, %s106
      %p118 = scmp.eq.s32.totalorder %s28, 1
      %p119 = por %p117, %p118
      %p121 = scmp.ne.s32.totalorder %s106, %s120
      %p122 = scmp.eq.s32.totalorder %s28, 0
      %p123 = por %p121, %p122
      %s125 = sadd.s32 %s124, 1
      %p128 = scmp.eq.s32.totalorder %s22, 1
      %p129 = scmp.ne.s32.totalorder %s124, %s126
      %p130 = scmp.eq.s32.totalorder %s22, 0
      %p131 = por %p129, %p130
      %p132 = scmp.ne.s32.totalorder %s124, %s126
      %p133 = scmp.eq.s32.totalorder %s27, 1
      %p134 = por %p132, %p133
      %p135 = scmp.ne.s32.totalorder %s126, %s127
      %p136 = scmp.eq.s32.totalorder %s27, 0
      %p137 = por %p135, %p136
      %p138 = scmp.ne.s32.totalorder %s126, %s127
      %p139 = scmp.eq.s32.totalorder %s28, 1
      %p140 = por %p138, %p139
      %p142 = scmp.ne.s32.totalorder %s127, %s141
      %p143 = scmp.eq.s32.totalorder %s28, 0
      %p144 = por %p142, %p143
      %s146 = sadd.s32 %s145, 1
      %p149 = scmp.eq.s32.totalorder %s22, 1
      %p150 = scmp.ne.s32.totalorder %s145, %s147
      %p151 = scmp.eq.s32.totalorder %s22, 0
      %p152 = por %p150, %p151
      %p153 = scmp.ne.s32.totalorder %s145, %s147
      %p154 = scmp.eq.s32.totalorder %s27, 1
      %p155 = por %p153, %p154
      %p156 = scmp.ne.s32.totalorder %s147, %s148
      %p157 = scmp.eq.s32.totalorder %s27, 0
      %p158 = por %p156, %p157
      %p159 = scmp.ne.s32.totalorder %s147, %s148
      %p160 = scmp.eq.s32.totalorder %s28, 1
      %p161 = por %p159, %p160
      %p163 = scmp.ne.s32.totalorder %s148, %s162
      %p164 = scmp.eq.s32.totalorder %s28, 0
      %p165 = por %p163, %p164
      %s167 = sadd.s32 %s166, 1
      %p170 = scmp.eq.s32.totalorder %s22, 1
      %p171 = scmp.ne.s32.totalorder %s166, %s168
      %p172 = scmp.eq.s32.totalorder %s22, 0
      %p173 = por %p171, %p172
      %p174 = scmp.ne.s32.totalorder %s166, %s168
      %p175 = scmp.eq.s32.totalorder %s27, 1
      %p176 = por %p174, %p175
      %p177 = scmp.ne.s32.totalorder %s168, %s169
      %p178 = scmp.eq.s32.totalorder %s27, 0
      %p179 = por %p177, %p178
      %p180 = scmp.ne.s32.totalorder %s168, %s169
      %p181 = scmp.eq.s32.totalorder %s28, 1
      %p182 = por %p180, %p181
      %p184 = scmp.ne.s32.totalorder %s169, %s183
      %p185 = scmp.eq.s32.totalorder %s28, 0
      %p186 = por %p184, %p185
      %s188 = sadd.s32 %s187, 1
      %p191 = scmp.eq.s32.totalorder %s22, 1
      %p192 = scmp.ne.s32.totalorder %s187, %s189
      %p193 = scmp.eq.s32.totalorder %s22, 0
      %p194 = por %p192, %p193
      %p195 = scmp.ne.s32.totalorder %s187, %s189
      %p196 = scmp.eq.s32.totalorder %s27, 1
      %p197 = por %p195, %p196
      %p198 = scmp.ne.s32.totalorder %s189, %s190
      %p199 = scmp.eq.s32.totalorder %s27, 0
      %p200 = por %p198, %p199
      %p201 = scmp.ne.s32.totalorder %s189, %s190
      %p202 = scmp.eq.s32.totalorder %s28, 1
      %p203 = por %p201, %p202
      %p205 = scmp.ne.s32.totalorder %s190, %s204
      %p206 = scmp.eq.s32.totalorder %s28, 0
      %p207 = por %p205, %p206
      %s209 = sadd.s32 %s208, 1
      %p212 = scmp.eq.s32.totalorder %s22, 1
      %p213 = scmp.ne.s32.totalorder %s208, %s210
      %p214 = scmp.eq.s32.totalorder %s22, 0
      %p215 = por %p213, %p214
      %p216 = scmp.ne.s32.totalorder %s208, %s210
      %p217 = scmp.eq.s32.totalorder %s27, 1
      %p218 = por %p216, %p217
      %p219 = scmp.ne.s32.totalorder %s210, %s211
      %p220 = scmp.eq.s32.totalorder %s27, 0
      %p221 = por %p219, %p220
      %p222 = scmp.ne.s32.totalorder %s210, %s211
      %p223 = scmp.eq.s32.totalorder %s28, 1
      %p224 = por %p222, %p223
      %p226 = scmp.ne.s32.totalorder %s211, %s225
      %p227 = scmp.eq.s32.totalorder %s28, 0
      %p228 = por %p226, %p227
      %s230 = sadd.s32 %s229, 1
      %p233 = scmp.eq.s32.totalorder %s22, 1
      %p234 = scmp.ne.s32.totalorder %s229, %s231
      %p235 = scmp.eq.s32.totalorder %s22, 0
      %p236 = por %p234, %p235
      %p237 = scmp.ne.s32.totalorder %s229, %s231
      %p238 = scmp.eq.s32.totalorder %s27, 1
      %p239 = por %p237, %p238
      %p240 = scmp.ne.s32.totalorder %s231, %s232
      %p241 = scmp.eq.s32.totalorder %s27, 0
      %p242 = por %p240, %p241
      %p243 = scmp.ne.s32.totalorder %s231, %s232
      %p244 = scmp.eq.s32.totalorder %s28, 1
      %p245 = por %p243, %p244
      %p247 = scmp.ne.s32.totalorder %s232, %s246
      %p248 = scmp.eq.s32.totalorder %s28, 0
      %p249 = por %p247, %p248
      %s251 = sadd.s32 %s250, 1
      %p254 = scmp.eq.s32.totalorder %s22, 1
      %p255 = scmp.ne.s32.totalorder %s250, %s252
      %p256 = scmp.eq.s32.totalorder %s22, 0
      %p257 = por %p255, %p256
      %p258 = scmp.ne.s32.totalorder %s250, %s252
      %p259 = scmp.eq.s32.totalorder %s27, 1
      %p260 = por %p258, %p259
      %p261 = scmp.ne.s32.totalorder %s252, %s253
      %p262 = scmp.eq.s32.totalorder %s27, 0
      %p263 = por %p261, %p262
      %p264 = scmp.ne.s32.totalorder %s252, %s253
      %p265 = scmp.eq.s32.totalorder %s28, 1
      %p266 = por %p264, %p265
      %p268 = scmp.ne.s32.totalorder %s253, %s267
      %p269 = scmp.eq.s32.totalorder %s28, 0
      %p270 = por %p268, %p269
      %s272 = sadd.s32 %s271, 1
      %p275 = scmp.eq.s32.totalorder %s22, 1
      %p276 = scmp.ne.s32.totalorder %s271, %s273
      %p277 = scmp.eq.s32.totalorder %s22, 0
      %p278 = por %p276, %p277
      %p279 = scmp.ne.s32.totalorder %s271, %s273
      %p280 = scmp.eq.s32.totalorder %s27, 1
      %p281 = por %p279, %p280
      %p282 = scmp.ne.s32.totalorder %s273, %s274
      %p283 = scmp.eq.s32.totalorder %s27, 0
      %p284 = por %p282, %p283
      %p285 = scmp.ne.s32.totalorder %s273, %s274
      %p286 = scmp.eq.s32.totalorder %s28, 1
      %p287 = por %p285, %p286
      %p289 = scmp.ne.s32.totalorder %s274, %s288
      %p290 = scmp.eq.s32.totalorder %s28, 0
      %p291 = por %p289, %p290
      %s293 = sadd.s32 %s292, 1
      %p296 = scmp.eq.s32.totalorder %s22, 1
      %p297 = scmp.ne.s32.totalorder %s292, %s294
      %p298 = scmp.eq.s32.totalorder %s22, 0
      %p299 = por %p297, %p298
      %p300 = scmp.ne.s32.totalorder %s292, %s294
      %p301 = scmp.eq.s32.totalorder %s27, 1
      %p302 = por %p300, %p301
      %p303 = scmp.ne.s32.totalorder %s294, %s295
      %p304 = scmp.eq.s32.totalorder %s27, 0
      %p305 = por %p303, %p304
      %p306 = scmp.ne.s32.totalorder %s294, %s295
      %p307 = scmp.eq.s32.totalorder %s28, 1
      %p308 = por %p306, %p307
      %p310 = scmp.ne.s32.totalorder %s295, %s309
      %p311 = scmp.eq.s32.totalorder %s28, 0
      %p312 = por %p310, %p311
      %s314 = sadd.s32 %s313, 1
      %p317 = scmp.eq.s32.totalorder %s22, 1
      %p318 = scmp.ne.s32.totalorder %s313, %s315
      %p319 = scmp.eq.s32.totalorder %s22, 0
      %p320 = por %p318, %p319
      %p321 = scmp.ne.s32.totalorder %s313, %s315
      %p322 = scmp.eq.s32.totalorder %s27, 1
      %p323 = por %p321, %p322
      %p324 = scmp.ne.s32.totalorder %s315, %s316
      %p325 = scmp.eq.s32.totalorder %s27, 0
      %p326 = por %p324, %p325
      %p327 = scmp.ne.s32.totalorder %s315, %s316
      %p328 = scmp.eq.s32.totalorder %s28, 1
      %p329 = por %p327, %p328
      %p331 = scmp.ne.s32.totalorder %s316, %s330
      %p332 = scmp.eq.s32.totalorder %s28, 0
      %p333 = por %p331, %p332
      %s334 = ssub.s32 %s22, %s29
      %p335 = scmp.eq.s32.totalorder %s334, 0
      %s337 = sadd.s32 %s336, 1
      %s338 = scalar_select %p335, %s336, %s337
      %p341 = pneg %p335
      %p342 = scmp.eq.s32.totalorder %s22, 1
      %p343 = por %p341, %p342
      %p344 = scmp.ne.s32.totalorder %s336, %s339
      %p345 = scmp.eq.s32.totalorder %s22, 0
      %p346 = por %p344, %p345
      %p347 = scmp.ne.s32.totalorder %s336, %s339
      %p348 = scmp.eq.s32.totalorder %s27, 1
      %p349 = por %p347, %p348
      %p350 = scmp.ne.s32.totalorder %s339, %s340
      %p351 = scmp.eq.s32.totalorder %s27, 0
      %p352 = por %p350, %p351
      %p353 = scmp.ne.s32.totalorder %s339, %s340
      %p354 = scmp.eq.s32.totalorder %s28, 1
      %p355 = por %p353, %p354
      %p357 = scmp.ne.s32.totalorder %s340, %s356
      %p358 = scmp.eq.s32.totalorder %s28, 0
      %p359 = por %p357, %p358
      %p360 = scmp.le.s32.totalorder 1, %s22
      %p361 = scmp.lt.s32.totalorder %s22, 3
      %p362 = pnand %p360, %p361
      %p363 = pneg %p362
      // Predicated region
      $region9: #{_lambda_.5} parent=5 // pred_check
        _
      $region10: #{_lambda_.5} parent=5 // pred_check_branch
        %365 = sbr.rel (%p362) target = $region12
      $region11: #{_lambda_.5} parent=5 // pred_region
        %s366 = ssub.s32 %s22, 1
        // Predicated region
        $region13: #{_lambda_.5} parent=11 // pred_check
          %p367 = pneg %p95
        $region14: #{_lambda_.5} parent=11 // pred_check_branch
          %369 = sbr.rel (%p367) target = $region16
        $region15: #{_lambda_.5} parent=11 // pred_region
          _
        $region16: #{_lambda_.5} parent=11 // pred_fallthru
          _
        // Predicated region
        $region17: #{_lambda_.5} parent=11 // pred_check
          %p370 = pneg %p116
        $region18: #{_lambda_.5} parent=11 // pred_check_branch
          %372 = sbr.rel (%p370) target = $region20
        $region19: #{_lambda_.5} parent=11 // pred_region
          _
        $region20: #{_lambda_.5} parent=11 // pred_fallthru
          _
        // Predicated region
        $region21: #{_lambda_.5} parent=11 // pred_check
          %p373 = pneg %p137
        $region22: #{_lambda_.5} parent=11 // pred_check_branch
          %375 = sbr.rel (%p373) target = $region24
        $region23: #{_lambda_.5} parent=11 // pred_region
          _
        $region24: #{_lambda_.5} parent=11 // pred_fallthru
          _
        // Predicated region
        $region25: #{_lambda_.5} parent=11 // pred_check
          %p376 = pneg %p158
        $region26: #{_lambda_.5} parent=11 // pred_check_branch
          %378 = sbr.rel (%p376) target = $region28
        $region27: #{_lambda_.5} parent=11 // pred_region
          _
        $region28: #{_lambda_.5} parent=11 // pred_fallthru
          _
        // Predicated region
        $region29: #{_lambda_.5} parent=11 // pred_check
          %p379 = pneg %p179
        $region30: #{_lambda_.5} parent=11 // pred_check_branch
          %381 = sbr.rel (%p379) target = $region32
        $region31: #{_lambda_.5} parent=11 // pred_region
          _
        $region32: #{_lambda_.5} parent=11 // pred_fallthru
          _
        // Predicated region
        $region33: #{_lambda_.5} parent=11 // pred_check
          %p382 = pneg %p200
        $region34: #{_lambda_.5} parent=11 // pred_check_branch
          %384 = sbr.rel (%p382) target = $region36
        $region35: #{_lambda_.5} parent=11 // pred_region
          _
        $region36: #{_lambda_.5} parent=11 // pred_fallthru
          _
        // Predicated region
        $region37: #{_lambda_.5} parent=11 // pred_check
          %p385 = pneg %p221
        $region38: #{_lambda_.5} parent=11 // pred_check_branch
          %387 = sbr.rel (%p385) target = $region40
        $region39: #{_lambda_.5} parent=11 // pred_region
          %s389 = ssub.s32 2048, 2048
          %390 = vsyncadd [#allocation3], %s389
          %s391 = sshll.u32 [#allocation2], 4
          %s392 = int_to_ptr.vmem [resolvable:$true] %s391
          %397 = dma.hbm_to_vmem [thread:$0]  %s8, 2048, %s392, [#allocation3], 128, 128, 8
        $region40: #{_lambda_.5} parent=11 // pred_fallthru
          _
        // Predicated region
        $region41: #{_lambda_.5} parent=11 // pred_check
          %p398 = pneg %p242
        $region42: #{_lambda_.5} parent=11 // pred_check_branch
          %400 = sbr.rel (%p398) target = $region44
        $region43: #{_lambda_.5} parent=11 // pred_region
          _
        $region44: #{_lambda_.5} parent=11 // pred_fallthru
          _
        // Predicated region
        $region45: #{_lambda_.5} parent=11 // pred_check
          %p401 = pneg %p263
        $region46: #{_lambda_.5} parent=11 // pred_check_branch
          %403 = sbr.rel (%p401) target = $region48
        $region47: #{_lambda_.5} parent=11 // pred_region
          %s405 = ssub.s32 2048, 2048
          %406 = vsyncadd [#allocation5], %s405
          %s407 = sshll.u32 [#allocation4], 4
          %s408 = int_to_ptr.vmem [resolvable:$true] %s407
          %413 = dma.hbm_to_vmem [thread:$0]  %s10, 2048, %s408, [#allocation5], 64, 64, 4
        $region48: #{_lambda_.5} parent=11 // pred_fallthru
          _
        // Predicated region
        $region49: #{_lambda_.5} parent=11 // pred_check
          %p414 = pneg %p284
        $region50: #{_lambda_.5} parent=11 // pred_check_branch
          %416 = sbr.rel (%p414) target = $region52
        $region51: #{_lambda_.5} parent=11 // pred_region
          _
        $region52: #{_lambda_.5} parent=11 // pred_fallthru
          _
        // Predicated region
        $region53: #{_lambda_.5} parent=11 // pred_check
          %p417 = pneg %p305
        $region54: #{_lambda_.5} parent=11 // pred_check_branch
          %419 = sbr.rel (%p417) target = $region56
        $region55: #{_lambda_.5} parent=11 // pred_region
          _
        $region56: #{_lambda_.5} parent=11 // pred_fallthru
          _
        // Predicated region
        $region57: #{_lambda_.5} parent=11 // pred_check
          %p420 = pneg %p326
        $region58: #{_lambda_.5} parent=11 // pred_check_branch
          %422 = sbr.rel (%p420) target = $region60
        $region59: #{_lambda_.5} parent=11 // pred_region
          _
        $region60: #{_lambda_.5} parent=11 // pred_fallthru
          _
      $region12: #{_lambda_.5} parent=5 // pred_fallthru
        _
      %p423 = scmp.lt.s32.totalorder %s22, 2
      // Predicated region
      $region61: #{_lambda_.5} parent=5 // pred_check
        %p424 = pneg %p423
      $region62: #{_lambda_.5} parent=5 // pred_check_branch
        %426 = sbr.rel (%p424) target = $region64
      $region63: #{_lambda_.5} parent=5 // pred_region
        // Predicated region
        $region65: #{_lambda_.5} parent=63 // pred_check
          %p427 = pneg %p42
        $region66: #{_lambda_.5} parent=63 // pred_check_branch
          %429 = sbr.rel (%p427) target = $region68
        $region67: #{_lambda_.5} parent=63 // pred_region
          %p430 = scmp.lt.s32.totalorder %s22, 1
          %s431 = scalar_select %p430, %s22, 1
          %s432 = smul.addr %s431, 8
          %s433 = scalar_lea.vmem %s0, %s432
        $region68: #{_lambda_.5} parent=63 // pred_fallthru
          _
        // Predicated region
        $region69: #{_lambda_.5} parent=63 // pred_check
          %p434 = pneg %p68
        $region70: #{_lambda_.5} parent=63 // pred_check_branch
          %436 = sbr.rel (%p434) target = $region72
        $region71: #{_lambda_.5} parent=63 // pred_region
          %p437 = scmp.lt.s32.totalorder %s22, 1
          %s438 = scalar_select %p437, %s22, 1
          %s439 = scalar_lea.vmem %s1, %s438
        $region72: #{_lambda_.5} parent=63 // pred_fallthru
          _
      $region64: #{_lambda_.5} parent=5 // pred_fallthru
        _
      %p440 = scmp.le.s32.totalorder 1, %s22
      %p441 = scmp.lt.s32.totalorder %s22, 3
      %p442 = pnand %p440, %p441
      %p443 = pneg %p442
      // Predicated region
      $region73: #{_lambda_.5} parent=5 // pred_check
        _
      $region74: #{_lambda_.5} parent=5 // pred_check_branch
        %445 = sbr.rel (%p442) target = $region76
      $region75: #{_lambda_.5} parent=5 // pred_region
        %s446 = ssub.s32 %s22, 1
        // Predicated region
        $region77: #{_lambda_.5} parent=75 // pred_check
          %p447 = pneg %p221
        $region78: #{_lambda_.5} parent=75 // pred_check_branch
          %449 = sbr.rel (%p447) target = $region80
        $region79: #{_lambda_.5} parent=75 // pred_region
          %450 = dma.done [#allocation3], 2048
        $region80: #{_lambda_.5} parent=75 // pred_fallthru
          _
        // Predicated region
        $region81: #{_lambda_.5} parent=75 // pred_check
          %p451 = pneg %p263
        $region82: #{_lambda_.5} parent=75 // pred_check_branch
          %453 = sbr.rel (%p451) target = $region84
        $region83: #{_lambda_.5} parent=75 // pred_region
          %454 = dma.done [#allocation5], 2048
        $region84: #{_lambda_.5} parent=75 // pred_fallthru
          _
        %p455 = scmp.lt.s32.totalorder %s27, 1
        %s456 = scalar_select %p455, %s27, 1
        %s457 = smul.addr %s456, 8
        %s458 = scalar_lea.vmem %s0, %s457
        %p459 = pneg %p48
        %p460 = pneg %p45
        %p461 = scmp.lt.s32.totalorder %s27, 1
        %s462 = scalar_select %p461, %s27, 1
        %s463 = scalar_lea.vmem %s1, %s462
        %p464 = pneg %p74
        %p465 = pneg %p71
        %p466 = pneg %p95
        %p467 = pneg %p92
        %p468 = pneg %p116
        %p469 = pneg %p113
        %p470 = pneg %p137
        %p471 = pneg %p134
        %p472 = pneg %p158
        %p473 = pneg %p155
        %p474 = pneg %p179
        %p475 = pneg %p176
        %p476 = pneg %p200
        %p477 = pneg %p197
        %p478 = pneg %p221
        %p479 = pneg %p218
        %p480 = pneg %p242
        %p481 = pneg %p239
        %p482 = pneg %p263
        %p483 = pneg %p260
        %p484 = pneg %p284
        %p485 = pneg %p281
        %p486 = pneg %p305
        %p487 = pneg %p302
        %p488 = pneg %p326
        %p489 = pneg %p323
        %p490 = pneg %p352
        %p491 = pneg %p349
        %p492 = scmp.lt.s32.totalorder %s27, 1
        %s493 = scalar_select %p492, %s27, 1
        %s494 = smul.addr %s493, 8
        %s495 = scalar_lea.vmem %s14, %s494
        %p496 = scmp.lt.s32.totalorder %s27, 1
        %s497 = scalar_select %p496, %s27, 1
        %s498 = smul.addr %s497, 8
        %s499 = scalar_lea.vmem %s0, %s498
        %p500 = scmp.lt.s32.totalorder %s27, 1
        %s501 = scalar_select %p500, %s27, 1
        %s502 = scalar_lea.vmem %s1, %s501
        %p503 = scmp.lt.s32.totalorder %s27, 1
        %s504 = scalar_select %p503, %s27, 1
        %s505 = smul.addr %s504, 8
        %s506 = scalar_lea.vmem %s14, %s505
        %v508 = vld [vmem:[%s499] sm:$0xff]
        %v509 = vpack.c.bf16 %v508, %v508
        %v510 = vld [vmem:[%s2] sm:$0xff]
        %v511 = vld [vmem:[%s2 + $0x8] sm:$0xf]
        %v512 = vld [vmem:[%s2 + $0xc] sm:$0xff]
        %v513 = vld [vmem:[%s2 + $0x14] sm:$0xf]
        %v514 = vld [vmem:[%s2 + $0x18] sm:$0xff]
        %v515 = vld [vmem:[%s2 + $0x20] sm:$0xf]
        %v516 = vld [vmem:[%s2 + $0x24] sm:$0xff]
        %v517 = vld [vmem:[%s2 + $0x2c] sm:$0xf]
        %v518 = vld [vmem:[%s2 + $0x30] sm:$0xff]
        %v519 = vld [vmem:[%s2 + $0x38] sm:$0xf]
        %v520 = vld [vmem:[%s2 + $0x3c] sm:$0xff]
        %v521 = vld [vmem:[%s2 + $0x44] sm:$0xf]
        %v522 = vld [vmem:[%s2 + $0x48] sm:$0xff]
        %v523 = vld [vmem:[%s2 + $0x50] sm:$0xf]
        %v524 = vld [vmem:[%s2 + $0x54] sm:$0xff]
        %v525 = vld [vmem:[%s2 + $0x5c] sm:$0xf]
        %v526 = vld [vmem:[%s2 + $0x60] sm:$0xff]
        %v527 = vld [vmem:[%s2 + $0x68] sm:$0xf]
        %v528 = vld [vmem:[%s2 + $0x6c] sm:$0xff]
        %v529 = vld [vmem:[%s2 + $0x74] sm:$0xf]
        %v530 = vld [vmem:[%s2 + $0x78] sm:$0xff]
        %v531 = vld [vmem:[%s2 + $0x80] sm:$0xf]
        %v532 = vld [vmem:[%s2 + $0x84] sm:$0xff]
        %v533 = vld [vmem:[%s2 + $0x8c] sm:$0xf]
        %v534 = vld [vmem:[%s2 + $0x90] sm:$0xff]
        %v535 = vld [vmem:[%s2 + $0x98] sm:$0xf]
        %v536 = vld [vmem:[%s2 + $0x9c] sm:$0xff]
        %v537 = vld [vmem:[%s2 + $0xa4] sm:$0xf]
        %v538 = vld [vmem:[%s2 + $0xa8] sm:$0xff]
        %v539 = vld [vmem:[%s2 + $0xb0] sm:$0xf]
        %v540 = vld [vmem:[%s2 + $0xb4] sm:$0xff]
        %v541 = vld [vmem:[%s2 + $0xbc] sm:$0xf]
        %v542 = vld [vmem:[%s3] sm:$0x7]
        %v544 = vlaneseq
        %v545 = vshrl.u32 %v544, 7
        %v546 = vsub.s32 0, %v545
        %v547 = vrot.slane %v542, %v546
        %v548 = vlaneseq
        %v549 = vshrl.u32 %v548, 7
        %v550 = vsub.s32 1, %v549
        %v551 = vrot.slane %v542, %v550
        %v552 = vlaneseq
        %v553 = vshrl.u32 %v552, 7
        %v554 = vsub.s32 2, %v553
        %v555 = vrot.slane %v542, %v554
        %v591 = vunpack.c.l.b16 %v510
        %v592 = vunpack.c.h.b16 %v510
        %v593 = vunpack.c.l.b16 %v511
        %v594 = vunpack.c.l.b16 %v512
        %v595 = vunpack.c.h.b16 %v512
        %v596 = vunpack.c.l.b16 %v513
        %v597 = vunpack.c.l.b16 %v514
        %v598 = vunpack.c.h.b16 %v514
        %v599 = vunpack.c.l.b16 %v515
        %v600 = vunpack.c.l.b16 %v516
        %v601 = vunpack.c.h.b16 %v516
        %v602 = vunpack.c.l.b16 %v517
        %v603 = vunpack.c.l.b16 %v518
        %v604 = vunpack.c.h.b16 %v518
        %v605 = vunpack.c.l.b16 %v519
        %v606 = vunpack.c.l.b16 %v520
        %v607 = vunpack.c.h.b16 %v520
        %v608 = vunpack.c.l.b16 %v521
        %v609 = vunpack.c.l.b16 %v522
        %v610 = vunpack.c.h.b16 %v522
        %v611 = vunpack.c.l.b16 %v523
        %v612 = vunpack.c.l.b16 %v524
        %v613 = vunpack.c.h.b16 %v524
        %v614 = vunpack.c.l.b16 %v525
        %v615 = vunpack.c.l.b16 %v526
        %v616 = vunpack.c.h.b16 %v526
        %v617 = vunpack.c.l.b16 %v527
        %v618 = vunpack.c.l.b16 %v528
        %v619 = vunpack.c.h.b16 %v528
        %v620 = vunpack.c.l.b16 %v529
        %v621 = vunpack.c.l.b16 %v530
        %v622 = vunpack.c.h.b16 %v530
        %v623 = vunpack.c.l.b16 %v531
        %v624 = vunpack.c.l.b16 %v532
        %v625 = vunpack.c.h.b16 %v532
        %v626 = vunpack.c.l.b16 %v533
        %v627 = vunpack.c.l.b16 %v534
        %v628 = vunpack.c.h.b16 %v534
        %v629 = vunpack.c.l.b16 %v535
        %v630 = vunpack.c.l.b16 %v536
        %v631 = vunpack.c.h.b16 %v536
        %v632 = vunpack.c.l.b16 %v537
        %v633 = vunpack.c.l.b16 %v538
        %v634 = vunpack.c.h.b16 %v538
        %v635 = vunpack.c.l.b16 %v539
        %v636 = vunpack.c.l.b16 %v540
        %v637 = vunpack.c.h.b16 %v540
        %v638 = vunpack.c.l.b16 %v541
        %v639 = vpack.c.b16 %v594, %v591
        %v640 = vpack.c.b16 %v595, %v592
        %v641 = vpack.c.b16 %v596, %v593
        %v642 = vpack.c.b16 %v600, %v597
        %v643 = vpack.c.b16 %v601, %v598
        %v644 = vpack.c.b16 %v602, %v599
        %v645 = vpack.c.b16 %v606, %v603
        %v646 = vpack.c.b16 %v607, %v604
        %v647 = vpack.c.b16 %v608, %v605
        %v648 = vpack.c.b16 %v612, %v609
        %v649 = vpack.c.b16 %v613, %v610
        %v650 = vpack.c.b16 %v614, %v611
        %v651 = vpack.c.b16 %v618, %v615
        %v652 = vpack.c.b16 %v619, %v616
        %v653 = vpack.c.b16 %v620, %v617
        %v654 = vpack.c.b16 %v624, %v621
        %v655 = vpack.c.b16 %v625, %v622
        %v656 = vpack.c.b16 %v626, %v623
        %v657 = vpack.c.b16 %v630, %v627
        %v658 = vpack.c.b16 %v631, %v628
        %v659 = vpack.c.b16 %v632, %v629
        %v660 = vpack.c.b16 %v636, %v633
        %v661 = vpack.c.b16 %v637, %v634
        %v662 = vpack.c.b16 %v638, %v635
        %687 = vmatprep.subr.bf16.mxu0 %v661
        %688 = vmatpush1.bf16.msra.mxu0 %v660
        %689 = vmatprep.subr.bf16.mxu0 %v658
        %690 = vmatpush1.bf16.msra.mxu0 %v657
        %691 = vmatprep.subr.bf16.mxu0 %v655
        %692 = vmatpush1.bf16.msra.mxu0 %v654
        %693 = vmatprep.subr.bf16.mxu0 %v652
        %694 = vmatpush1.bf16.msra.mxu0 %v651
        %695 = vmatprep.subr.bf16.mxu0 %v649
        %696 = vmatpush1.bf16.msra.mxu0 %v648
        %697 = vmatprep.subr.bf16.mxu0 %v646
        %698 = vmatpush1.bf16.msra.mxu0 %v645
        %699 = vmatprep.subr.bf16.mxu0 %v643
        %700 = vmatpush1.bf16.msra.mxu0 %v642
        %701 = vmatprep.subr.bf16.mxu0 %v640
        %702 = vmatpush1.bf16.msra.mxu0 %v639
        %703 = vmatprep.subr.bf16.mxu0 0
        %704 = vmatpush2.bf16.msra.mxu0 0
        %705 = vmatprep.subr.bf16.mxu0 0
        %706 = vmatpush2.bf16.msra.mxu0 0
        %707 = vmatprep.subr.bf16.mxu0 0
        %708 = vmatpush2.bf16.msra.mxu0 0
        %709 = vmatprep.subr.bf16.mxu0 0
        %710 = vmatpush2.bf16.msra.mxu0 0
        %711 = vmatprep.subr.bf16.mxu0 0
        %712 = vmatpush2.bf16.msra.mxu0 0
        %713 = vmatprep.subr.bf16.mxu0 0
        %714 = vmatpush2.bf16.msra.mxu0 0
        %715 = vmatprep.subr.bf16.mxu0 0
        %716 = vmatpush2.bf16.msra.mxu0 0
        %717 = vmatprep.subr.bf16.mxu0 0
        %718 = vmatpush2.bf16.msra.mxu0 0
        %719 = vmatprep.mubr.bf16.mxu0 0
        %720 = vmatmul.mubr.bf16.gmra.mxu0 %v509
        %v721 = vpop.f32.mrf.mxu0
        %v722 = vadd.f32 %v547, %v721
        %v723 = vpop.f32.mrf.mxu0
        %v724 = vadd.f32 %v551, %v723
        %v725 = vpop.f32.mrf.mxu0
        %v726 = vpop.f32.mrf.mxu0
        %727 = vdwg.mxu0
        %728 = vmatprep.subr.bf16.mxu0 0
        %729 = vmatpush1.bf16.msra.mxu0 %v662
        %730 = vmatprep.subr.bf16.mxu0 0
        %731 = vmatpush1.bf16.msra.mxu0 %v659
        %732 = vmatprep.subr.bf16.mxu0 0
        %733 = vmatpush1.bf16.msra.mxu0 %v656
        %734 = vmatprep.subr.bf16.mxu0 0
        %735 = vmatpush1.bf16.msra.mxu0 %v653
        %736 = vmatprep.subr.bf16.mxu0 0
        %737 = vmatpush1.bf16.msra.mxu0 %v650
        %738 = vmatprep.subr.bf16.mxu0 0
        %739 = vmatpush1.bf16.msra.mxu0 %v647
        %740 = vmatprep.subr.bf16.mxu0 0
        %741 = vmatpush1.bf16.msra.mxu0 %v644
        %742 = vmatprep.subr.bf16.mxu0 0
        %743 = vmatpush1.bf16.msra.mxu0 %v641
        %744 = vmatprep.subr.bf16.mxu0 0
        %745 = vmatpush2.bf16.msra.mxu0 0
        %746 = vmatprep.subr.bf16.mxu0 0
        %747 = vmatpush2.bf16.msra.mxu0 0
        %748 = vmatprep.subr.bf16.mxu0 0
        %749 = vmatpush2.bf16.msra.mxu0 0
        %750 = vmatprep.subr.bf16.mxu0 0
        %751 = vmatpush2.bf16.msra.mxu0 0
        %752 = vmatprep.subr.bf16.mxu0 0
        %753 = vmatpush2.bf16.msra.mxu0 0
        %754 = vmatprep.subr.bf16.mxu0 0
        %755 = vmatpush2.bf16.msra.mxu0 0
        %756 = vmatprep.subr.bf16.mxu0 0
        %757 = vmatpush2.bf16.msra.mxu0 0
        %758 = vmatprep.subr.bf16.mxu0 0
        %759 = vmatpush2.bf16.msra.mxu0 0
        %760 = vmatprep.mubr.bf16.mxu0 0
        %761 = vmatmul.mubr.bf16.gmra.mxu0 %v509
        %v762 = vpop.f32.mrf.mxu0
        %v763 = vadd.f32 %v555, %v762
        %v764 = vpop.f32.mrf.mxu0
        %v765 = vpop.f32.mrf.mxu0
        %v766 = vpop.f32.mrf.mxu0
        %767 = vdwg.mxu0
        %v768 = vpack.c.bf16 %v722, %v722
        %v769 = vpack.c.bf16 %v724, %v724
        %v770 = vpack.c.bf16 %v763, %v763
        %v771 = vld [vmem:[%s502] sm:$0x1]
        %vm772 = vcmask 261120
        %v774 = vsel %vm772, %v768, 0
        %v777 = vsel %vm772, %v769, 0
        %779 = vmatprep.subr.bf16.mxu0 0
        %780 = vmatpush1.bf16.xpose.msra.mxu0 0
        %781 = vmatprep.subr.bf16.mxu0 0
        %782 = vmatpush1.bf16.xpose.msra.mxu0 0
        %783 = vmatprep.subr.bf16.mxu0 0
        %784 = vmatpush1.bf16.xpose.msra.mxu0 0
        %785 = vmatprep.subr.bf16.mxu0 0
        %786 = vmatpush1.bf16.xpose.msra.mxu0 0
        %787 = vmatprep.subr.bf16.mxu0 0
        %788 = vmatpush1.bf16.xpose.msra.mxu0 0
        %789 = vmatprep.subr.bf16.mxu0 0
        %790 = vmatpush1.bf16.xpose.msra.mxu0 0
        %791 = vmatprep.subr.bf16.mxu0 0
        %792 = vmatpush1.bf16.xpose.msra.mxu0 0
        %793 = vmatprep.subr.bf16.mxu0 0
        %794 = vmatpush1.bf16.xpose.msra.mxu0 %v777
        %795 = vmatprep.subr.bf16.mxu0 0
        %796 = vmatpush2.bf16.xpose.msra.mxu0 0
        %797 = vmatprep.subr.bf16.mxu0 0
        %798 = vmatpush2.bf16.xpose.msra.mxu0 0
        %799 = vmatprep.subr.bf16.mxu0 0
        %800 = vmatpush2.bf16.xpose.msra.mxu0 0
        %801 = vmatprep.subr.bf16.mxu0 0
        %802 = vmatpush2.bf16.xpose.msra.mxu0 0
        %803 = vmatprep.subr.bf16.mxu0 0
        %804 = vmatpush2.bf16.xpose.msra.mxu0 0
        %805 = vmatprep.subr.bf16.mxu0 0
        %806 = vmatpush2.bf16.xpose.msra.mxu0 0
        %807 = vmatprep.subr.bf16.mxu0 0
        %808 = vmatpush2.bf16.xpose.msra.mxu0 0
        %809 = vmatprep.subr.bf16.mxu0 0
        %810 = vmatpush2.bf16.xpose.msra.mxu0 0
        %811 = vmatprep.mubr.bf16.mxu0 0
        %812 = vmatmul.mubr.bf16.gmra.mxu0 %v774
        %v813 = vpop.f32.mrf.mxu0
        %v814 = vadd.f32 0.0, %v813
        %v815 = vpop.f32.mrf.mxu0
        %v816 = vpop.f32.mrf.mxu0
        %v817 = vpop.f32.mrf.mxu0
        %818 = vdwg.mxu0
        %v819 = vmul.f32 %v814, 0.17677669
        %v821 = vlaneseq
        %v822 = vshrl.u32 %v821, 7
        %v823 = vsub.s32 0, %v822
        %v824 = vrot.slane %v771, %v823
        %v826 = vadd.f32 %v819, %v824
        %vm827 = vcmask 64512
        %v828 = vsel %vm827, %v826, -inf
        %829 = vmax.xlane.f32.xlu0 %v828
        %v830 = vpop.xlane.xlu0 %829
        %v831 = vsub.f32 %v826, %v830
        %v832 = vmul.f32 %v831, 1.442695
        %v833 = vpow.pop %v832
        %v834 = vsel %vm827, %v833, 0.0
        %835 = vadd.xlane.f32.xlu0 %v834
        %v836 = vpop.xlane.xlu0 %835
        %v837 = vrcp.pop %v836
        %v838 = vmul.f32 %v833, %v837
        %v839 = vpack.c.bf16 %v838, %v838
        %v841 = vsel %vm827, %v839, 0
        %vm843 = vcmask 1043456
        %v845 = vsel %vm843, %v770, 0
        %847 = vmatprep.subr.bf16.mxu0 0
        %848 = vmatpush1.bf16.msra.mxu0 0
        %849 = vmatprep.subr.bf16.mxu0 0
        %850 = vmatpush1.bf16.msra.mxu0 0
        %851 = vmatprep.subr.bf16.mxu0 0
        %852 = vmatpush1.bf16.msra.mxu0 0
        %853 = vmatprep.subr.bf16.mxu0 0
        %854 = vmatpush1.bf16.msra.mxu0 0
        %855 = vmatprep.subr.bf16.mxu0 0
        %856 = vmatpush1.bf16.msra.mxu0 0
        %857 = vmatprep.subr.bf16.mxu0 0
        %858 = vmatpush1.bf16.msra.mxu0 0
        %859 = vmatprep.subr.bf16.mxu0 0
        %860 = vmatpush1.bf16.msra.mxu0 0
        %861 = vmatprep.subr.bf16.mxu0 0
        %862 = vmatpush1.bf16.msra.mxu0 %v845
        %863 = vmatprep.subr.bf16.mxu0 0
        %864 = vmatpush2.bf16.msra.mxu0 0
        %865 = vmatprep.subr.bf16.mxu0 0
        %866 = vmatpush2.bf16.msra.mxu0 0
        %867 = vmatprep.subr.bf16.mxu0 0
        %868 = vmatpush2.bf16.msra.mxu0 0
        %869 = vmatprep.subr.bf16.mxu0 0
        %870 = vmatpush2.bf16.msra.mxu0 0
        %871 = vmatprep.subr.bf16.mxu0 0
        %872 = vmatpush2.bf16.msra.mxu0 0
        %873 = vmatprep.subr.bf16.mxu0 0
        %874 = vmatpush2.bf16.msra.mxu0 0
        %875 = vmatprep.subr.bf16.mxu0 0
        %876 = vmatpush2.bf16.msra.mxu0 0
        %877 = vmatprep.subr.bf16.mxu0 0
        %878 = vmatpush2.bf16.msra.mxu0 0
        %879 = vmatprep.mubr.bf16.mxu0 0
        %880 = vmatmul.mubr.bf16.gmra.mxu0 %v841
        %v881 = vpop.f32.mrf.mxu0
        %v882 = vadd.f32 0.0, %v881
        %v883 = vpop.f32.mrf.mxu0
        %v884 = vpop.f32.mrf.mxu0
        %v885 = vpop.f32.mrf.mxu0
        %886 = vdwg.mxu0
        %v887 = vpack.c.bf16 %v882, %v882
        %v888 = vld [vmem:[%s4] sm:$0xf]
        %v889 = vld [vmem:[%s4 + $0x4] sm:$0xf]
        %v890 = vld [vmem:[%s4 + $0x8] sm:$0xf]
        %v891 = vld [vmem:[%s4 + $0xc] sm:$0xf]
        %893 = vrot.lane.b32.xlu0 %v768, 96
        %v894 = vpop.permute.xlu0 %893
        %896 = vrot.lane.b32.xlu0 %v769, 96
        %v897 = vpop.permute.xlu0 %896
        %v899 = vsel %vm772, %v894, 0
        %v902 = vsel %vm772, %v897, 0
        %904 = vmatprep.subr.bf16.mxu0 0
        %905 = vmatpush1.bf16.xpose.msra.mxu0 0
        %906 = vmatprep.subr.bf16.mxu0 0
        %907 = vmatpush1.bf16.xpose.msra.mxu0 0
        %908 = vmatprep.subr.bf16.mxu0 0
        %909 = vmatpush1.bf16.xpose.msra.mxu0 0
        %910 = vmatprep.subr.bf16.mxu0 0
        %911 = vmatpush1.bf16.xpose.msra.mxu0 0
        %912 = vmatprep.subr.bf16.mxu0 0
        %913 = vmatpush1.bf16.xpose.msra.mxu0 0
        %914 = vmatprep.subr.bf16.mxu0 0
        %915 = vmatpush1.bf16.xpose.msra.mxu0 0
        %916 = vmatprep.subr.bf16.mxu0 0
        %917 = vmatpush1.bf16.xpose.msra.mxu0 0
        %918 = vmatprep.subr.bf16.mxu0 0
        %919 = vmatpush1.bf16.xpose.msra.mxu0 %v902
        %920 = vmatprep.subr.bf16.mxu0 0
        %921 = vmatpush2.bf16.xpose.msra.mxu0 0
        %922 = vmatprep.subr.bf16.mxu0 0
        %923 = vmatpush2.bf16.xpose.msra.mxu0 0
        %924 = vmatprep.subr.bf16.mxu0 0
        %925 = vmatpush2.bf16.xpose.msra.mxu0 0
        %926 = vmatprep.subr.bf16.mxu0 0
        %927 = vmatpush2.bf16.xpose.msra.mxu0 0
        %928 = vmatprep.subr.bf16.mxu0 0
        %929 = vmatpush2.bf16.xpose.msra.mxu0 0
        %930 = vmatprep.subr.bf16.mxu0 0
        %931 = vmatpush2.bf16.xpose.msra.mxu0 0
        %932 = vmatprep.subr.bf16.mxu0 0
        %933 = vmatpush2.bf16.xpose.msra.mxu0 0
        %934 = vmatprep.subr.bf16.mxu0 0
        %935 = vmatpush2.bf16.xpose.msra.mxu0 0
        %936 = vmatprep.mubr.bf16.mxu0 0
        %937 = vmatmul.mubr.bf16.gmra.mxu0 %v899
        %v938 = vpop.f32.mrf.mxu0
        %v939 = vadd.f32 0.0, %v938
        %v940 = vpop.f32.mrf.mxu0
        %v941 = vpop.f32.mrf.mxu0
        %v942 = vpop.f32.mrf.mxu0
        %943 = vdwg.mxu0
        %v944 = vmul.f32 %v939, 0.17677669
        %v945 = vadd.f32 %v944, %v824
        %v946 = vsel %vm827, %v945, -inf
        %947 = vmax.xlane.f32.xlu0 %v946
        %v948 = vpop.xlane.xlu0 %947
        %v949 = vsub.f32 %v945, %v948
        %v950 = vmul.f32 %v949, 1.442695
        %v951 = vpow.pop %v950
        %v952 = vsel %vm827, %v951, 0.0
        %953 = vadd.xlane.f32.xlu0 %v952
        %v954 = vpop.xlane.xlu0 %953
        %v955 = vrcp.pop %v954
        %v956 = vmul.f32 %v951, %v955
        %v957 = vpack.c.bf16 %v956, %v956
        %959 = vrot.lane.b32.xlu0 %v770, 96
        %v960 = vpop.permute.xlu0 %959
        %v962 = vsel %vm827, %v957, 0
        %v965 = vsel %vm843, %v960, 0
        %967 = vmatprep.subr.bf16.mxu0 0
        %968 = vmatpush1.bf16.msra.mxu0 0
        %969 = vmatprep.subr.bf16.mxu0 0
        %970 = vmatpush1.bf16.msra.mxu0 0
        %971 = vmatprep.subr.bf16.mxu0 0
        %972 = vmatpush1.bf16.msra.mxu0 0
        %973 = vmatprep.subr.bf16.mxu0 0
        %974 = vmatpush1.bf16.msra.mxu0 0
        %975 = vmatprep.subr.bf16.mxu0 0
        %976 = vmatpush1.bf16.msra.mxu0 0
        %977 = vmatprep.subr.bf16.mxu0 0
        %978 = vmatpush1.bf16.msra.mxu0 0
        %979 = vmatprep.subr.bf16.mxu0 0
        %980 = vmatpush1.bf16.msra.mxu0 0
        %981 = vmatprep.subr.bf16.mxu0 0
        %982 = vmatpush1.bf16.msra.mxu0 %v965
        %983 = vmatprep.subr.bf16.mxu0 0
        %984 = vmatpush2.bf16.msra.mxu0 0
        %985 = vmatprep.subr.bf16.mxu0 0
        %986 = vmatpush2.bf16.msra.mxu0 0
        %987 = vmatprep.subr.bf16.mxu0 0
        %988 = vmatpush2.bf16.msra.mxu0 0
        %989 = vmatprep.subr.bf16.mxu0 0
        %990 = vmatpush2.bf16.msra.mxu0 0
        %991 = vmatprep.subr.bf16.mxu0 0
        %992 = vmatpush2.bf16.msra.mxu0 0
        %993 = vmatprep.subr.bf16.mxu0 0
        %994 = vmatpush2.bf16.msra.mxu0 0
        %995 = vmatprep.subr.bf16.mxu0 0
        %996 = vmatpush2.bf16.msra.mxu0 0
        %997 = vmatprep.subr.bf16.mxu0 0
        %998 = vmatpush2.bf16.msra.mxu0 0
        %999 = vmatprep.mubr.bf16.mxu0 0
        %1000 = vmatmul.mubr.bf16.gmra.mxu0 %v962
        %v1001 = vpop.f32.mrf.mxu0
        %v1002 = vadd.f32 0.0, %v1001
        %v1003 = vpop.f32.mrf.mxu0
        %v1004 = vpop.f32.mrf.mxu0
        %v1005 = vpop.f32.mrf.mxu0
        %1006 = vdwg.mxu0
        %v1007 = vpack.c.bf16 %v1002, %v1002
        %v1008 = vld [vmem:[%s4 + $0x10] sm:$0xf]
        %v1009 = vld [vmem:[%s4 + $0x14] sm:$0xf]
        %v1010 = vld [vmem:[%s4 + $0x18] sm:$0xf]
        %v1011 = vld [vmem:[%s4 + $0x1c] sm:$0xf]
        %v1016 = vunpack.c.l.b16 %v1008
        %v1017 = vunpack.c.l.b16 %v1009
        %v1018 = vunpack.c.l.b16 %v1010
        %v1019 = vunpack.c.l.b16 %v1011
        %v1020 = vpack.c.b16 %v1017, %v1016
        %v1021 = vpack.c.b16 %v1019, %v1018
        %v1025 = vsel %vm772, %v1007, 0
        %1027 = vmatprep.subr.bf16.mxu0 0
        %1028 = vmatpush1.bf16.msra.mxu0 0
        %1029 = vmatprep.subr.bf16.mxu0 0
        %1030 = vmatpush1.bf16.msra.mxu0 0
        %1031 = vmatprep.subr.bf16.mxu0 0
        %1032 = vmatpush1.bf16.msra.mxu0 0
        %1033 = vmatprep.subr.bf16.mxu0 0
        %1034 = vmatpush1.bf16.msra.mxu0 0
        %1035 = vmatprep.subr.bf16.mxu0 0
        %1036 = vmatpush1.bf16.msra.mxu0 0
        %1037 = vmatprep.subr.bf16.mxu0 0
        %1038 = vmatpush1.bf16.msra.mxu0 0
        %1039 = vmatprep.subr.bf16.mxu0 0
        %1040 = vmatpush1.bf16.msra.mxu0 %v1021
        %1041 = vmatprep.subr.bf16.mxu0 0
        %1042 = vmatpush1.bf16.msra.mxu0 %v1020
        %1043 = vmatprep.subr.bf16.mxu0 0
        %1044 = vmatpush2.bf16.msra.mxu0 0
        %1045 = vmatprep.subr.bf16.mxu0 0
        %1046 = vmatpush2.bf16.msra.mxu0 0
        %1047 = vmatprep.subr.bf16.mxu0 0
        %1048 = vmatpush2.bf16.msra.mxu0 0
        %1049 = vmatprep.subr.bf16.mxu0 0
        %1050 = vmatpush2.bf16.msra.mxu0 0
        %1051 = vmatprep.subr.bf16.mxu0 0
        %1052 = vmatpush2.bf16.msra.mxu0 0
        %1053 = vmatprep.subr.bf16.mxu0 0
        %1054 = vmatpush2.bf16.msra.mxu0 0
        %1055 = vmatprep.subr.bf16.mxu0 0
        %1056 = vmatpush2.bf16.msra.mxu0 0
        %1057 = vmatprep.subr.bf16.mxu0 0
        %1058 = vmatpush2.bf16.msra.mxu0 0
        %1059 = vmatprep.mubr.bf16.mxu0 0
        %1060 = vmatmul.mubr.bf16.gmra.mxu0 %v1025
        %v1061 = vpop.f32.mrf.mxu0
        %v1062 = vadd.f32 0.0, %v1061
        %v1063 = vpop.f32.mrf.mxu0
        %v1064 = vpop.f32.mrf.mxu0
        %v1065 = vpop.f32.mrf.mxu0
        %1066 = vdwg.mxu0
        %v1071 = vunpack.c.l.b16 %v888
        %v1072 = vunpack.c.l.b16 %v889
        %v1073 = vunpack.c.l.b16 %v890
        %v1074 = vunpack.c.l.b16 %v891
        %v1075 = vpack.c.b16 %v1072, %v1071
        %v1076 = vpack.c.b16 %v1074, %v1073
        %v1080 = vsel %vm772, %v887, 0
        %1082 = vmatprep.subr.bf16.mxu0 0
        %1083 = vmatpush1.bf16.msra.mxu0 0
        %1084 = vmatprep.subr.bf16.mxu0 0
        %1085 = vmatpush1.bf16.msra.mxu0 0
        %1086 = vmatprep.subr.bf16.mxu0 0
        %1087 = vmatpush1.bf16.msra.mxu0 0
        %1088 = vmatprep.subr.bf16.mxu0 0
        %1089 = vmatpush1.bf16.msra.mxu0 0
        %1090 = vmatprep.subr.bf16.mxu0 0
        %1091 = vmatpush1.bf16.msra.mxu0 0
        %1092 = vmatprep.subr.bf16.mxu0 0
        %1093 = vmatpush1.bf16.msra.mxu0 0
        %1094 = vmatprep.subr.bf16.mxu0 0
        %1095 = vmatpush1.bf16.msra.mxu0 %v1076
        %1096 = vmatprep.subr.bf16.mxu0 0
        %1097 = vmatpush1.bf16.msra.mxu0 %v1075
        %1098 = vmatprep.subr.bf16.mxu0 0
        %1099 = vmatpush2.bf16.msra.mxu0 0
        %1100 = vmatprep.subr.bf16.mxu0 0
        %1101 = vmatpush2.bf16.msra.mxu0 0
        %1102 = vmatprep.subr.bf16.mxu0 0
        %1103 = vmatpush2.bf16.msra.mxu0 0
        %1104 = vmatprep.subr.bf16.mxu0 0
        %1105 = vmatpush2.bf16.msra.mxu0 0
        %1106 = vmatprep.subr.bf16.mxu0 0
        %1107 = vmatpush2.bf16.msra.mxu0 0
        %1108 = vmatprep.subr.bf16.mxu0 0
        %1109 = vmatpush2.bf16.msra.mxu0 0
        %1110 = vmatprep.subr.bf16.mxu0 0
        %1111 = vmatpush2.bf16.msra.mxu0 0
        %1112 = vmatprep.subr.bf16.mxu0 0
        %1113 = vmatpush2.bf16.msra.mxu0 0
        %1114 = vmatprep.mubr.bf16.mxu0 0
        %1115 = vmatmul.mubr.bf16.gmra.mxu0 %v1080
        %v1116 = vpop.f32.mrf.mxu0
        %v1117 = vadd.f32 %v1062, %v1116
        %v1118 = vpop.f32.mrf.mxu0
        %v1119 = vpop.f32.mrf.mxu0
        %v1120 = vpop.f32.mrf.mxu0
        %1121 = vdwg.mxu0
        %1122 = vrot.lane.b32.xlu0 %v768, 64
        %v1123 = vpop.permute.xlu0 %1122
        %1124 = vrot.lane.b32.xlu0 %v769, 64
        %v1125 = vpop.permute.xlu0 %1124
        %v1127 = vsel %vm772, %v1123, 0
        %v1130 = vsel %vm772, %v1125, 0
        %1132 = vmatprep.subr.bf16.mxu0 0
        %1133 = vmatpush1.bf16.xpose.msra.mxu0 0
        %1134 = vmatprep.subr.bf16.mxu0 0
        %1135 = vmatpush1.bf16.xpose.msra.mxu0 0
        %1136 = vmatprep.subr.bf16.mxu0 0
        %1137 = vmatpush1.bf16.xpose.msra.mxu0 0
        %1138 = vmatprep.subr.bf16.mxu0 0
        %1139 = vmatpush1.bf16.xpose.msra.mxu0 0
        %1140 = vmatprep.subr.bf16.mxu0 0
        %1141 = vmatpush1.bf16.xpose.msra.mxu0 0
        %1142 = vmatprep.subr.bf16.mxu0 0
        %1143 = vmatpush1.bf16.xpose.msra.mxu0 0
        %1144 = vmatprep.subr.bf16.mxu0 0
        %1145 = vmatpush1.bf16.xpose.msra.mxu0 0
        %1146 = vmatprep.subr.bf16.mxu0 0
        %1147 = vmatpush1.bf16.xpose.msra.mxu0 %v1130
        %1148 = vmatprep.subr.bf16.mxu0 0
        %1149 = vmatpush2.bf16.xpose.msra.mxu0 0
        %1150 = vmatprep.subr.bf16.mxu0 0
        %1151 = vmatpush2.bf16.xpose.msra.mxu0 0
        %1152 = vmatprep.subr.bf16.mxu0 0
        %1153 = vmatpush2.bf16.xpose.msra.mxu0 0
        %1154 = vmatprep.subr.bf16.mxu0 0
        %1155 = vmatpush2.bf16.xpose.msra.mxu0 0
        %1156 = vmatprep.subr.bf16.mxu0 0
        %1157 = vmatpush2.bf16.xpose.msra.mxu0 0
        %1158 = vmatprep.subr.bf16.mxu0 0
        %1159 = vmatpush2.bf16.xpose.msra.mxu0 0
        %1160 = vmatprep.subr.bf16.mxu0 0
        %1161 = vmatpush2.bf16.xpose.msra.mxu0 0
        %1162 = vmatprep.subr.bf16.mxu0 0
        %1163 = vmatpush2.bf16.xpose.msra.mxu0 0
        %1164 = vmatprep.mubr.bf16.mxu0 0
        %1165 = vmatmul.mubr.bf16.gmra.mxu0 %v1127
        %v1166 = vpop.f32.mrf.mxu0
        %v1167 = vadd.f32 0.0, %v1166
        %v1168 = vpop.f32.mrf.mxu0
        %v1169 = vpop.f32.mrf.mxu0
        %v1170 = vpop.f32.mrf.mxu0
        %1171 = vdwg.mxu0
        %v1172 = vmul.f32 %v1167, 0.17677669
        %v1173 = vadd.f32 %v1172, %v824
        %v1174 = vsel %vm827, %v1173, -inf
        %1175 = vmax.xlane.f32.xlu0 %v1174
        %v1176 = vpop.xlane.xlu0 %1175
        %v1177 = vsub.f32 %v1173, %v1176
        %v1178 = vmul.f32 %v1177, 1.442695
        %v1179 = vpow.pop %v1178
        %v1180 = vsel %vm827, %v1179, 0.0
        %1181 = vadd.xlane.f32.xlu0 %v1180
        %v1182 = vpop.xlane.xlu0 %1181
        %v1183 = vrcp.pop %v1182
        %v1184 = vmul.f32 %v1179, %v1183
        %v1185 = vpack.c.bf16 %v1184, %v1184
        %1186 = vrot.lane.b32.xlu0 %v770, 64
        %v1187 = vpop.permute.xlu0 %1186
        %v1189 = vsel %vm827, %v1185, 0
        %v1192 = vsel %vm843, %v1187, 0
        %1194 = vmatprep.subr.bf16.mxu0 0
        %1195 = vmatpush1.bf16.msra.mxu0 0
        %1196 = vmatprep.subr.bf16.mxu0 0
        %1197 = vmatpush1.bf16.msra.mxu0 0
        %1198 = vmatprep.subr.bf16.mxu0 0
        %1199 = vmatpush1.bf16.msra.mxu0 0
        %1200 = vmatprep.subr.bf16.mxu0 0
        %1201 = vmatpush1.bf16.msra.mxu0 0
        %1202 = vmatprep.subr.bf16.mxu0 0
        %1203 = vmatpush1.bf16.msra.mxu0 0
        %1204 = vmatprep.subr.bf16.mxu0 0
        %1205 = vmatpush1.bf16.msra.mxu0 0
        %1206 = vmatprep.subr.bf16.mxu0 0
        %1207 = vmatpush1.bf16.msra.mxu0 0
        %1208 = vmatprep.subr.bf16.mxu0 0
        %1209 = vmatpush1.bf16.msra.mxu0 %v1192
        %1210 = vmatprep.subr.bf16.mxu0 0
        %1211 = vmatpush2.bf16.msra.mxu0 0
        %1212 = vmatprep.subr.bf16.mxu0 0
        %1213 = vmatpush2.bf16.msra.mxu0 0
        %1214 = vmatprep.subr.bf16.mxu0 0
        %1215 = vmatpush2.bf16.msra.mxu0 0
        %1216 = vmatprep.subr.bf16.mxu0 0
        %1217 = vmatpush2.bf16.msra.mxu0 0
        %1218 = vmatprep.subr.bf16.mxu0 0
        %1219 = vmatpush2.bf16.msra.mxu0 0
        %1220 = vmatprep.subr.bf16.mxu0 0
        %1221 = vmatpush2.bf16.msra.mxu0 0
        %1222 = vmatprep.subr.bf16.mxu0 0
        %1223 = vmatpush2.bf16.msra.mxu0 0
        %1224 = vmatprep.subr.bf16.mxu0 0
        %1225 = vmatpush2.bf16.msra.mxu0 0
        %1226 = vmatprep.mubr.bf16.mxu0 0
        %1227 = vmatmul.mubr.bf16.gmra.mxu0 %v1189
        %v1228 = vpop.f32.mrf.mxu0
        %v1229 = vadd.f32 0.0, %v1228
        %v1230 = vpop.f32.mrf.mxu0
        %v1231 = vpop.f32.mrf.mxu0
        %v1232 = vpop.f32.mrf.mxu0
        %1233 = vdwg.mxu0
        %v1234 = vpack.c.bf16 %v1229, %v1229
        %v1235 = vld [vmem:[%s4 + $0x20] sm:$0xf]
        %v1236 = vld [vmem:[%s4 + $0x24] sm:$0xf]
        %v1237 = vld [vmem:[%s4 + $0x28] sm:$0xf]
        %v1238 = vld [vmem:[%s4 + $0x2c] sm:$0xf]
        %v1243 = vunpack.c.l.b16 %v1235
        %v1244 = vunpack.c.l.b16 %v1236
        %v1245 = vunpack.c.l.b16 %v1237
        %v1246 = vunpack.c.l.b16 %v1238
        %v1247 = vpack.c.b16 %v1244, %v1243
        %v1248 = vpack.c.b16 %v1246, %v1245
        %v1252 = vsel %vm772, %v1234, 0
        %1254 = vmatprep.subr.bf16.mxu0 0
        %1255 = vmatpush1.bf16.msra.mxu0 0
        %1256 = vmatprep.subr.bf16.mxu0 0
        %1257 = vmatpush1.bf16.msra.mxu0 0
        %1258 = vmatprep.subr.bf16.mxu0 0
        %1259 = vmatpush1.bf16.msra.mxu0 0
        %1260 = vmatprep.subr.bf16.mxu0 0
        %1261 = vmatpush1.bf16.msra.mxu0 0
        %1262 = vmatprep.subr.bf16.mxu0 0
        %1263 = vmatpush1.bf16.msra.mxu0 0
        %1264 = vmatprep.subr.bf16.mxu0 0
        %1265 = vmatpush1.bf16.msra.mxu0 0
        %1266 = vmatprep.subr.bf16.mxu0 0
        %1267 = vmatpush1.bf16.msra.mxu0 %v1248
        %1268 = vmatprep.subr.bf16.mxu0 0
        %1269 = vmatpush1.bf16.msra.mxu0 %v1247
        %1270 = vmatprep.subr.bf16.mxu0 0
        %1271 = vmatpush2.bf16.msra.mxu0 0
        %1272 = vmatprep.subr.bf16.mxu0 0
        %1273 = vmatpush2.bf16.msra.mxu0 0
        %1274 = vmatprep.subr.bf16.mxu0 0
        %1275 = vmatpush2.bf16.msra.mxu0 0
        %1276 = vmatprep.subr.bf16.mxu0 0
        %1277 = vmatpush2.bf16.msra.mxu0 0
        %1278 = vmatprep.subr.bf16.mxu0 0
        %1279 = vmatpush2.bf16.msra.mxu0 0
        %1280 = vmatprep.subr.bf16.mxu0 0
        %1281 = vmatpush2.bf16.msra.mxu0 0
        %1282 = vmatprep.subr.bf16.mxu0 0
        %1283 = vmatpush2.bf16.msra.mxu0 0
        %1284 = vmatprep.subr.bf16.mxu0 0
        %1285 = vmatpush2.bf16.msra.mxu0 0
        %1286 = vmatprep.mubr.bf16.mxu0 0
        %1287 = vmatmul.mubr.bf16.gmra.mxu0 %v1252
        %v1288 = vpop.f32.mrf.mxu0
        %v1289 = vadd.f32 0.0, %v1288
        %v1290 = vpop.f32.mrf.mxu0
        %v1291 = vpop.f32.mrf.mxu0
        %v1292 = vpop.f32.mrf.mxu0
        %1293 = vdwg.mxu0
        %v1294 = vadd.f32 %v1117, %v1289
        %1295 = vrot.lane.b32.xlu0 %v768, 32
        %v1296 = vpop.permute.xlu0 %1295
        %1297 = vrot.lane.b32.xlu0 %v769, 32
        %v1298 = vpop.permute.xlu0 %1297
        %v1300 = vsel %vm772, %v1296, 0
        %v1303 = vsel %vm772, %v1298, 0
        %1305 = vmatprep.subr.bf16.mxu0 0
        %1306 = vmatpush1.bf16.xpose.msra.mxu0 0
        %1307 = vmatprep.subr.bf16.mxu0 0
        %1308 = vmatpush1.bf16.xpose.msra.mxu0 0
        %1309 = vmatprep.subr.bf16.mxu0 0
        %1310 = vmatpush1.bf16.xpose.msra.mxu0 0
        %1311 = vmatprep.subr.bf16.mxu0 0
        %1312 = vmatpush1.bf16.xpose.msra.mxu0 0
        %1313 = vmatprep.subr.bf16.mxu0 0
        %1314 = vmatpush1.bf16.xpose.msra.mxu0 0
        %1315 = vmatprep.subr.bf16.mxu0 0
        %1316 = vmatpush1.bf16.xpose.msra.mxu0 0
        %1317 = vmatprep.subr.bf16.mxu0 0
        %1318 = vmatpush1.bf16.xpose.msra.mxu0 0
        %1319 = vmatprep.subr.bf16.mxu0 0
        %1320 = vmatpush1.bf16.xpose.msra.mxu0 %v1303
        %1321 = vmatprep.subr.bf16.mxu0 0
        %1322 = vmatpush2.bf16.xpose.msra.mxu0 0
        %1323 = vmatprep.subr.bf16.mxu0 0
        %1324 = vmatpush2.bf16.xpose.msra.mxu0 0
        %1325 = vmatprep.subr.bf16.mxu0 0
        %1326 = vmatpush2.bf16.xpose.msra.mxu0 0
        %1327 = vmatprep.subr.bf16.mxu0 0
        %1328 = vmatpush2.bf16.xpose.msra.mxu0 0
        %1329 = vmatprep.subr.bf16.mxu0 0
        %1330 = vmatpush2.bf16.xpose.msra.mxu0 0
        %1331 = vmatprep.subr.bf16.mxu0 0
        %1332 = vmatpush2.bf16.xpose.msra.mxu0 0
        %1333 = vmatprep.subr.bf16.mxu0 0
        %1334 = vmatpush2.bf16.xpose.msra.mxu0 0
        %1335 = vmatprep.subr.bf16.mxu0 0
        %1336 = vmatpush2.bf16.xpose.msra.mxu0 0
        %1337 = vmatprep.mubr.bf16.mxu0 0
        %1338 = vmatmul.mubr.bf16.gmra.mxu0 %v1300
        %v1339 = vpop.f32.mrf.mxu0
        %v1340 = vadd.f32 0.0, %v1339
        %v1341 = vpop.f32.mrf.mxu0
        %v1342 = vpop.f32.mrf.mxu0
        %v1343 = vpop.f32.mrf.mxu0
        %1344 = vdwg.mxu0
        %v1345 = vmul.f32 %v1340, 0.17677669
        %v1346 = vadd.f32 %v1345, %v824
        %v1347 = vsel %vm827, %v1346, -inf
        %1348 = vmax.xlane.f32.xlu0 %v1347
        %v1349 = vpop.xlane.xlu0 %1348
        %v1350 = vsub.f32 %v1346, %v1349
        %v1351 = vmul.f32 %v1350, 1.442695
        %v1352 = vpow.pop %v1351
        %v1353 = vsel %vm827, %v1352, 0.0
        %1354 = vadd.xlane.f32.xlu0 %v1353
        %v1355 = vpop.xlane.xlu0 %1354
        %v1356 = vrcp.pop %v1355
        %v1357 = vmul.f32 %v1352, %v1356
        %v1358 = vpack.c.bf16 %v1357, %v1357
        %1359 = vrot.lane.b32.xlu0 %v770, 32
        %v1360 = vpop.permute.xlu0 %1359
        %v1362 = vsel %vm827, %v1358, 0
        %v1365 = vsel %vm843, %v1360, 0
        %1367 = vmatprep.subr.bf16.mxu0 0
        %1368 = vmatpush1.bf16.msra.mxu0 0
        %1369 = vmatprep.subr.bf16.mxu0 0
        %1370 = vmatpush1.bf16.msra.mxu0 0
        %1371 = vmatprep.subr.bf16.mxu0 0
        %1372 = vmatpush1.bf16.msra.mxu0 0
        %1373 = vmatprep.subr.bf16.mxu0 0
        %1374 = vmatpush1.bf16.msra.mxu0 0
        %1375 = vmatprep.subr.bf16.mxu0 0
        %1376 = vmatpush1.bf16.msra.mxu0 0
        %1377 = vmatprep.subr.bf16.mxu0 0
        %1378 = vmatpush1.bf16.msra.mxu0 0
        %1379 = vmatprep.subr.bf16.mxu0 0
        %1380 = vmatpush1.bf16.msra.mxu0 0
        %1381 = vmatprep.subr.bf16.mxu0 0
        %1382 = vmatpush1.bf16.msra.mxu0 %v1365
        %1383 = vmatprep.subr.bf16.mxu0 0
        %1384 = vmatpush2.bf16.msra.mxu0 0
        %1385 = vmatprep.subr.bf16.mxu0 0
        %1386 = vmatpush2.bf16.msra.mxu0 0
        %1387 = vmatprep.subr.bf16.mxu0 0
        %1388 = vmatpush2.bf16.msra.mxu0 0
        %1389 = vmatprep.subr.bf16.mxu0 0
        %1390 = vmatpush2.bf16.msra.mxu0 0
        %1391 = vmatprep.subr.bf16.mxu0 0
        %1392 = vmatpush2.bf16.msra.mxu0 0
        %1393 = vmatprep.subr.bf16.mxu0 0
        %1394 = vmatpush2.bf16.msra.mxu0 0
        %1395 = vmatprep.subr.bf16.mxu0 0
        %1396 = vmatpush2.bf16.msra.mxu0 0
        %1397 = vmatprep.subr.bf16.mxu0 0
        %1398 = vmatpush2.bf16.msra.mxu0 0
        %1399 = vmatprep.mubr.bf16.mxu0 0
        %1400 = vmatmul.mubr.bf16.gmra.mxu0 %v1362
        %v1401 = vpop.f32.mrf.mxu0
        %v1402 = vadd.f32 0.0, %v1401
        %v1403 = vpop.f32.mrf.mxu0
        %v1404 = vpop.f32.mrf.mxu0
        %v1405 = vpop.f32.mrf.mxu0
        %1406 = vdwg.mxu0
        %v1407 = vpack.c.bf16 %v1402, %v1402
        %v1408 = vld [vmem:[%s4 + $0x30] sm:$0xf]
        %v1409 = vld [vmem:[%s4 + $0x34] sm:$0xf]
        %v1410 = vld [vmem:[%s4 + $0x38] sm:$0xf]
        %v1411 = vld [vmem:[%s4 + $0x3c] sm:$0xf]
        %v1416 = vunpack.c.l.b16 %v1408
        %v1417 = vunpack.c.l.b16 %v1409
        %v1418 = vunpack.c.l.b16 %v1410
        %v1419 = vunpack.c.l.b16 %v1411
        %v1420 = vpack.c.b16 %v1417, %v1416
        %v1421 = vpack.c.b16 %v1419, %v1418
        %v1425 = vsel %vm772, %v1407, 0
        %1427 = vmatprep.subr.bf16.mxu0 0
        %1428 = vmatpush1.bf16.msra.mxu0 0
        %1429 = vmatprep.subr.bf16.mxu0 0
        %1430 = vmatpush1.bf16.msra.mxu0 0
        %1431 = vmatprep.subr.bf16.mxu0 0
        %1432 = vmatpush1.bf16.msra.mxu0 0
        %1433 = vmatprep.subr.bf16.mxu0 0
        %1434 = vmatpush1.bf16.msra.mxu0 0
        %1435 = vmatprep.subr.bf16.mxu0 0
        %1436 = vmatpush1.bf16.msra.mxu0 0
        %1437 = vmatprep.subr.bf16.mxu0 0
        %1438 = vmatpush1.bf16.msra.mxu0 0
        %1439 = vmatprep.subr.bf16.mxu0 0
        %1440 = vmatpush1.bf16.msra.mxu0 %v1421
        %1441 = vmatprep.subr.bf16.mxu0 0
        %1442 = vmatpush1.bf16.msra.mxu0 %v1420
        %1443 = vmatprep.subr.bf16.mxu0 0
        %1444 = vmatpush2.bf16.msra.mxu0 0
        %1445 = vmatprep.subr.bf16.mxu0 0
        %1446 = vmatpush2.bf16.msra.mxu0 0
        %1447 = vmatprep.subr.bf16.mxu0 0
        %1448 = vmatpush2.bf16.msra.mxu0 0
        %1449 = vmatprep.subr.bf16.mxu0 0
        %1450 = vmatpush2.bf16.msra.mxu0 0
        %1451 = vmatprep.subr.bf16.mxu0 0
        %1452 = vmatpush2.bf16.msra.mxu0 0
        %1453 = vmatprep.subr.bf16.mxu0 0
        %1454 = vmatpush2.bf16.msra.mxu0 0
        %1455 = vmatprep.subr.bf16.mxu0 0
        %1456 = vmatpush2.bf16.msra.mxu0 0
        %1457 = vmatprep.subr.bf16.mxu0 0
        %1458 = vmatpush2.bf16.msra.mxu0 0
        %1459 = vmatprep.mubr.bf16.mxu0 0
        %1460 = vmatmul.mubr.bf16.gmra.mxu0 %v1425
        %v1461 = vpop.f32.mrf.mxu0
        %v1462 = vadd.f32 0.0, %v1461
        %v1463 = vpop.f32.mrf.mxu0
        %v1464 = vpop.f32.mrf.mxu0
        %v1465 = vpop.f32.mrf.mxu0
        %1466 = vdwg.mxu0
        %v1467 = vadd.f32 %v1294, %v1462
        %v1468 = vld [vmem:[%s5] sm:$0x1]
        %v1470 = vlaneseq
        %v1471 = vshrl.u32 %v1470, 7
        %v1472 = vsub.s32 0, %v1471
        %v1473 = vrot.slane %v1468, %v1472
        %v1475 = vadd.f32 %v1467, %v1473
        %v1476 = vadd.f32 %v1475, %v508
        %v1477 = vld [vmem:[%s6] sm:$0x1]
        %v1478 = vld [vmem:[%s7] sm:$0x1]
        %1479 = vadd.xlane.f32.xlu0 %v1476
        %v1480 = vpop.xlane.xlu0 %1479
        %v1481 = vrcp.pop 128.0
        %v1482 = vmul.f32 %v1480, %v1481
        %v1483 = vsub.f32 %v1476, %v1482
        %v1484 = vmul.f32 %v1483, %v1483
        %1485 = vadd.xlane.f32.xlu0 %v1484
        %v1486 = vpop.xlane.xlu0 %1485
        %v1487 = vmul.f32 %v1486, %v1481
        %v1488 = vadd.f32 %v1487, 1e-12
        %v1489 = vrsqrt.pop %v1488
        %v1490 = vmul.f32 %v1483, %v1489
        %v1492 = vlaneseq
        %v1493 = vshrl.u32 %v1492, 7
        %v1494 = vsub.s32 0, %v1493
        %v1495 = vrot.slane %v1477, %v1494
        %v1497 = vmul.f32 %v1490, %v1495
        %v1499 = vlaneseq
        %v1500 = vshrl.u32 %v1499, 7
        %v1501 = vsub.s32 0, %v1500
        %v1502 = vrot.slane %v1478, %v1501
        %v1504 = vadd.f32 %v1497, %v1502
        %v1505 = vpack.c.bf16 %v1504, %v1504
        %v1506 = vld [vmem:[#allocation2] sm:$0xff]
        %v1507 = vld [vmem:[#allocation2 + $0x8] sm:$0xff]
        %v1508 = vld [vmem:[#allocation2 + $0x10] sm:$0xff]
        %v1509 = vld [vmem:[#allocation2 + $0x18] sm:$0xff]
        %v1510 = vld [vmem:[#allocation2 + $0x20] sm:$0xff]
        %v1511 = vld [vmem:[#allocation2 + $0x28] sm:$0xff]
        %v1512 = vld [vmem:[#allocation2 + $0x30] sm:$0xff]
        %v1513 = vld [vmem:[#allocation2 + $0x38] sm:$0xff]
        %v1514 = vld [vmem:[#allocation2 + $0x40] sm:$0xff]
        %v1515 = vld [vmem:[#allocation2 + $0x48] sm:$0xff]
        %v1516 = vld [vmem:[#allocation2 + $0x50] sm:$0xff]
        %v1517 = vld [vmem:[#allocation2 + $0x58] sm:$0xff]
        %v1518 = vld [vmem:[#allocation2 + $0x60] sm:$0xff]
        %v1519 = vld [vmem:[#allocation2 + $0x68] sm:$0xff]
        %v1520 = vld [vmem:[#allocation2 + $0x70] sm:$0xff]
        %v1521 = vld [vmem:[#allocation2 + $0x78] sm:$0xff]
        %v1522 = vld [vmem:[%s9] sm:$0x3]
        %v1524 = vlaneseq
        %v1525 = vshrl.u32 %v1524, 7
        %v1526 = vsub.s32 0, %v1525
        %v1527 = vrot.slane %v1522, %v1526
        %v1528 = vlaneseq
        %v1529 = vshrl.u32 %v1528, 7
        %v1530 = vsub.s32 1, %v1529
        %v1531 = vrot.slane %v1522, %v1530
        %v1550 = vunpack.c.l.b16 %v1506
        %v1551 = vunpack.c.h.b16 %v1506
        %v1552 = vunpack.c.l.b16 %v1507
        %v1553 = vunpack.c.h.b16 %v1507
        %v1554 = vunpack.c.l.b16 %v1508
        %v1555 = vunpack.c.h.b16 %v1508
        %v1556 = vunpack.c.l.b16 %v1509
        %v1557 = vunpack.c.h.b16 %v1509
        %v1558 = vunpack.c.l.b16 %v1510
        %v1559 = vunpack.c.h.b16 %v1510
        %v1560 = vunpack.c.l.b16 %v1511
        %v1561 = vunpack.c.h.b16 %v1511
        %v1562 = vunpack.c.l.b16 %v1512
        %v1563 = vunpack.c.h.b16 %v1512
        %v1564 = vunpack.c.l.b16 %v1513
        %v1565 = vunpack.c.h.b16 %v1513
        %v1566 = vunpack.c.l.b16 %v1514
        %v1567 = vunpack.c.h.b16 %v1514
        %v1568 = vunpack.c.l.b16 %v1515
        %v1569 = vunpack.c.h.b16 %v1515
        %v1570 = vunpack.c.l.b16 %v1516
        %v1571 = vunpack.c.h.b16 %v1516
        %v1572 = vunpack.c.l.b16 %v1517
        %v1573 = vunpack.c.h.b16 %v1517
        %v1574 = vunpack.c.l.b16 %v1518
        %v1575 = vunpack.c.h.b16 %v1518
        %v1576 = vunpack.c.l.b16 %v1519
        %v1577 = vunpack.c.h.b16 %v1519
        %v1578 = vunpack.c.l.b16 %v1520
        %v1579 = vunpack.c.h.b16 %v1520
        %v1580 = vunpack.c.l.b16 %v1521
        %v1581 = vunpack.c.h.b16 %v1521
        %v1582 = vpack.c.b16 %v1552, %v1550
        %v1583 = vpack.c.b16 %v1553, %v1551
        %v1584 = vpack.c.b16 %v1556, %v1554
        %v1585 = vpack.c.b16 %v1557, %v1555
        %v1586 = vpack.c.b16 %v1560, %v1558
        %v1587 = vpack.c.b16 %v1561, %v1559
        %v1588 = vpack.c.b16 %v1564, %v1562
        %v1589 = vpack.c.b16 %v1565, %v1563
        %v1590 = vpack.c.b16 %v1568, %v1566
        %v1591 = vpack.c.b16 %v1569, %v1567
        %v1592 = vpack.c.b16 %v1572, %v1570
        %v1593 = vpack.c.b16 %v1573, %v1571
        %v1594 = vpack.c.b16 %v1576, %v1574
        %v1595 = vpack.c.b16 %v1577, %v1575
        %v1596 = vpack.c.b16 %v1580, %v1578
        %v1597 = vpack.c.b16 %v1581, %v1579
        %1614 = vmatprep.subr.bf16.mxu0 %v1597
        %1615 = vmatpush1.bf16.msra.mxu0 %v1596
        %1616 = vmatprep.subr.bf16.mxu0 %v1595
        %1617 = vmatpush1.bf16.msra.mxu0 %v1594
        %1618 = vmatprep.subr.bf16.mxu0 %v1593
        %1619 = vmatpush1.bf16.msra.mxu0 %v1592
        %1620 = vmatprep.subr.bf16.mxu0 %v1591
        %1621 = vmatpush1.bf16.msra.mxu0 %v1590
        %1622 = vmatprep.subr.bf16.mxu0 %v1589
        %1623 = vmatpush1.bf16.msra.mxu0 %v1588
        %1624 = vmatprep.subr.bf16.mxu0 %v1587
        %1625 = vmatpush1.bf16.msra.mxu0 %v1586
        %1626 = vmatprep.subr.bf16.mxu0 %v1585
        %1627 = vmatpush1.bf16.msra.mxu0 %v1584
        %1628 = vmatprep.subr.bf16.mxu0 %v1583
        %1629 = vmatpush1.bf16.msra.mxu0 %v1582
        %1630 = vmatprep.subr.bf16.mxu0 0
        %1631 = vmatpush2.bf16.msra.mxu0 0
        %1632 = vmatprep.subr.bf16.mxu0 0
        %1633 = vmatpush2.bf16.msra.mxu0 0
        %1634 = vmatprep.subr.bf16.mxu0 0
        %1635 = vmatpush2.bf16.msra.mxu0 0
        %1636 = vmatprep.subr.bf16.mxu0 0
        %1637 = vmatpush2.bf16.msra.mxu0 0
        %1638 = vmatprep.subr.bf16.mxu0 0
        %1639 = vmatpush2.bf16.msra.mxu0 0
        %1640 = vmatprep.subr.bf16.mxu0 0
        %1641 = vmatpush2.bf16.msra.mxu0 0
        %1642 = vmatprep.subr.bf16.mxu0 0
        %1643 = vmatpush2.bf16.msra.mxu0 0
        %1644 = vmatprep.subr.bf16.mxu0 0
        %1645 = vmatpush2.bf16.msra.mxu0 0
        %1646 = vmatprep.mubr.bf16.mxu0 0
        %1647 = vmatmul.mubr.bf16.gmra.mxu0 %v1505
        %v1648 = vpop.f32.mrf.mxu0
        %v1649 = vadd.f32 %v1527, %v1648
        %v1650 = vpop.f32.mrf.mxu0
        %v1651 = vadd.f32 %v1531, %v1650
        %v1652 = vpop.f32.mrf.mxu0
        %v1653 = vpop.f32.mrf.mxu0
        %1654 = vdwg.mxu0
        %v1655 = vmul.f32 %v1649, %v1649
        %v1656 = vmul.f32 %v1651, %v1651
        %v1657 = vmul.f32 %v1649, %v1655
        %v1658 = vmul.f32 %v1651, %v1656
        %v1659 = vmul.f32 %v1657, 0.044715
        %v1660 = vmul.f32 %v1658, 0.044715
        %v1661 = vadd.f32 %v1649, %v1659
        %v1662 = vadd.f32 %v1651, %v1660
        %v1663 = vmul.f32 %v1661, 0.7978846
        %v1664 = vmul.f32 %v1662, 0.7978846
        %v1665 = vtanh.pop %v1663
        %v1666 = vtanh.pop %v1664
        %v1667 = vadd.f32 %v1665, 1.0
        %v1668 = vadd.f32 %v1666, 1.0
        %v1669 = vmul.f32 %v1667, 0.5
        %v1670 = vmul.f32 %v1668, 0.5
        %v1671 = vmul.f32 %v1649, %v1669
        %v1672 = vmul.f32 %v1651, %v1670
        %v1673 = vpack.c.bf16 %v1671, %v1671
        %v1674 = vpack.c.bf16 %v1672, %v1672
        %v1675 = vld [vmem:[#allocation4] sm:$0xf]
        %v1676 = vld [vmem:[#allocation4 + $0x4] sm:$0xf]
        %v1677 = vld [vmem:[#allocation4 + $0x8] sm:$0xf]
        %v1678 = vld [vmem:[#allocation4 + $0xc] sm:$0xf]
        %v1679 = vld [vmem:[#allocation4 + $0x10] sm:$0xf]
        %v1680 = vld [vmem:[#allocation4 + $0x14] sm:$0xf]
        %v1681 = vld [vmem:[#allocation4 + $0x18] sm:$0xf]
        %v1682 = vld [vmem:[#allocation4 + $0x1c] sm:$0xf]
        %v1683 = vld [vmem:[#allocation4 + $0x20] sm:$0xf]
        %v1684 = vld [vmem:[#allocation4 + $0x24] sm:$0xf]
        %v1685 = vld [vmem:[#allocation4 + $0x28] sm:$0xf]
        %v1686 = vld [vmem:[#allocation4 + $0x2c] sm:$0xf]
        %v1687 = vld [vmem:[#allocation4 + $0x30] sm:$0xf]
        %v1688 = vld [vmem:[#allocation4 + $0x34] sm:$0xf]
        %v1689 = vld [vmem:[#allocation4 + $0x38] sm:$0xf]
        %v1690 = vld [vmem:[#allocation4 + $0x3c] sm:$0xf]
        %v1691 = vld [vmem:[#allocation4 + $0x40] sm:$0xf]
        %v1692 = vld [vmem:[#allocation4 + $0x44] sm:$0xf]
        %v1693 = vld [vmem:[#allocation4 + $0x48] sm:$0xf]
        %v1694 = vld [vmem:[#allocation4 + $0x4c] sm:$0xf]
        %v1695 = vld [vmem:[#allocation4 + $0x50] sm:$0xf]
        %v1696 = vld [vmem:[#allocation4 + $0x54] sm:$0xf]
        %v1697 = vld [vmem:[#allocation4 + $0x58] sm:$0xf]
        %v1698 = vld [vmem:[#allocation4 + $0x5c] sm:$0xf]
        %v1699 = vld [vmem:[#allocation4 + $0x60] sm:$0xf]
        %v1700 = vld [vmem:[#allocation4 + $0x64] sm:$0xf]
        %v1701 = vld [vmem:[#allocation4 + $0x68] sm:$0xf]
        %v1702 = vld [vmem:[#allocation4 + $0x6c] sm:$0xf]
        %v1703 = vld [vmem:[#allocation4 + $0x70] sm:$0xf]
        %v1704 = vld [vmem:[#allocation4 + $0x74] sm:$0xf]
        %v1705 = vld [vmem:[#allocation4 + $0x78] sm:$0xf]
        %v1706 = vld [vmem:[#allocation4 + $0x7c] sm:$0xf]
        %v1707 = vld [vmem:[%s11] sm:$0x1]
        %v1709 = vlaneseq
        %v1710 = vshrl.u32 %v1709, 7
        %v1711 = vsub.s32 0, %v1710
        %v1712 = vrot.slane %v1707, %v1711
        %v1746 = vunpack.c.l.b16 %v1675
        %v1747 = vunpack.c.l.b16 %v1676
        %v1748 = vunpack.c.l.b16 %v1677
        %v1749 = vunpack.c.l.b16 %v1678
        %v1750 = vunpack.c.l.b16 %v1679
        %v1751 = vunpack.c.l.b16 %v1680
        %v1752 = vunpack.c.l.b16 %v1681
        %v1753 = vunpack.c.l.b16 %v1682
        %v1754 = vunpack.c.l.b16 %v1683
        %v1755 = vunpack.c.l.b16 %v1684
        %v1756 = vunpack.c.l.b16 %v1685
        %v1757 = vunpack.c.l.b16 %v1686
        %v1758 = vunpack.c.l.b16 %v1687
        %v1759 = vunpack.c.l.b16 %v1688
        %v1760 = vunpack.c.l.b16 %v1689
        %v1761 = vunpack.c.l.b16 %v1690
        %v1762 = vunpack.c.l.b16 %v1691
        %v1763 = vunpack.c.l.b16 %v1692
        %v1764 = vunpack.c.l.b16 %v1693
        %v1765 = vunpack.c.l.b16 %v1694
        %v1766 = vunpack.c.l.b16 %v1695
        %v1767 = vunpack.c.l.b16 %v1696
        %v1768 = vunpack.c.l.b16 %v1697
        %v1769 = vunpack.c.l.b16 %v1698
        %v1770 = vunpack.c.l.b16 %v1699
        %v1771 = vunpack.c.l.b16 %v1700
        %v1772 = vunpack.c.l.b16 %v1701
        %v1773 = vunpack.c.l.b16 %v1702
        %v1774 = vunpack.c.l.b16 %v1703
        %v1775 = vunpack.c.l.b16 %v1704
        %v1776 = vunpack.c.l.b16 %v1705
        %v1777 = vunpack.c.l.b16 %v1706
        %v1778 = vpack.c.b16 %v1747, %v1746
        %v1779 = vpack.c.b16 %v1749, %v1748
        %v1780 = vpack.c.b16 %v1751, %v1750
        %v1781 = vpack.c.b16 %v1753, %v1752
        %v1782 = vpack.c.b16 %v1755, %v1754
        %v1783 = vpack.c.b16 %v1757, %v1756
        %v1784 = vpack.c.b16 %v1759, %v1758
        %v1785 = vpack.c.b16 %v1761, %v1760
        %v1786 = vpack.c.b16 %v1763, %v1762
        %v1787 = vpack.c.b16 %v1765, %v1764
        %v1788 = vpack.c.b16 %v1767, %v1766
        %v1789 = vpack.c.b16 %v1769, %v1768
        %v1790 = vpack.c.b16 %v1771, %v1770
        %v1791 = vpack.c.b16 %v1773, %v1772
        %v1792 = vpack.c.b16 %v1775, %v1774
        %v1793 = vpack.c.b16 %v1777, %v1776
        %1810 = vmatprep.subr.bf16.mxu0 0
        %1811 = vmatpush1.bf16.msra.mxu0 %v1785
        %1812 = vmatprep.subr.bf16.mxu0 0
        %1813 = vmatpush1.bf16.msra.mxu0 %v1784
        %1814 = vmatprep.subr.bf16.mxu0 0
        %1815 = vmatpush1.bf16.msra.mxu0 %v1783
        %1816 = vmatprep.subr.bf16.mxu0 0
        %1817 = vmatpush1.bf16.msra.mxu0 %v1782
        %1818 = vmatprep.subr.bf16.mxu0 0
        %1819 = vmatpush1.bf16.msra.mxu0 %v1781
        %1820 = vmatprep.subr.bf16.mxu0 0
        %1821 = vmatpush1.bf16.msra.mxu0 %v1780
        %1822 = vmatprep.subr.bf16.mxu0 0
        %1823 = vmatpush1.bf16.msra.mxu0 %v1779
        %1824 = vmatprep.subr.bf16.mxu0 0
        %1825 = vmatpush1.bf16.msra.mxu0 %v1778
        %1826 = vmatprep.subr.bf16.mxu0 0
        %1827 = vmatpush2.bf16.msra.mxu0 %v1793
        %1828 = vmatprep.subr.bf16.mxu0 0
        %1829 = vmatpush2.bf16.msra.mxu0 %v1792
        %1830 = vmatprep.subr.bf16.mxu0 0
        %1831 = vmatpush2.bf16.msra.mxu0 %v1791
        %1832 = vmatprep.subr.bf16.mxu0 0
        %1833 = vmatpush2.bf16.msra.mxu0 %v1790
        %1834 = vmatprep.subr.bf16.mxu0 0
        %1835 = vmatpush2.bf16.msra.mxu0 %v1789
        %1836 = vmatprep.subr.bf16.mxu0 0
        %1837 = vmatpush2.bf16.msra.mxu0 %v1788
        %1838 = vmatprep.subr.bf16.mxu0 0
        %1839 = vmatpush2.bf16.msra.mxu0 %v1787
        %1840 = vmatprep.subr.bf16.mxu0 0
        %1841 = vmatpush2.bf16.msra.mxu0 %v1786
        %1842 = vmatprep.mubr.bf16.mxu0 %v1674
        %1843 = vmatmul.mubr.bf16.gmra.mxu0 %v1673
        %v1844 = vpop.f32.mrf.mxu0
        %v1845 = vadd.f32 %v1712, %v1844
        %v1846 = vpop.f32.mrf.mxu0
        %v1847 = vpop.f32.mrf.mxu0
        %v1848 = vpop.f32.mrf.mxu0
        %1849 = vdwg.mxu0
        %v1850 = vadd.f32 %v1845, %v1504
        %v1851 = vld [vmem:[%s12] sm:$0x1]
        %v1852 = vld [vmem:[%s13] sm:$0x1]
        %1853 = vadd.xlane.f32.xlu0 %v1850
        %v1854 = vpop.xlane.xlu0 %1853
        %v1855 = vmul.f32 %v1854, %v1481
        %v1856 = vsub.f32 %v1850, %v1855
        %v1857 = vmul.f32 %v1856, %v1856
        %1858 = vadd.xlane.f32.xlu0 %v1857
        %v1859 = vpop.xlane.xlu0 %1858
        %v1860 = vmul.f32 %v1859, %v1481
        %v1861 = vadd.f32 %v1860, 1e-12
        %v1862 = vrsqrt.pop %v1861
        %v1863 = vmul.f32 %v1856, %v1862
        %v1865 = vlaneseq
        %v1866 = vshrl.u32 %v1865, 7
        %v1867 = vsub.s32 0, %v1866
        %v1868 = vrot.slane %v1851, %v1867
        %v1870 = vmul.f32 %v1863, %v1868
        %v1872 = vlaneseq
        %v1873 = vshrl.u32 %v1872, 7
        %v1874 = vsub.s32 0, %v1873
        %v1875 = vrot.slane %v1852, %v1874
        %v1877 = vadd.f32 %v1870, %v1875
        %1878 = vst [vmem:[%s506] sm:$0xff] %v1877
        %p1879 = scmp.lt.s32.totalorder %s27, 1
        %s1880 = scalar_select %p1879, %s27, 1
        %s1881 = smul.addr %s1880, 8
        %s1882 = scalar_lea.vmem %s14, %s1881
        // Predicated region
        $region85: #{_lambda_.5} parent=75 // pred_check
          %p1883 = pneg %p349
        $region86: #{_lambda_.5} parent=75 // pred_check_branch
          %1885 = sbr.rel (%p1883) target = $region88
        $region87: #{_lambda_.5} parent=75 // pred_region
          _
        $region88: #{_lambda_.5} parent=75 // pred_fallthru
          _
      $region76: #{_lambda_.5} parent=5 // pred_fallthru
        _
      %p1886 = scmp.le.s32.totalorder 2, %s22
      // Predicated region
      $region89: #{_lambda_.5} parent=5 // pred_check
        %p1887 = pneg %p1886
      $region90: #{_lambda_.5} parent=5 // pred_check_branch
        %1889 = sbr.rel (%p1887) target = $region92
      $region91: #{_lambda_.5} parent=5 // pred_region
        %s1890 = ssub.s32 %s22, 2
        // Predicated region
        $region93: #{_lambda_.5} parent=91 // pred_check
          %p1891 = pneg %p355
        $region94: #{_lambda_.5} parent=91 // pred_check_branch
          %1893 = sbr.rel (%p1891) target = $region96
        $region95: #{_lambda_.5} parent=91 // pred_region
          %p1894 = scmp.lt.s32.totalorder %s28, 1
          %s1895 = scalar_select %p1894, %s28, 1
          %s1896 = smul.addr %s1895, 8
          %s1897 = scalar_lea.vmem %s14, %s1896
        $region96: #{_lambda_.5} parent=91 // pred_fallthru
          _
      $region92: #{_lambda_.5} parent=5 // pred_fallthru
        _
    $region6: #{_lambda_.5} parent=1 // loop_footer
      %s26 = sadd.s32 1, %s22
    $region7: #{_lambda_.5} parent=1 // loop_footer_branch
      %21 = sbr.rel target = $region3
    $region8: #{_lambda_.5} parent=1 // loop_exit
      _
    %1898 = vsyncpa [#allocation3], 1
    %s1899 = scalar_lea.sflag [#allocation3], 1
    %1900 = vsyncpa %s1899, 1
    %1901 = vsyncpa [#allocation5], 1

</llo_original>
